<compile_context>
chip_gen: v6e
topology: v6e:2x2x1
jax: 0.10.0
libtpu: 0.0.40
codegen_flags: <defaults>
</compile_context>

<pallas_src>
import jax
import jax.numpy as jnp
import numpy as np
from jax import lax
from jax.experimental import pallas as pl
from jax.experimental.pallas import tpu as pltpu

ACTION_DIM = 2
ACTION_STD = 0.5
CH2, HW2 = 16, 9              # conv2 output channels / spatial extent
SIZE = CH2 * HW2 * HW2        # 1296 = 9*9*16
K1_PAD = 128                  # conv1 im2col K (=72) padded to a lane multiple
H1W = 2 * 256                 # fused hidden width after layer 1 (actor||critic)
H2W = 2 * 64                  # fused hidden width after layer 2
OUT_W = 128                   # packed heads output width (lane-dense)


# ----------------------------- Pallas kernels ------------------------------ #

def conv_mm_kernel(x_ref, w_ref, o_ref):
    # o = x @ w            (conv1 is bias-free)
    o_ref[...] = jnp.dot(x_ref[...], w_ref[...],
                         preferred_element_type=jnp.float32).astype(o_ref.dtype)


def conv_mm_bias_kernel(x_ref, w_ref, b_ref, o_ref):
    # o = x @ w + b        (conv2)
    acc = jnp.dot(x_ref[...], w_ref[...], preferred_element_type=jnp.float32)
    o_ref[...] = (acc + b_ref[...]).astype(o_ref.dtype)


def heads_kernel(feat_ref, act_ref, var_ref,
                 w1_ref, b1_ref, w2_ref, b2_ref, w3_ref, b3_ref,
                 out_ref):
    """Fused actor+critic MLPs + diag-MVN log_prob / entropy.

    Pre-fused weights:
      w1 (1296,512) = [actor_w1 | critic_w1]   (rows permuted to NHWC flatten)
      w2 (512,128)  = block-diag(actor_w2 (256,64), critic_w2 (256,64))
      w3 (128,128)  = block-diag(actor_w3 (64,2),  critic_w3 (64,1)), zero-pad
    Output: lane-dense (Bt,128) slab:
      cols [0,1]=tanh(action_mean), [2]=state_value, [3]=log_prob, [4]=entropy.
    """
    x = feat_ref[...]                                             # (Bt,1296) bf16
    h1 = jnp.tanh(jnp.dot(x, w1_ref[...],
                          preferred_element_type=jnp.float32) + b1_ref[...])
    h2 = jnp.tanh(jnp.dot(h1.astype(jnp.bfloat16), w2_ref[...],
                          preferred_element_type=jnp.float32) + b2_ref[...])
    y3 = jnp.dot(h2.astype(jnp.bfloat16), w3_ref[...],
                 preferred_element_type=jnp.float32) + b3_ref[...]  # (Bt,128)
    t3 = jnp.tanh(y3)

    mean = t3[:, :ACTION_DIM]                                     # (Bt,2)
    var = var_ref[...]                                            # (1,2)
    a = act_ref[...]                                              # (Bt,2)
    d = jnp.float32(ACTION_DIM)
    log2pi = jnp.log(jnp.float32(2.0) * jnp.pi)
    logdet = jnp.sum(jnp.log(var), axis=-1, keepdims=True)        # (1,1)
    diff = a - mean
    maha = jnp.sum(diff * diff / var, axis=-1, keepdims=True)     # (Bt,1)
    logp = -0.5 * (maha + d * log2pi + logdet)                    # (Bt,1)
    ent = 0.5 * d * (1.0 + log2pi) + 0.5 * logdet                 # (1,1)

    col = lax.broadcasted_iota(jnp.int32, y3.shape, 1)            # (Bt,128)
    packed = jnp.where(col < ACTION_DIM, t3,
             jnp.where(col == ACTION_DIM, y3,
             jnp.where(col == ACTION_DIM + 1, logp,
             jnp.where(col == ACTION_DIM + 2, ent, 0.0))))
    out_ref[...] = packed


# ------------------------------ wrappers ----------------------------------- #

def _round_up(x, m):
    return ((x + m - 1) // m) * m


def _conv_matmul(x, w, bias=None, *, out_dtype, tile_cap=512):
    """Row-tiled matmul (+bias): x (M,K) bf16 @ w (K,N) bf16 -> (M,N)."""
    M, K = x.shape
    N = w.shape[1]
    tm = min(tile_cap, _round_up(M, 8))
    Mp = _round_up(M, tm)
    if Mp != M:
        x = jnp.pad(x, ((0, Mp - M), (0, 0)))
    in_specs = [pl.BlockSpec((tm, K), lambda i: (i, 0)),
                pl.BlockSpec((K, N), lambda i: (0, 0))]
    args = [x, w]
    if bias is None:
        kernel = conv_mm_kernel
    else:
        kernel = conv_mm_bias_kernel
        in_specs.append(pl.BlockSpec((1, N), lambda i: (0, 0)))
        args.append(bias)
    out = pl.pallas_call(
        kernel,
        grid=(Mp // tm,),
        in_specs=in_specs,
        out_specs=pl.BlockSpec((tm, N), lambda i: (i, 0)),
        out_shape=jax.ShapeDtypeStruct((Mp, N), out_dtype),
        compiler_params=pltpu.CompilerParams(
            dimension_semantics=("parallel",)),
    )(*args)
    return out[:M]


def _heads(feat, actions, fp):
    B = feat.shape[0]
    bt = min(128, _round_up(B, 8))
    Bp = _round_up(B, bt)
    featp = jnp.pad(feat, ((0, Bp - B), (0, 0)))
    actp = jnp.pad(actions.astype(jnp.float32), ((0, Bp - B), (0, 0)))
    var = jnp.full((1, ACTION_DIM), ACTION_STD * ACTION_STD, jnp.float32)
    packed = pl.pallas_call(
        heads_kernel,
        grid=(Bp // bt,),
        in_specs=[
            pl.BlockSpec((bt, SIZE), lambda i: (i, 0)),
            pl.BlockSpec((bt, ACTION_DIM), lambda i: (i, 0)),
            pl.BlockSpec((1, ACTION_DIM), lambda i: (0, 0)),
            pl.BlockSpec((SIZE, H1W), lambda i: (0, 0)),
            pl.BlockSpec((1, H1W), lambda i: (0, 0)),
            pl.BlockSpec((H1W, H2W), lambda i: (0, 0)),
            pl.BlockSpec((1, H2W), lambda i: (0, 0)),
            pl.BlockSpec((H2W, OUT_W), lambda i: (0, 0)),
            pl.BlockSpec((1, OUT_W), lambda i: (0, 0)),
        ],
        out_specs=pl.BlockSpec((bt, OUT_W), lambda i: (i, 0)),
        out_shape=jax.ShapeDtypeStruct((Bp, OUT_W), jnp.float32),
        compiler_params=pltpu.CompilerParams(
            dimension_semantics=("parallel",)),
    )(featp, actp, var,
      fp['w1f'], fp['b1f'], fp['w2f'], fp['b2f'], fp['w3f'], fp['b3f'])
    return packed[:B]


# ------------------------------ JAX glue ----------------------------------- #

def im2col(x_nhwc, k, stride):
    """Extract conv patches (XLA glue). Returns ((B*Ho*Wo, k*k*C), Ho, Wo)."""
    B, H, W, C = x_nhwc.shape
    Ho = (H - k) // stride + 1
    Wo = (W - k) // stride + 1
    cols = []
    for di in range(k):
        for dj in range(k):
            cols.append(
                x_nhwc[:, di:di + stride * Ho:stride, dj:dj + stride * Wo:stride, :])
    patches = jnp.concatenate(cols, axis=-1)                      # (B,Ho,Wo,k*k*C)
    return patches.reshape(B * Ho * Wo, k * k * C), Ho, Wo


def conv_w_to_mat(w_oihw):
    """PyTorch OIHW conv weight -> (kh*kw*Cin, Cout) matmul weight (im2col order)."""
    O, C, kh, kw = w_oihw.shape
    return jnp.transpose(w_oihw, (2, 3, 1, 0)).reshape(kh * kw * C, O)


def prepare_fused_params(p):
    """One-time weight fusion, permutation, padding and bf16 cast (host/XLA side)."""
    w1m = conv_w_to_mat(p['conv1_w'])                             # (72, 4)
    w1m = jnp.pad(w1m, ((0, K1_PAD - w1m.shape[0]), (0, 0)))      # K 72 -> 128
    w2m = conv_w_to_mat(p['conv2_w'])                             # (144, 16)

    def to_nhwc_rows(w):
        # Original rows are indexed by the NCHW flatten c*81+p of the conv2
        # output; reorder to the natural NHWC flatten p*16+c so the conv output
        # reaches the heads kernel with zero transposes.
        n = w.shape[1]
        return w.reshape(CH2, HW2 * HW2, n).transpose(1, 0, 2).reshape(SIZE, n)

    w1f = jnp.concatenate([to_nhwc_rows(p['a_w1']), to_nhwc_rows(p['c_w1'])], axis=1)
    b1f = jnp.concatenate([p['a_b1'], p['c_b1']]).reshape(1, H1W)

    w2f = jnp.zeros((H1W, H2W), jnp.float32)
    w2f = w2f.at[:256, :64].set(p['a_w2']).at[256:, 64:].set(p['c_w2'])
    b2f = jnp.concatenate([p['a_b2'], p['c_b2']]).reshape(1, H2W)

    w3f = jnp.zeros((H2W, OUT_W), jnp.float32)
    w3f = w3f.at[:64, :ACTION_DIM].set(p['a_w3'])
    w3f = w3f.at[64:, ACTION_DIM:ACTION_DIM + 1].set(p['c_w3'])
    b3f = jnp.zeros((1, OUT_W), jnp.float32)
    b3f = b3f.at[0, :ACTION_DIM].set(p['a_b3'])
    b3f = b3f.at[0, ACTION_DIM].set(p['c_b3'][0])

    bf16 = jnp.bfloat16
    return dict(
        conv1_wm=w1m.astype(bf16),
        conv2_wm=w2m.astype(bf16),
        conv2_b=p['conv2_b'].reshape(1, CH2).astype(jnp.float32),
        w1f=w1f.astype(bf16), b1f=b1f.astype(jnp.float32),
        w2f=w2f.astype(bf16), b2f=b2f.astype(jnp.float32),
        w3f=w3f.astype(bf16), b3f=b3f.astype(jnp.float32),
    )


@jax.jit
def evaluate(state, actions, fp):
    """ActorCritic.evaluate for states (B, 2, 80, 80) -> (logp, value, entropy, mean)."""
    B = state.shape[0]
    x = jnp.transpose(state, (0, 2, 3, 1)).astype(jnp.bfloat16)   # NCHW -> NHWC

    # conv1: Conv2d(2, 4, k=6, s=2, bias=False) as im2col matmul (K padded to 128)
    p1, H1, W1 = im2col(x, 6, 2)                                  # (B*1444, 72)
    p1 = jnp.pad(p1, ((0, 0), (0, K1_PAD - p1.shape[1])))
    y1 = _conv_matmul(p1, fp['conv1_wm'], out_dtype=jnp.bfloat16) # (B*1444, 4)
    y1 = y1.reshape(B, H1, W1, 4)

    # conv2: Conv2d(4, 16, k=6, s=4)
    p2, H2, W2 = im2col(y1, 6, 4)                                 # (B*81, 144)
    y2 = _conv_matmul(p2, fp['conv2_wm'], fp['conv2_b'],
                      out_dtype=jnp.bfloat16)                     # (B*81, 16)

    # NHWC flatten is a free contiguous reshape; the NCHW flatten order of
    # `.view(-1, self.size)` lives in the pre-permuted rows of w1f instead.
    feat = y2.reshape(B, SIZE)

    packed = _heads(feat, actions, fp)                            # (B, 128) f32
    mean = packed[:, :ACTION_DIM]
    value = packed[:, ACTION_DIM]
    logp = packed[:, ACTION_DIM + 1]
    ent = packed[:, ACTION_DIM + 2]
    return logp, value, ent, mean


# ------------------------- deterministic parameters ------------------------ #

def init_params(key):
    ks = jax.random.split(key, 16)

    def dense(kw, kb, fan_in, fan_out):
        s = 1.0 / np.sqrt(fan_in)
        w = jax.random.uniform(kw, (fan_in, fan_out), jnp.float32, -s, s)
        b = jax.random.uniform(kb, (fan_out,), jnp.float32, -s, s)
        return w, b

    conv1_w = jax.random.uniform(ks[0], (4, 2, 6, 6), jnp.float32,
                                 -1.0 / np.sqrt(2 * 36), 1.0 / np.sqrt(2 * 36))
    conv2_w = jax.random.uniform(ks[1], (16, 4, 6, 6), jnp.float32,
                                 -1.0 / np.sqrt(4 * 36), 1.0 / np.sqrt(4 * 36))
    conv2_b = jax.random.uniform(ks[2], (16,), jnp.float32,
                                 -1.0 / np.sqrt(4 * 36), 1.0 / np.sqrt(4 * 36))
    a_w1, a_b1 = dense(ks[3], ks[4], SIZE, 256)
    a_w2, a_b2 = dense(ks[5], ks[6], 256, 64)
    a_w3, a_b3 = dense(ks[7], ks[8], 64, ACTION_DIM)
    c_w1, c_b1 = dense(ks[9], ks[10], SIZE, 256)
    c_w2, c_b2 = dense(ks[11], ks[12], 256, 64)
    c_w3, c_b3 = dense(ks[13], ks[14], 64, 1)
    return dict(conv1_w=conv1_w, conv2_w=conv2_w, conv2_b=conv2_b,
                a_w1=a_w1, a_b1=a_b1, a_w2=a_w2, a_b2=a_b2, a_w3=a_w3, a_b3=a_b3,
                c_w1=c_w1, c_b1=c_b1, c_w2=c_w2, c_b2=c_b2, c_w3=c_w3, c_b3=c_b3)


# ------------------------------ pure-JAX reference -------------------------- #

def reference_evaluate(state, actions, p):
    dn = ('NCHW', 'OIHW', 'NCHW')
    y1 = lax.conv_general_dilated(state, p['conv1_w'], (2, 2), 'VALID',
                                  dimension_numbers=dn)
    y2 = lax.conv_general_dilated(y1, p['conv2_w'], (4, 4), 'VALID',
                                  dimension_numbers=dn)
    y2 = y2 + p['conv2_b'][None, :, None, None]
    feat = y2.reshape(state.shape[0], SIZE)

    h = jnp.tanh(feat @ p['a_w1'] + p['a_b1'])
    h = jnp.tanh(h @ p['a_w2'] + p['a_b2'])
    mean = jnp.tanh(h @ p['a_w3'] + p['a_b3'])

    hc = jnp.tanh(feat @ p['c_w1'] + p['c_b1'])
    hc = jnp.tanh(hc @ p['c_w2'] + p['c_b2'])
    value = hc @ p['c_w3'] + p['c_b3']

    var = jnp.full((ACTION_DIM,), ACTION_STD * ACTION_STD, jnp.float32)
    log2pi = jnp.log(2.0 * jnp.pi)
    logdet = jnp.sum(jnp.log(var))
    diff = actions - mean
    logp = -0.5 * (jnp.sum(diff * diff / var, axis=-1) + ACTION_DIM * log2pi + logdet)
    ent = jnp.full((state.shape[0],), 0.5 * ACTION_DIM * (1.0 + log2pi) + 0.5 * logdet)
    return logp, value[:, 0], ent, mean


# --------------------------------- main ------------------------------------ #

if __name__ == "__main__":
    key = jax.random.PRNGKey(0)
    k_state, k_act, k_param = jax.random.split(key, 3)

    B = 2
    # Input spatial size 80x80 is fixed by the module (self.size = 9*9*16).
    state = jax.random.normal(k_state, (B, 2, 80, 80), jnp.float32)
    actions = jax.random.normal(k_act, (B, ACTION_DIM), jnp.float32)
    params = init_params(k_param)
    fused = prepare_fused_params(params)

    logp, value, ent, mean = evaluate(state, actions, fused)
    jax.block_until_ready((logp, value, ent, mean))

    r_logp, r_value, r_ent, r_mean = reference_evaluate(state, actions, params)
    # bf16 matmul operands (f32 accumulation): ~1e-3..1e-2 absolute error budget;
    # log_prob amplifies mean error by |a-mu|/var, so it gets a looser atol.
    np.testing.assert_allclose(np.asarray(mean), np.asarray(r_mean), rtol=2e-2, atol=2e-2)
    np.testing.assert_allclose(np.asarray(value), np.asarray(r_value), rtol=2e-2, atol=2e-2)
    np.testing.assert_allclose(np.asarray(ent), np.asarray(r_ent), rtol=2e-2, atol=2e-2)
    np.testing.assert_allclose(np.asarray(logp), np.asarray(r_logp), rtol=2e-2, atol=5e-2)

    print("KERNEL_OK")
</pallas_src>

<mosaic_0001>
module attributes {stable_mosaic.version = 11 : i64} {
  func.func @conv_mm_kernel(%arg0: i32, %arg1: memref<512x128xbf16, #tpu.memory_space<vmem>>, %arg2: memref<128x4xbf16, #tpu.memory_space<vmem>>, %arg3: memref<512x4xbf16, #tpu.memory_space<vmem>>) attributes {dimension_semantics = [#tpu.dimension_semantics<parallel>], iteration_bounds = array<i64: 6>, scalar_prefetch = 0 : i64, scratch_operands = 0 : i64, tpu.core_type = #tpu.core_type<tc>, window_params = [{transform_indices = @transform_0, window_bounds = array<i64: 512, 128>}, {pipeline_mode = #tpu.pipeline_mode<synchronous>, transform_indices = @transform_1, window_bounds = array<i64: 128, 4>}, {transform_indices = @transform_2, window_bounds = array<i64: 512, 4>}]} {
    %c0 = arith.constant 0 : index
    %c0_0 = arith.constant 0 : index
    %0 = vector.load %arg1[%c0, %c0_0] : memref<512x128xbf16, #tpu.memory_space<vmem>>, vector<512x128xbf16>
    %c0_1 = arith.constant 0 : index
    %c0_2 = arith.constant 0 : index
    %1 = vector.load %arg2[%c0_1, %c0_2] : memref<128x4xbf16, #tpu.memory_space<vmem>>, vector<128x4xbf16>
    %cst = arith.constant dense<0.000000e+00> : vector<512x4xf32>
    %2 = tpu.matmul %0, %1, %cst {dimension_numbers = #tpu.dot_dimension_numbers<[1], [0], [0], [1], [0, 0, 1, 1], [], []>} : vector<512x128xbf16>, vector<128x4xbf16>, vector<512x4xf32> -> vector<512x4xf32>
    %3 = arith.truncf %2 : vector<512x4xf32> to vector<512x4xbf16>
    %c0_3 = arith.constant 0 : index
    %c0_4 = arith.constant 0 : index
    %4 = vector.load %arg3[%c0_3, %c0_4] : memref<512x4xbf16, #tpu.memory_space<vmem>>, vector<512x4xbf16>
    tpu.vector_store %arg3[%c0_3, %c0_4], %3 {strides = array<i32>} : memref<512x4xbf16, #tpu.memory_space<vmem>>, vector<512x4xbf16>,
    return
  }
  func.func @transform_0(%arg0: i32) -> (i32, i32) {
    %c0_i32 = arith.constant 0 : i32
    %c0_i32_0 = arith.constant 0 : i32
    return %arg0, %c0_i32 : i32, i32
  }
  func.func @transform_1(%arg0: i32) -> (i32, i32) {
    %c0_i32 = arith.constant 0 : i32
    %c0_i32_0 = arith.constant 0 : i32
    %c0_i32_1 = arith.constant 0 : i32
    return %c0_i32, %c0_i32_0 : i32, i32
  }
  func.func @transform_2(%arg0: i32) -> (i32, i32) {
    %c0_i32 = arith.constant 0 : i32
    %c0_i32_0 = arith.constant 0 : i32
    return %arg0, %c0_i32 : i32, i32
  }
}

module attributes {stable_mosaic.version = 11 : i64} {
  func.func @conv_mm_bias_kernel(%arg0: i32, %arg1: memref<168x144xbf16, #tpu.memory_space<vmem>>, %arg2: memref<144x16xbf16, #tpu.memory_space<vmem>>, %arg3: memref<1x16xf32, #tpu.memory_space<vmem>>, %arg4: memref<168x16xbf16, #tpu.memory_space<vmem>>) attributes {dimension_semantics = [#tpu.dimension_semantics<parallel>], iteration_bounds = array<i64: 1>, scalar_prefetch = 0 : i64, scratch_operands = 0 : i64, tpu.core_type = #tpu.core_type<tc>, window_params = [{transform_indices = @transform_0, window_bounds = array<i64: 168, 144>}, {pipeline_mode = #tpu.pipeline_mode<synchronous>, transform_indices = @transform_1, window_bounds = array<i64: 144, 16>}, {pipeline_mode = #tpu.pipeline_mode<synchronous>, transform_indices = @transform_2, window_bounds = array<i64: 1, 16>}, {transform_indices = @transform_3, window_bounds = array<i64: 168, 16>}]} {
    %c0 = arith.constant 0 : index
    %c0_0 = arith.constant 0 : index
    %0 = vector.load %arg1[%c0, %c0_0] : memref<168x144xbf16, #tpu.memory_space<vmem>>, vector<168x144xbf16>
    %c0_1 = arith.constant 0 : index
    %c0_2 = arith.constant 0 : index
    %1 = vector.load %arg2[%c0_1, %c0_2] : memref<144x16xbf16, #tpu.memory_space<vmem>>, vector<144x16xbf16>
    %cst = arith.constant dense<0.000000e+00> : vector<168x16xf32>
    %2 = tpu.matmul %0, %1, %cst {dimension_numbers = #tpu.dot_dimension_numbers<[1], [0], [0], [1], [0, 0, 1, 1], [], []>} : vector<168x144xbf16>, vector<144x16xbf16>, vector<168x16xf32> -> vector<168x16xf32>
    %c0_3 = arith.constant 0 : index
    %c0_4 = arith.constant 0 : index
    %3 = vector.load %arg3[%c0_3, %c0_4] : memref<1x16xf32, #tpu.memory_space<vmem>>, vector<1x16xf32>
    %4 = vector.broadcast %3 : vector<1x16xf32> to vector<168x16xf32>
    %5 = arith.addf %2, %4 : vector<168x16xf32>
    %6 = arith.truncf %5 : vector<168x16xf32> to vector<168x16xbf16>
    %c0_5 = arith.constant 0 : index
    %c0_6 = arith.constant 0 : index
    %7 = vector.load %arg4[%c0_5, %c0_6] : memref<168x16xbf16, #tpu.memory_space<vmem>>, vector<168x16xbf16>
    tpu.vector_store %arg4[%c0_5, %c0_6], %6 {strides = array<i32>} : memref<168x16xbf16, #tpu.memory_space<vmem>>, vector<168x16xbf16>,
    return
  }
  func.func @transform_0(%arg0: i32) -> (i32, i32) {
    %c0_i32 = arith.constant 0 : i32
    %c0_i32_0 = arith.constant 0 : i32
    return %arg0, %c0_i32 : i32, i32
  }
  func.func @transform_1(%arg0: i32) -> (i32, i32) {
    %c0_i32 = arith.constant 0 : i32
    %c0_i32_0 = arith.constant 0 : i32
    %c0_i32_1 = arith.constant 0 : i32
    return %c0_i32, %c0_i32_0 : i32, i32
  }
  func.func @transform_2(%arg0: i32) -> (i32, i32) {
    %c0_i32 = arith.constant 0 : i32
    %c0_i32_0 = arith.constant 0 : i32
    %c0_i32_1 = arith.constant 0 : i32
    return %c0_i32, %c0_i32_0 : i32, i32
  }
  func.func @transform_3(%arg0: i32) -> (i32, i32) {
    %c0_i32 = arith.constant 0 : i32
    %c0_i32_0 = arith.constant 0 : i32
    return %arg0, %c0_i32 : i32, i32
  }
}

module attributes {stable_mosaic.version = 11 : i64} {
  func.func @heads_kernel(%arg0: i32, %arg1: memref<8x1296xbf16, #tpu.memory_space<vmem>>, %arg2: memref<8x2xf32, #tpu.memory_space<vmem>>, %arg3: memref<1x2xf32, #tpu.memory_space<vmem>>, %arg4: memref<1296x512xbf16, #tpu.memory_space<vmem>>, %arg5: memref<1x512xf32, #tpu.memory_space<vmem>>, %arg6: memref<512x128xbf16, #tpu.memory_space<vmem>>, %arg7: memref<1x128xf32, #tpu.memory_space<vmem>>, %arg8: memref<128x128xbf16, #tpu.memory_space<vmem>>, %arg9: memref<1x128xf32, #tpu.memory_space<vmem>>, %arg10: memref<8x128xf32, #tpu.memory_space<vmem>>) attributes {dimension_semantics = [#tpu.dimension_semantics<parallel>], iteration_bounds = array<i64: 1>, scalar_prefetch = 0 : i64, scratch_operands = 0 : i64, tpu.core_type = #tpu.core_type<tc>, window_params = [{transform_indices = @transform_0, window_bounds = array<i64: 8, 1296>}, {transform_indices = @transform_1, window_bounds = array<i64: 8, 2>}, {pipeline_mode = #tpu.pipeline_mode<synchronous>, transform_indices = @transform_2, window_bounds = array<i64: 1, 2>}, {pipeline_mode = #tpu.pipeline_mode<synchronous>, transform_indices = @transform_3, window_bounds = array<i64: 1296, 512>}, {pipeline_mode = #tpu.pipeline_mode<synchronous>, transform_indices = @transform_4, window_bounds = array<i64: 1, 512>}, {pipeline_mode = #tpu.pipeline_mode<synchronous>, transform_indices = @transform_5, window_bounds = array<i64: 512, 128>}, {pipeline_mode = #tpu.pipeline_mode<synchronous>, transform_indices = @transform_6, window_bounds = array<i64: 1, 128>}, {pipeline_mode = #tpu.pipeline_mode<synchronous>, transform_indices = @transform_7, window_bounds = array<i64: 128, 128>}, {pipeline_mode = #tpu.pipeline_mode<synchronous>, transform_indices = @transform_8, window_bounds = array<i64: 1, 128>}, {transform_indices = @transform_9, window_bounds = array<i64: 8, 128>}]} {
    %c0 = arith.constant 0 : index
    %c0_0 = arith.constant 0 : index
    %0 = vector.load %arg1[%c0, %c0_0] : memref<8x1296xbf16, #tpu.memory_space<vmem>>, vector<8x1296xbf16>
    %c0_1 = arith.constant 0 : index
    %c0_2 = arith.constant 0 : index
    %1 = vector.load %arg4[%c0_1, %c0_2] : memref<1296x512xbf16, #tpu.memory_space<vmem>>, vector<1296x512xbf16>
    %cst = arith.constant dense<0.000000e+00> : vector<8x512xf32>
    %2 = tpu.matmul %0, %1, %cst {dimension_numbers = #tpu.dot_dimension_numbers<[1], [0], [0], [1], [0, 0, 1, 1], [], []>} : vector<8x1296xbf16>, vector<1296x512xbf16>, vector<8x512xf32> -> vector<8x512xf32>
    %c0_3 = arith.constant 0 : index
    %c0_4 = arith.constant 0 : index
    %3 = vector.load %arg5[%c0_3, %c0_4] : memref<1x512xf32, #tpu.memory_space<vmem>>, vector<1x512xf32>
    %4 = vector.broadcast %3 : vector<1x512xf32> to vector<8x512xf32>
    %5 = arith.addf %2, %4 : vector<8x512xf32>
    %6 = math.tanh %5 : vector<8x512xf32>
    %7 = arith.truncf %6 : vector<8x512xf32> to vector<8x512xbf16>
    %c0_5 = arith.constant 0 : index
    %c0_6 = arith.constant 0 : index
    %8 = vector.load %arg6[%c0_5, %c0_6] : memref<512x128xbf16, #tpu.memory_space<vmem>>, vector<512x128xbf16>
    %cst_7 = arith.constant dense<0.000000e+00> : vector<8x128xf32>
    %9 = tpu.matmul %7, %8, %cst_7 {dimension_numbers = #tpu.dot_dimension_numbers<[1], [0], [0], [1], [0, 0, 1, 1], [], []>} : vector<8x512xbf16>, vector<512x128xbf16>, vector<8x128xf32> -> vector<8x128xf32>
    %c0_8 = arith.constant 0 : index
    %c0_9 = arith.constant 0 : index
    %10 = vector.load %arg7[%c0_8, %c0_9] : memref<1x128xf32, #tpu.memory_space<vmem>>, vector<1x128xf32>
    %11 = vector.broadcast %10 : vector<1x128xf32> to vector<8x128xf32>
    %12 = arith.addf %9, %11 : vector<8x128xf32>
    %13 = math.tanh %12 : vector<8x128xf32>
    %14 = arith.truncf %13 : vector<8x128xf32> to vector<8x128xbf16>
    %c0_10 = arith.constant 0 : index
    %c0_11 = arith.constant 0 : index
    %15 = vector.load %arg8[%c0_10, %c0_11] : memref<128x128xbf16, #tpu.memory_space<vmem>>, vector<128x128xbf16>
    %cst_12 = arith.constant dense<0.000000e+00> : vector<8x128xf32>
    %16 = tpu.matmul %14, %15, %cst_12 {dimension_numbers = #tpu.dot_dimension_numbers<[1], [0], [0], [1], [0, 0, 1, 1], [], []>} : vector<8x128xbf16>, vector<128x128xbf16>, vector<8x128xf32> -> vector<8x128xf32>
    %c0_13 = arith.constant 0 : index
    %c0_14 = arith.constant 0 : index
    %17 = vector.load %arg9[%c0_13, %c0_14] : memref<1x128xf32, #tpu.memory_space<vmem>>, vector<1x128xf32>
    %18 = vector.broadcast %17 : vector<1x128xf32> to vector<8x128xf32>
    %19 = arith.addf %16, %18 : vector<8x128xf32>
    %20 = math.tanh %19 : vector<8x128xf32>
    %21 = vector.extract_strided_slice %20 {offsets = [0, 0], sizes = [8, 2], strides = [1, 1]} : vector<8x128xf32> to vector<8x2xf32>
    %c0_15 = arith.constant 0 : index
    %c0_16 = arith.constant 0 : index
    %22 = vector.load %arg3[%c0_15, %c0_16] : memref<1x2xf32, #tpu.memory_space<vmem>>, vector<1x2xf32>
    %c0_17 = arith.constant 0 : index
    %c0_18 = arith.constant 0 : index
    %23 = vector.load %arg2[%c0_17, %c0_18] : memref<8x2xf32, #tpu.memory_space<vmem>>, vector<8x2xf32>
    %cst_19 = arith.constant 2.000000e+00 : f32
    %cst_20 = arith.constant 3.14159274 : f32
    %24 = arith.mulf %cst_19, %cst_20 : f32
    %25 = math.log %24 : f32
    %26 = math.log %22 : vector<1x2xf32>
    %cst_21 = arith.constant dense<0.000000e+00> : vector<1xf32>
    %27 = vector.multi_reduction <add>, %26, %cst_21 [1] : vector<1x2xf32> to vector<1xf32>
    %28 = vector.shape_cast %27 : vector<1xf32> to vector<1x1xf32>
    %29 = arith.subf %23, %21 : vector<8x2xf32>
    %30 = arith.mulf %29, %29 : vector<8x2xf32>
    %31 = vector.broadcast %22 : vector<1x2xf32> to vector<8x2xf32>
    %32 = arith.divf %30, %31 : vector<8x2xf32>
    %cst_22 = arith.constant dense<0.000000e+00> : vector<8xf32>
    %33 = vector.multi_reduction <add>, %32, %cst_22 [1] : vector<8x2xf32> to vector<8xf32>
    %34 = vector.shape_cast %33 : vector<8xf32> to vector<8x1xf32>
    %cst_23 = arith.constant 2.000000e+00 : f32
    %35 = arith.mulf %cst_23, %25 : f32
    %36 = vector.broadcast %35 : f32 to vector<8x1xf32>
    %37 = arith.addf %34, %36 : vector<8x1xf32>
    %38 = vector.broadcast %28 : vector<1x1xf32> to vector<8x1xf32>
    %39 = arith.addf %37, %38 : vector<8x1xf32>
    %cst_24 = arith.constant -5.000000e-01 : f32
    %40 = vector.broadcast %cst_24 : f32 to vector<8x1xf32>
    %41 = arith.mulf %40, %39 : vector<8x1xf32>
    %cst_25 = arith.constant 5.000000e-01 : f32
    %cst_26 = arith.constant 2.000000e+00 : f32
    %42 = arith.mulf %cst_25, %cst_26 : f32
    %cst_27 = arith.constant 1.000000e+00 : f32
    %43 = arith.addf %cst_27, %25 : f32
    %44 = arith.mulf %42, %43 : f32
    %cst_28 = arith.constant 5.000000e-01 : f32
    %45 = vector.broadcast %cst_28 : f32 to vector<1x1xf32>
    %46 = arith.mulf %45, %28 : vector<1x1xf32>
    %47 = vector.broadcast %44 : f32 to vector<1x1xf32>
    %48 = arith.addf %47, %46 : vector<1x1xf32>
    %49 = tpu.iota {dimensions = array<i32: 1>} : vector<8x128xi32>
    %c2_i32 = arith.constant 2 : i32
    %50 = vector.broadcast %c2_i32 : i32 to vector<8x128xi32>
    %51 = arith.cmpi slt, %49, %50 : vector<8x128xi32>
    %c2_i32_29 = arith.constant 2 : i32
    %52 = vector.broadcast %c2_i32_29 : i32 to vector<8x128xi32>
    %53 = arith.cmpi eq, %49, %52 : vector<8x128xi32>
    %c3_i32 = arith.constant 3 : i32
    %54 = vector.broadcast %c3_i32 : i32 to vector<8x128xi32>
    %55 = arith.cmpi eq, %49, %54 : vector<8x128xi32>
    %c4_i32 = arith.constant 4 : i32
    %56 = vector.broadcast %c4_i32 : i32 to vector<8x128xi32>
    %57 = arith.cmpi eq, %49, %56 : vector<8x128xi32>
    %cst_30 = arith.constant 0.000000e+00 : f32
    %58 = vector.shape_cast %48 : vector<1x1xf32> to vector<1x1xf32>
    %59 = vector.broadcast %58 : vector<1x1xf32> to vector<8x128xf32>
    %60 = vector.broadcast %cst_30 : f32 to vector<8x128xf32>
    %61 = arith.select %57, %59, %60 : vector<8x128xi1>, vector<8x128xf32>
    %62 = vector.shape_cast %41 : vector<8x1xf32> to vector<8x1xf32>
    %63 = vector.broadcast %62 : vector<8x1xf32> to vector<8x128xf32>
    %64 = arith.select %55, %63, %61 : vector<8x128xi1>, vector<8x128xf32>
    %65 = arith.select %53, %19, %64 : vector<8x128xi1>, vector<8x128xf32>
    %66 = arith.select %51, %20, %65 : vector<8x128xi1>, vector<8x128xf32>
    %c0_31 = arith.constant 0 : index
    %c0_32 = arith.constant 0 : index
    %67 = vector.load %arg10[%c0_31, %c0_32] : memref<8x128xf32, #tpu.memory_space<vmem>>, vector<8x128xf32>
    tpu.vector_store %arg10[%c0_31, %c0_32], %66 {strides = array<i32>} : memref<8x128xf32, #tpu.memory_space<vmem>>, vector<8x128xf32>,
    return
  }
  func.func @transform_0(%arg0: i32) -> (i32, i32) {
    %c0_i32 = arith.constant 0 : i32
    %c0_i32_0 = arith.constant 0 : i32
    return %arg0, %c0_i32 : i32, i32
  }
  func.func @transform_1(%arg0: i32) -> (i32, i32) {
    %c0_i32 = arith.constant 0 : i32
    %c0_i32_0 = arith.constant 0 : i32
    return %arg0, %c0_i32 : i32, i32
  }
  func.func @transform_2(%arg0: i32) -> (i32, i32) {
    %c0_i32 = arith.constant 0 : i32
    %c0_i32_0 = arith.constant 0 : i32
    %c0_i32_1 = arith.constant 0 : i32
    return %c0_i32, %c0_i32_0 : i32, i32
  }
  func.func @transform_3(%arg0: i32) -> (i32, i32) {
    %c0_i32 = arith.constant 0 : i32
    %c0_i32_0 = arith.constant 0 : i32
    %c0_i32_1 = arith.constant 0 : i32
    return %c0_i32, %c0_i32_0 : i32, i32
  }
  func.func @transform_4(%arg0: i32) -> (i32, i32) {
    %c0_i32 = arith.constant 0 : i32
    %c0_i32_0 = arith.constant 0 : i32
    %c0_i32_1 = arith.constant 0 : i32
    return %c0_i32, %c0_i32_0 : i32, i32
  }
  func.func @transform_5(%arg0: i32) -> (i32, i32) {
    %c0_i32 = arith.constant 0 : i32
    %c0_i32_0 = arith.constant 0 : i32
    %c0_i32_1 = arith.constant 0 : i32
    return %c0_i32, %c0_i32_0 : i32, i32
  }
  func.func @transform_6(%arg0: i32) -> (i32, i32) {
    %c0_i32 = arith.constant 0 : i32
    %c0_i32_0 = arith.constant 0 : i32
    %c0_i32_1 = arith.constant 0 : i32
    return %c0_i32, %c0_i32_0 : i32, i32
  }
  func.func @transform_7(%arg0: i32) -> (i32, i32) {
    %c0_i32 = arith.constant 0 : i32
    %c0_i32_0 = arith.constant 0 : i32
    %c0_i32_1 = arith.constant 0 : i32
    return %c0_i32, %c0_i32_0 : i32, i32
  }
  func.func @transform_8(%arg0: i32) -> (i32, i32) {
    %c0_i32 = arith.constant 0 : i32
    %c0_i32_0 = arith.constant 0 : i32
    %c0_i32_1 = arith.constant 0 : i32
    return %c0_i32, %c0_i32_0 : i32, i32
  }
  func.func @transform_9(%arg0: i32) -> (i32, i32) {
    %c0_i32 = arith.constant 0 : i32
    %c0_i32_0 = arith.constant 0 : i32
    return %arg0, %c0_i32 : i32, i32
  }
}

</mosaic_0001>

<llo_original>
// kernel: evaluate.3
$region0: #{evaluate.3}
  #allocation0 [shape = 'u32[]', space=smem, size = 0x4, offset = 0x4, fixed_abs, tag = 'smem constant byte address 0x4 - core index']
  #allocation1 [shape = 'u32[144,128]{1,0:T(1,128)}', space=vmem, size = 0x12000, scoped, tag = 'internal scratch']
  %s0 = inlined_call_operand.vmem [shape: bf16[3072,128], index: 0, kind: input, shape index: {}]
  %s1 = inlined_call_operand.vmem [shape: bf16[128,4], index: 1, kind: input, shape index: {}]
  %s2 = inlined_call_operand.vmem [shape: bf16[3072,4], index: 2, kind: output, shape index: {}]
  %s3 = sld [smem:[#allocation0]]
  $region41: #{evaluate.3} parent=0
    _
  %s5 = ssub.s32 1, %s3
  %s6 = scalar_select 0, %s5, %s3
  loop: start=0, step=1, limit=8
  $region2: #{evaluate.3} parent=0 // loop_pre_header
    _
  $region3: #{evaluate.3} parent=0 // loop_header
    %s8 = sphi 0, %s12
    %p9 = scmp.ge.s32.totalorder %s8, 8
    %s18 = sphi 0, %s20
    %s21 = sphi 0, %s18
    %s22 = sphi 0, %s21
    %s38 = sphi 0, %s22
    %s42 = sphi 0, %s42
    %s44 = sphi 0, %s42
    %s45 = sphi 0, %s44
    %s59 = sphi 0, %s45
    %s65 = sphi 0, %s67
    %s68 = sphi 0, %s65
    %s69 = sphi 0, %s68
    %s85 = sphi 0, %s69
  $region4: #{evaluate.3} parent=0 // loop_header_branch
    %11 = sbr.rel (%p9) target = $region8
  $region5: #{evaluate.3} parent=0 // loop_body
    %s13 = ssub.s32 %s8, 1
    %s14 = ssub.s32 %s8, 2
    %s15 = sadd.s32 %s8, 1
    %s16 = ssub.s32 %s8, %s15
    %p17 = scmp.eq.s32.totalorder %s16, 0
    %s19 = sadd.s32 %s18, 1
    %s20 = scalar_select %p17, %s18, %s19
    %p23 = pneg %p17
    %p24 = scmp.eq.s32.totalorder %s8, 5
    %p25 = por %p23, %p24
    %p26 = scmp.ne.s32.totalorder %s18, %s21
    %p27 = scmp.eq.s32.totalorder %s8, 0
    %p28 = por %p26, %p27
    %p29 = scmp.ne.s32.totalorder %s18, %s21
    %p30 = scmp.eq.s32.totalorder %s13, 5
    %p31 = por %p29, %p30
    %p32 = scmp.ne.s32.totalorder %s21, %s22
    %p33 = scmp.eq.s32.totalorder %s13, 0
    %p34 = por %p32, %p33
    %p35 = scmp.ne.s32.totalorder %s21, %s22
    %p36 = scmp.eq.s32.totalorder %s14, 5
    %p37 = por %p35, %p36
    %p39 = scmp.ne.s32.totalorder %s22, %s38
    %p40 = scmp.eq.s32.totalorder %s14, 0
    %p41 = por %p39, %p40
    %s43 = sadd.s32 %s42, 1
    %p46 = scmp.eq.s32.totalorder %s8, 5
    %p47 = scmp.ne.s32.totalorder %s42, %s44
    %p48 = scmp.eq.s32.totalorder %s8, 0
    %p49 = por %p47, %p48
    %p50 = scmp.ne.s32.totalorder %s42, %s44
    %p51 = scmp.eq.s32.totalorder %s13, 5
    %p52 = por %p50, %p51
    %p53 = scmp.ne.s32.totalorder %s44, %s45
    %p54 = scmp.eq.s32.totalorder %s13, 0
    %p55 = por %p53, %p54
    %p56 = scmp.ne.s32.totalorder %s44, %s45
    %p57 = scmp.eq.s32.totalorder %s14, 5
    %p58 = por %p56, %p57
    %p60 = scmp.ne.s32.totalorder %s45, %s59
    %p61 = scmp.eq.s32.totalorder %s14, 0
    %p62 = por %p60, %p61
    %s63 = ssub.s32 %s8, %s15
    %p64 = scmp.eq.s32.totalorder %s63, 0
    %s66 = sadd.s32 %s65, 1
    %s67 = scalar_select %p64, %s65, %s66
    %p70 = pneg %p64
    %p71 = scmp.eq.s32.totalorder %s8, 5
    %p72 = por %p70, %p71
    %p73 = scmp.ne.s32.totalorder %s65, %s68
    %p74 = scmp.eq.s32.totalorder %s8, 0
    %p75 = por %p73, %p74
    %p76 = scmp.ne.s32.totalorder %s65, %s68
    %p77 = scmp.eq.s32.totalorder %s13, 5
    %p78 = por %p76, %p77
    %p79 = scmp.ne.s32.totalorder %s68, %s69
    %p80 = scmp.eq.s32.totalorder %s13, 0
    %p81 = por %p79, %p80
    %p82 = scmp.ne.s32.totalorder %s68, %s69
    %p83 = scmp.eq.s32.totalorder %s14, 5
    %p84 = por %p82, %p83
    %p86 = scmp.ne.s32.totalorder %s69, %s85
    %p87 = scmp.eq.s32.totalorder %s14, 0
    %p88 = por %p86, %p87
    %p89 = scmp.le.s32.totalorder 1, %s8
    %p90 = scmp.lt.s32.totalorder %s8, 7
    %p91 = pnand %p89, %p90
    %p92 = pneg %p91
    // Predicated region
    $region9: #{evaluate.3} parent=5 // pred_check
      _
    $region10: #{evaluate.3} parent=5 // pred_check_branch
      %94 = sbr.rel (%p91) target = $region12
    $region11: #{evaluate.3} parent=5 // pred_region
      %s95 = ssub.s32 %s8, 1
      // Predicated region
      $region13: #{evaluate.3} parent=11 // pred_check
        %p96 = pneg %p55
      $region14: #{evaluate.3} parent=11 // pred_check_branch
        %98 = sbr.rel (%p96) target = $region16
      $region15: #{evaluate.3} parent=11 // pred_region
        _
      $region16: #{evaluate.3} parent=11 // pred_fallthru
        _
    $region12: #{evaluate.3} parent=5 // pred_fallthru
      _
    %p99 = scmp.lt.s32.totalorder %s8, 6
    // Predicated region
    $region17: #{evaluate.3} parent=5 // pred_check
      %p100 = pneg %p99
    $region18: #{evaluate.3} parent=5 // pred_check_branch
      %102 = sbr.rel (%p100) target = $region20
    $region19: #{evaluate.3} parent=5 // pred_region
      // Predicated region
      $region21: #{evaluate.3} parent=19 // pred_check
        %p103 = pneg %p28
      $region22: #{evaluate.3} parent=19 // pred_check_branch
        %105 = sbr.rel (%p103) target = $region24
      $region23: #{evaluate.3} parent=19 // pred_region
        %s106 = smul.u32 64, %s8
        %p107 = scmp.lt.s32.totalorder %s106, 383
        %s108 = scalar_select %p107, %s106, 383
        %s109 = smul.addr %s108, 4
        %s110 = scalar_lea.vmem %s0, %s109
        %s111 = smul.u32 64, %s8
      $region24: #{evaluate.3} parent=19 // pred_fallthru
        _
    $region20: #{evaluate.3} parent=5 // pred_fallthru
      _
    %p112 = scmp.le.s32.totalorder 1, %s8
    %p113 = scmp.lt.s32.totalorder %s8, 7
    %p114 = pnand %p112, %p113
    %p115 = pneg %p114
    // Predicated region
    $region25: #{evaluate.3} parent=5 // pred_check
      _
    $region26: #{evaluate.3} parent=5 // pred_check_branch
      %117 = sbr.rel (%p114) target = $region28
    $region27: #{evaluate.3} parent=5 // pred_region
      %s118 = ssub.s32 %s8, 1
      %s119 = smul.u32 64, %s13
      %p120 = scmp.lt.s32.totalorder %s119, 383
      %s121 = scalar_select %p120, %s119, 383
      %s122 = smul.addr %s121, 4
      %s123 = scalar_lea.vmem %s0, %s122
      %p124 = pneg %p34
      %p125 = pneg %p31
      %p126 = pneg %p55
      %p127 = pneg %p52
      %p128 = pneg %p81
      %p129 = pneg %p78
      %s130 = smul.u32 64, %s13
      %p131 = scmp.lt.s32.totalorder %s130, 383
      %s132 = scalar_select %p131, %s130, 383
      %s133 = smul.addr %s132, 4
      %s134 = scalar_lea.vmem %s2, %s133
      %s135 = smul.u32 64, %s13
      %p136 = scmp.lt.s32.totalorder %s135, 383
      %s137 = scalar_select %p136, %s135, 383
      %s138 = smul.addr %s137, 4
      %s139 = scalar_lea.vmem %s0, %s138
      %s140 = smul.u32 64, %s13
      %s141 = smul.u32 64, %s13
      %p142 = scmp.lt.s32.totalorder %s141, 383
      %s143 = scalar_select %p142, %s141, 383
      %s144 = smul.addr %s143, 4
      %s145 = scalar_lea.vmem %s2, %s144
      %s146 = smul.u32 64, %s13
      %v148 = vld [vmem:[%s139] sm:$0xf]
      %v149 = vld [vmem:[%s139 + $0x4] sm:$0xf]
      %v150 = vld [vmem:[%s139 + $0x8] sm:$0xf]
      %v151 = vld [vmem:[%s139 + $0xc] sm:$0xf]
      %v152 = vld [vmem:[%s139 + $0x10] sm:$0xf]
      %v153 = vld [vmem:[%s139 + $0x14] sm:$0xf]
      %v154 = vld [vmem:[%s139 + $0x18] sm:$0xf]
      %v155 = vld [vmem:[%s139 + $0x1c] sm:$0xf]
      %v156 = vld [vmem:[%s139 + $0x20] sm:$0xf]
      %v157 = vld [vmem:[%s139 + $0x24] sm:$0xf]
      %v158 = vld [vmem:[%s139 + $0x28] sm:$0xf]
      %v159 = vld [vmem:[%s139 + $0x2c] sm:$0xf]
      %v160 = vld [vmem:[%s139 + $0x30] sm:$0xf]
      %v161 = vld [vmem:[%s139 + $0x34] sm:$0xf]
      %v162 = vld [vmem:[%s139 + $0x38] sm:$0xf]
      %v163 = vld [vmem:[%s139 + $0x3c] sm:$0xf]
      %v164 = vld [vmem:[%s139 + $0x40] sm:$0xf]
      %v165 = vld [vmem:[%s139 + $0x44] sm:$0xf]
      %v166 = vld [vmem:[%s139 + $0x48] sm:$0xf]
      %v167 = vld [vmem:[%s139 + $0x4c] sm:$0xf]
      %v168 = vld [vmem:[%s139 + $0x50] sm:$0xf]
      %v169 = vld [vmem:[%s139 + $0x54] sm:$0xf]
      %v170 = vld [vmem:[%s139 + $0x58] sm:$0xf]
      %v171 = vld [vmem:[%s139 + $0x5c] sm:$0xf]
      %v172 = vld [vmem:[%s139 + $0x60] sm:$0xf]
      %v173 = vld [vmem:[%s139 + $0x64] sm:$0xf]
      %v174 = vld [vmem:[%s139 + $0x68] sm:$0xf]
      %v175 = vld [vmem:[%s139 + $0x6c] sm:$0xf]
      %v176 = vld [vmem:[%s139 + $0x70] sm:$0xf]
      %v177 = vld [vmem:[%s139 + $0x74] sm:$0xf]
      %v178 = vld [vmem:[%s139 + $0x78] sm:$0xf]
      %v179 = vld [vmem:[%s139 + $0x7c] sm:$0xf]
      %v180 = vld [vmem:[%s139 + $0x80] sm:$0xf]
      %v181 = vld [vmem:[%s139 + $0x84] sm:$0xf]
      %v182 = vld [vmem:[%s139 + $0x88] sm:$0xf]
      %v183 = vld [vmem:[%s139 + $0x8c] sm:$0xf]
      %v184 = vld [vmem:[%s139 + $0x90] sm:$0xf]
      %v185 = vld [vmem:[%s139 + $0x94] sm:$0xf]
      %v186 = vld [vmem:[%s139 + $0x98] sm:$0xf]
      %v187 = vld [vmem:[%s139 + $0x9c] sm:$0xf]
      %v188 = vld [vmem:[%s139 + $0xa0] sm:$0xf]
      %v189 = vld [vmem:[%s139 + $0xa4] sm:$0xf]
      %v190 = vld [vmem:[%s139 + $0xa8] sm:$0xf]
      %v191 = vld [vmem:[%s139 + $0xac] sm:$0xf]
      %v192 = vld [vmem:[%s139 + $0xb0] sm:$0xf]
      %v193 = vld [vmem:[%s139 + $0xb4] sm:$0xf]
      %v194 = vld [vmem:[%s139 + $0xb8] sm:$0xf]
      %v195 = vld [vmem:[%s139 + $0xbc] sm:$0xf]
      %v196 = vld [vmem:[%s139 + $0xc0] sm:$0xf]
      %v197 = vld [vmem:[%s139 + $0xc4] sm:$0xf]
      %v198 = vld [vmem:[%s139 + $0xc8] sm:$0xf]
      %v199 = vld [vmem:[%s139 + $0xcc] sm:$0xf]
      %v200 = vld [vmem:[%s139 + $0xd0] sm:$0xf]
      %v201 = vld [vmem:[%s139 + $0xd4] sm:$0xf]
      %v202 = vld [vmem:[%s139 + $0xd8] sm:$0xf]
      %v203 = vld [vmem:[%s139 + $0xdc] sm:$0xf]
      %v204 = vld [vmem:[%s139 + $0xe0] sm:$0xf]
      %v205 = vld [vmem:[%s139 + $0xe4] sm:$0xf]
      %v206 = vld [vmem:[%s139 + $0xe8] sm:$0xf]
      %v207 = vld [vmem:[%s139 + $0xec] sm:$0xf]
      %v208 = vld [vmem:[%s139 + $0xf0] sm:$0xf]
      %v209 = vld [vmem:[%s139 + $0xf4] sm:$0xf]
      %v210 = vld [vmem:[%s139 + $0xf8] sm:$0xf]
      %v211 = vld [vmem:[%s139 + $0xfc] sm:$0xf]
      %v212 = vld [vmem:[%s1] sm:$0xf]
      %v213 = vld [vmem:[%s1 + $0x4] sm:$0xf]
      %v214 = vld [vmem:[%s1 + $0x8] sm:$0xf]
      %v215 = vld [vmem:[%s1 + $0xc] sm:$0xf]
      %v216 = vld [vmem:[%s1 + $0x10] sm:$0xf]
      %v217 = vld [vmem:[%s1 + $0x14] sm:$0xf]
      %v218 = vld [vmem:[%s1 + $0x18] sm:$0xf]
      %v219 = vld [vmem:[%s1 + $0x1c] sm:$0xf]
      %v220 = vld [vmem:[%s1 + $0x20] sm:$0xf]
      %v221 = vld [vmem:[%s1 + $0x24] sm:$0xf]
      %v222 = vld [vmem:[%s1 + $0x28] sm:$0xf]
      %v223 = vld [vmem:[%s1 + $0x2c] sm:$0xf]
      %v224 = vld [vmem:[%s1 + $0x30] sm:$0xf]
      %v225 = vld [vmem:[%s1 + $0x34] sm:$0xf]
      %v226 = vld [vmem:[%s1 + $0x38] sm:$0xf]
      %v227 = vld [vmem:[%s1 + $0x3c] sm:$0xf]
      %v292 = vunpack.c.l.b16 %v148
      %v293 = vunpack.c.l.b16 %v149
      %v294 = vunpack.c.l.b16 %v150
      %v295 = vunpack.c.l.b16 %v151
      %v296 = vunpack.c.l.b16 %v152
      %v297 = vunpack.c.l.b16 %v153
      %v298 = vunpack.c.l.b16 %v154
      %v299 = vunpack.c.l.b16 %v155
      %v300 = vunpack.c.l.b16 %v156
      %v301 = vunpack.c.l.b16 %v157
      %v302 = vunpack.c.l.b16 %v158
      %v303 = vunpack.c.l.b16 %v159
      %v304 = vunpack.c.l.b16 %v160
      %v305 = vunpack.c.l.b16 %v161
      %v306 = vunpack.c.l.b16 %v162
      %v307 = vunpack.c.l.b16 %v163
      %v308 = vunpack.c.l.b16 %v164
      %v309 = vunpack.c.l.b16 %v165
      %v310 = vunpack.c.l.b16 %v166
      %v311 = vunpack.c.l.b16 %v167
      %v312 = vunpack.c.l.b16 %v168
      %v313 = vunpack.c.l.b16 %v169
      %v314 = vunpack.c.l.b16 %v170
      %v315 = vunpack.c.l.b16 %v171
      %v316 = vunpack.c.l.b16 %v172
      %v317 = vunpack.c.l.b16 %v173
      %v318 = vunpack.c.l.b16 %v174
      %v319 = vunpack.c.l.b16 %v175
      %v320 = vunpack.c.l.b16 %v176
      %v321 = vunpack.c.l.b16 %v177
      %v322 = vunpack.c.l.b16 %v178
      %v323 = vunpack.c.l.b16 %v179
      %v324 = vunpack.c.l.b16 %v180
      %v325 = vunpack.c.l.b16 %v181
      %v326 = vunpack.c.l.b16 %v182
      %v327 = vunpack.c.l.b16 %v183
      %v328 = vunpack.c.l.b16 %v184
      %v329 = vunpack.c.l.b16 %v185
      %v330 = vunpack.c.l.b16 %v186
      %v331 = vunpack.c.l.b16 %v187
      %v332 = vunpack.c.l.b16 %v188
      %v333 = vunpack.c.l.b16 %v189
      %v334 = vunpack.c.l.b16 %v190
      %v335 = vunpack.c.l.b16 %v191
      %v336 = vunpack.c.l.b16 %v192
      %v337 = vunpack.c.l.b16 %v193
      %v338 = vunpack.c.l.b16 %v194
      %v339 = vunpack.c.l.b16 %v195
      %v340 = vunpack.c.l.b16 %v196
      %v341 = vunpack.c.l.b16 %v197
      %v342 = vunpack.c.l.b16 %v198
      %v343 = vunpack.c.l.b16 %v199
      %v344 = vunpack.c.l.b16 %v200
      %v345 = vunpack.c.l.b16 %v201
      %v346 = vunpack.c.l.b16 %v202
      %v347 = vunpack.c.l.b16 %v203
      %v348 = vunpack.c.l.b16 %v204
      %v349 = vunpack.c.l.b16 %v205
      %v350 = vunpack.c.l.b16 %v206
      %v351 = vunpack.c.l.b16 %v207
      %v352 = vunpack.c.l.b16 %v208
      %v353 = vunpack.c.l.b16 %v209
      %v354 = vunpack.c.l.b16 %v210
      %v355 = vunpack.c.l.b16 %v211
      %v356 = vpack.c.b16 %v293, %v292
      %v357 = vpack.c.b16 %v295, %v294
      %v358 = vpack.c.b16 %v297, %v296
      %v359 = vpack.c.b16 %v299, %v298
      %v360 = vpack.c.b16 %v301, %v300
      %v361 = vpack.c.b16 %v303, %v302
      %v362 = vpack.c.b16 %v305, %v304
      %v363 = vpack.c.b16 %v307, %v306
      %v364 = vpack.c.b16 %v309, %v308
      %v365 = vpack.c.b16 %v311, %v310
      %v366 = vpack.c.b16 %v313, %v312
      %v367 = vpack.c.b16 %v315, %v314
      %v368 = vpack.c.b16 %v317, %v316
      %v369 = vpack.c.b16 %v319, %v318
      %v370 = vpack.c.b16 %v321, %v320
      %v371 = vpack.c.b16 %v323, %v322
      %v372 = vpack.c.b16 %v325, %v324
      %v373 = vpack.c.b16 %v327, %v326
      %v374 = vpack.c.b16 %v329, %v328
      %v375 = vpack.c.b16 %v331, %v330
      %v376 = vpack.c.b16 %v333, %v332
      %v377 = vpack.c.b16 %v335, %v334
      %v378 = vpack.c.b16 %v337, %v336
      %v379 = vpack.c.b16 %v339, %v338
      %v380 = vpack.c.b16 %v341, %v340
      %v381 = vpack.c.b16 %v343, %v342
      %v382 = vpack.c.b16 %v345, %v344
      %v383 = vpack.c.b16 %v347, %v346
      %v384 = vpack.c.b16 %v349, %v348
      %v385 = vpack.c.b16 %v351, %v350
      %v386 = vpack.c.b16 %v353, %v352
      %v387 = vpack.c.b16 %v355, %v354
      %v436 = vunpack.c.l.b16 %v212
      %v437 = vunpack.c.l.b16 %v213
      %v438 = vunpack.c.l.b16 %v214
      %v439 = vunpack.c.l.b16 %v215
      %v440 = vunpack.c.l.b16 %v216
      %v441 = vunpack.c.l.b16 %v217
      %v442 = vunpack.c.l.b16 %v218
      %v443 = vunpack.c.l.b16 %v219
      %v444 = vunpack.c.l.b16 %v220
      %v445 = vunpack.c.l.b16 %v221
      %v446 = vunpack.c.l.b16 %v222
      %v447 = vunpack.c.l.b16 %v223
      %v448 = vunpack.c.l.b16 %v224
      %v449 = vunpack.c.l.b16 %v225
      %v450 = vunpack.c.l.b16 %v226
      %v451 = vunpack.c.l.b16 %v227
      %v452 = vpack.c.b16 %v437, %v436
      %v453 = vpack.c.b16 %v439, %v438
      %v454 = vpack.c.b16 %v441, %v440
      %v455 = vpack.c.b16 %v443, %v442
      %v456 = vpack.c.b16 %v445, %v444
      %v457 = vpack.c.b16 %v447, %v446
      %v458 = vpack.c.b16 %v449, %v448
      %v459 = vpack.c.b16 %v451, %v450
      %468 = vmatprep.subr.bf16.mxu0 0
      %469 = vmatpush1.bf16.msra.mxu0 %v459
      %470 = vmatprep.subr.bf16.mxu0 0
      %471 = vmatpush1.bf16.msra.mxu0 %v458
      %472 = vmatprep.subr.bf16.mxu0 0
      %473 = vmatpush1.bf16.msra.mxu0 %v457
      %474 = vmatprep.subr.bf16.mxu0 0
      %475 = vmatpush1.bf16.msra.mxu0 %v456
      %476 = vmatprep.subr.bf16.mxu0 0
      %477 = vmatpush1.bf16.msra.mxu0 %v455
      %478 = vmatprep.subr.bf16.mxu0 0
      %479 = vmatpush1.bf16.msra.mxu0 %v454
      %480 = vmatprep.subr.bf16.mxu0 0
      %481 = vmatpush1.bf16.msra.mxu0 %v453
      %482 = vmatprep.subr.bf16.mxu0 0
      %483 = vmatpush1.bf16.msra.mxu0 %v452
      %484 = vmatprep.subr.bf16.mxu0 0
      %485 = vmatpush2.bf16.msra.mxu0 0
      %486 = vmatprep.subr.bf16.mxu0 0
      %487 = vmatpush2.bf16.msra.mxu0 0
      %488 = vmatprep.subr.bf16.mxu0 0
      %489 = vmatpush2.bf16.msra.mxu0 0
      %490 = vmatprep.subr.bf16.mxu0 0
      %491 = vmatpush2.bf16.msra.mxu0 0
      %492 = vmatprep.subr.bf16.mxu0 0
      %493 = vmatpush2.bf16.msra.mxu0 0
      %494 = vmatprep.subr.bf16.mxu0 0
      %495 = vmatpush2.bf16.msra.mxu0 0
      %496 = vmatprep.subr.bf16.mxu0 0
      %497 = vmatpush2.bf16.msra.mxu0 0
      %498 = vmatprep.subr.bf16.mxu0 0
      %499 = vmatpush2.bf16.msra.mxu0 0
      %500 = vmatprep.mubr.bf16.mxu0 0
      %501 = vmatmul.mubr.bf16.gmra.mxu0 %v356
      %v502 = vpop.f32.mrf.mxu0
      %v503 = vadd.f32 0.0, %v502
      %v504 = vpop.f32.mrf.mxu0
      %v505 = vpop.f32.mrf.mxu0
      %v506 = vadd.f32 0.0, %v505
      %v507 = vpop.f32.mrf.mxu0
      %508 = vmatprep.mubr.bf16.mxu0 0
      %509 = vmatmul.mubr.bf16.gmra.mxu0 %v357
      %v510 = vpop.f32.mrf.mxu0
      %v511 = vadd.f32 0.0, %v510
      %v512 = vpop.f32.mrf.mxu0
      %v513 = vpop.f32.mrf.mxu0
      %v514 = vadd.f32 0.0, %v513
      %v515 = vpop.f32.mrf.mxu0
      %516 = vmatprep.mubr.bf16.mxu0 0
      %517 = vmatmul.mubr.bf16.gmra.mxu0 %v358
      %v518 = vpop.f32.mrf.mxu0
      %v519 = vadd.f32 0.0, %v518
      %v520 = vpop.f32.mrf.mxu0
      %v521 = vpop.f32.mrf.mxu0
      %v522 = vadd.f32 0.0, %v521
      %v523 = vpop.f32.mrf.mxu0
      %524 = vmatprep.mubr.bf16.mxu0 0
      %525 = vmatmul.mubr.bf16.gmra.mxu0 %v359
      %v526 = vpop.f32.mrf.mxu0
      %v527 = vadd.f32 0.0, %v526
      %v528 = vpop.f32.mrf.mxu0
      %v529 = vpop.f32.mrf.mxu0
      %v530 = vadd.f32 0.0, %v529
      %v531 = vpop.f32.mrf.mxu0
      %532 = vmatprep.mubr.bf16.mxu0 0
      %533 = vmatmul.mubr.bf16.gmra.mxu0 %v360
      %v534 = vpop.f32.mrf.mxu0
      %v535 = vadd.f32 0.0, %v534
      %v536 = vpop.f32.mrf.mxu0
      %v537 = vpop.f32.mrf.mxu0
      %v538 = vadd.f32 0.0, %v537
      %v539 = vpop.f32.mrf.mxu0
      %540 = vmatprep.mubr.bf16.mxu0 0
      %541 = vmatmul.mubr.bf16.gmra.mxu0 %v361
      %v542 = vpop.f32.mrf.mxu0
      %v543 = vadd.f32 0.0, %v542
      %v544 = vpop.f32.mrf.mxu0
      %v545 = vpop.f32.mrf.mxu0
      %v546 = vadd.f32 0.0, %v545
      %v547 = vpop.f32.mrf.mxu0
      %548 = vmatprep.mubr.bf16.mxu0 0
      %549 = vmatmul.mubr.bf16.gmra.mxu0 %v362
      %v550 = vpop.f32.mrf.mxu0
      %v551 = vadd.f32 0.0, %v550
      %v552 = vpop.f32.mrf.mxu0
      %v553 = vpop.f32.mrf.mxu0
      %v554 = vadd.f32 0.0, %v553
      %v555 = vpop.f32.mrf.mxu0
      %556 = vmatprep.mubr.bf16.mxu0 0
      %557 = vmatmul.mubr.bf16.gmra.mxu0 %v363
      %v558 = vpop.f32.mrf.mxu0
      %v559 = vadd.f32 0.0, %v558
      %v560 = vpop.f32.mrf.mxu0
      %v561 = vpop.f32.mrf.mxu0
      %v562 = vadd.f32 0.0, %v561
      %v563 = vpop.f32.mrf.mxu0
      %564 = vmatprep.mubr.bf16.mxu0 0
      %565 = vmatmul.mubr.bf16.gmra.mxu0 %v364
      %v566 = vpop.f32.mrf.mxu0
      %v567 = vadd.f32 0.0, %v566
      %v568 = vpop.f32.mrf.mxu0
      %v569 = vpop.f32.mrf.mxu0
      %v570 = vadd.f32 0.0, %v569
      %v571 = vpop.f32.mrf.mxu0
      %572 = vmatprep.mubr.bf16.mxu0 0
      %573 = vmatmul.mubr.bf16.gmra.mxu0 %v365
      %v574 = vpop.f32.mrf.mxu0
      %v575 = vadd.f32 0.0, %v574
      %v576 = vpop.f32.mrf.mxu0
      %v577 = vpop.f32.mrf.mxu0
      %v578 = vadd.f32 0.0, %v577
      %v579 = vpop.f32.mrf.mxu0
      %580 = vmatprep.mubr.bf16.mxu0 0
      %581 = vmatmul.mubr.bf16.gmra.mxu0 %v366
      %v582 = vpop.f32.mrf.mxu0
      %v583 = vadd.f32 0.0, %v582
      %v584 = vpop.f32.mrf.mxu0
      %v585 = vpop.f32.mrf.mxu0
      %v586 = vadd.f32 0.0, %v585
      %v587 = vpop.f32.mrf.mxu0
      %588 = vmatprep.mubr.bf16.mxu0 0
      %589 = vmatmul.mubr.bf16.gmra.mxu0 %v367
      %v590 = vpop.f32.mrf.mxu0
      %v591 = vadd.f32 0.0, %v590
      %v592 = vpop.f32.mrf.mxu0
      %v593 = vpop.f32.mrf.mxu0
      %v594 = vadd.f32 0.0, %v593
      %v595 = vpop.f32.mrf.mxu0
      %596 = vmatprep.mubr.bf16.mxu0 0
      %597 = vmatmul.mubr.bf16.gmra.mxu0 %v368
      %v598 = vpop.f32.mrf.mxu0
      %v599 = vadd.f32 0.0, %v598
      %v600 = vpop.f32.mrf.mxu0
      %v601 = vpop.f32.mrf.mxu0
      %v602 = vadd.f32 0.0, %v601
      %v603 = vpop.f32.mrf.mxu0
      %604 = vmatprep.mubr.bf16.mxu0 0
      %605 = vmatmul.mubr.bf16.gmra.mxu0 %v369
      %v606 = vpop.f32.mrf.mxu0
      %v607 = vadd.f32 0.0, %v606
      %v608 = vpop.f32.mrf.mxu0
      %v609 = vpop.f32.mrf.mxu0
      %v610 = vadd.f32 0.0, %v609
      %v611 = vpop.f32.mrf.mxu0
      %612 = vmatprep.mubr.bf16.mxu0 0
      %613 = vmatmul.mubr.bf16.gmra.mxu0 %v370
      %v614 = vpop.f32.mrf.mxu0
      %v615 = vadd.f32 0.0, %v614
      %v616 = vpop.f32.mrf.mxu0
      %v617 = vpop.f32.mrf.mxu0
      %v618 = vadd.f32 0.0, %v617
      %v619 = vpop.f32.mrf.mxu0
      %620 = vmatprep.mubr.bf16.mxu0 0
      %621 = vmatmul.mubr.bf16.gmra.mxu0 %v371
      %v622 = vpop.f32.mrf.mxu0
      %v623 = vadd.f32 0.0, %v622
      %v624 = vpop.f32.mrf.mxu0
      %v625 = vpop.f32.mrf.mxu0
      %v626 = vadd.f32 0.0, %v625
      %v627 = vpop.f32.mrf.mxu0
      %628 = vmatprep.mubr.bf16.mxu0 0
      %629 = vmatmul.mubr.bf16.gmra.mxu0 %v372
      %v630 = vpop.f32.mrf.mxu0
      %v631 = vadd.f32 0.0, %v630
      %v632 = vpop.f32.mrf.mxu0
      %v633 = vpop.f32.mrf.mxu0
      %v634 = vadd.f32 0.0, %v633
      %v635 = vpop.f32.mrf.mxu0
      %636 = vmatprep.mubr.bf16.mxu0 0
      %637 = vmatmul.mubr.bf16.gmra.mxu0 %v373
      %v638 = vpop.f32.mrf.mxu0
      %v639 = vadd.f32 0.0, %v638
      %v640 = vpop.f32.mrf.mxu0
      %v641 = vpop.f32.mrf.mxu0
      %v642 = vadd.f32 0.0, %v641
      %v643 = vpop.f32.mrf.mxu0
      %644 = vmatprep.mubr.bf16.mxu0 0
      %645 = vmatmul.mubr.bf16.gmra.mxu0 %v374
      %v646 = vpop.f32.mrf.mxu0
      %v647 = vadd.f32 0.0, %v646
      %v648 = vpop.f32.mrf.mxu0
      %v649 = vpop.f32.mrf.mxu0
      %v650 = vadd.f32 0.0, %v649
      %v651 = vpop.f32.mrf.mxu0
      %652 = vmatprep.mubr.bf16.mxu0 0
      %653 = vmatmul.mubr.bf16.gmra.mxu0 %v375
      %v654 = vpop.f32.mrf.mxu0
      %v655 = vadd.f32 0.0, %v654
      %v656 = vpop.f32.mrf.mxu0
      %v657 = vpop.f32.mrf.mxu0
      %v658 = vadd.f32 0.0, %v657
      %v659 = vpop.f32.mrf.mxu0
      %660 = vmatprep.mubr.bf16.mxu0 0
      %661 = vmatmul.mubr.bf16.gmra.mxu0 %v376
      %v662 = vpop.f32.mrf.mxu0
      %v663 = vadd.f32 0.0, %v662
      %v664 = vpop.f32.mrf.mxu0
      %v665 = vpop.f32.mrf.mxu0
      %v666 = vadd.f32 0.0, %v665
      %v667 = vpop.f32.mrf.mxu0
      %668 = vmatprep.mubr.bf16.mxu0 0
      %669 = vmatmul.mubr.bf16.gmra.mxu0 %v377
      %v670 = vpop.f32.mrf.mxu0
      %v671 = vadd.f32 0.0, %v670
      %v672 = vpop.f32.mrf.mxu0
      %v673 = vpop.f32.mrf.mxu0
      %v674 = vadd.f32 0.0, %v673
      %v675 = vpop.f32.mrf.mxu0
      %676 = vmatprep.mubr.bf16.mxu0 0
      %677 = vmatmul.mubr.bf16.gmra.mxu0 %v378
      %v678 = vpop.f32.mrf.mxu0
      %v679 = vadd.f32 0.0, %v678
      %v680 = vpop.f32.mrf.mxu0
      %v681 = vpop.f32.mrf.mxu0
      %v682 = vadd.f32 0.0, %v681
      %v683 = vpop.f32.mrf.mxu0
      %684 = vmatprep.mubr.bf16.mxu0 0
      %685 = vmatmul.mubr.bf16.gmra.mxu0 %v379
      %v686 = vpop.f32.mrf.mxu0
      %v687 = vadd.f32 0.0, %v686
      %v688 = vpop.f32.mrf.mxu0
      %v689 = vpop.f32.mrf.mxu0
      %v690 = vadd.f32 0.0, %v689
      %v691 = vpop.f32.mrf.mxu0
      %692 = vmatprep.mubr.bf16.mxu0 0
      %693 = vmatmul.mubr.bf16.gmra.mxu0 %v380
      %v694 = vpop.f32.mrf.mxu0
      %v695 = vadd.f32 0.0, %v694
      %v696 = vpop.f32.mrf.mxu0
      %v697 = vpop.f32.mrf.mxu0
      %v698 = vadd.f32 0.0, %v697
      %v699 = vpop.f32.mrf.mxu0
      %700 = vmatprep.mubr.bf16.mxu0 0
      %701 = vmatmul.mubr.bf16.gmra.mxu0 %v381
      %v702 = vpop.f32.mrf.mxu0
      %v703 = vadd.f32 0.0, %v702
      %v704 = vpop.f32.mrf.mxu0
      %v705 = vpop.f32.mrf.mxu0
      %v706 = vadd.f32 0.0, %v705
      %v707 = vpop.f32.mrf.mxu0
      %708 = vmatprep.mubr.bf16.mxu0 0
      %709 = vmatmul.mubr.bf16.gmra.mxu0 %v382
      %v710 = vpop.f32.mrf.mxu0
      %v711 = vadd.f32 0.0, %v710
      %v712 = vpop.f32.mrf.mxu0
      %v713 = vpop.f32.mrf.mxu0
      %v714 = vadd.f32 0.0, %v713
      %v715 = vpop.f32.mrf.mxu0
      %716 = vmatprep.mubr.bf16.mxu0 0
      %717 = vmatmul.mubr.bf16.gmra.mxu0 %v383
      %v718 = vpop.f32.mrf.mxu0
      %v719 = vadd.f32 0.0, %v718
      %v720 = vpop.f32.mrf.mxu0
      %v721 = vpop.f32.mrf.mxu0
      %v722 = vadd.f32 0.0, %v721
      %v723 = vpop.f32.mrf.mxu0
      %724 = vmatprep.mubr.bf16.mxu0 0
      %725 = vmatmul.mubr.bf16.gmra.mxu0 %v384
      %v726 = vpop.f32.mrf.mxu0
      %v727 = vadd.f32 0.0, %v726
      %v728 = vpop.f32.mrf.mxu0
      %v729 = vpop.f32.mrf.mxu0
      %v730 = vadd.f32 0.0, %v729
      %v731 = vpop.f32.mrf.mxu0
      %732 = vmatprep.mubr.bf16.mxu0 0
      %733 = vmatmul.mubr.bf16.gmra.mxu0 %v385
      %v734 = vpop.f32.mrf.mxu0
      %v735 = vadd.f32 0.0, %v734
      %v736 = vpop.f32.mrf.mxu0
      %v737 = vpop.f32.mrf.mxu0
      %v738 = vadd.f32 0.0, %v737
      %v739 = vpop.f32.mrf.mxu0
      %740 = vmatprep.mubr.bf16.mxu0 0
      %741 = vmatmul.mubr.bf16.gmra.mxu0 %v386
      %v742 = vpop.f32.mrf.mxu0
      %v743 = vadd.f32 0.0, %v742
      %v744 = vpop.f32.mrf.mxu0
      %v745 = vpop.f32.mrf.mxu0
      %v746 = vadd.f32 0.0, %v745
      %v747 = vpop.f32.mrf.mxu0
      %748 = vmatprep.mubr.bf16.mxu0 0
      %749 = vmatmul.mubr.bf16.gmra.mxu0 %v387
      %v750 = vpop.f32.mrf.mxu0
      %v751 = vadd.f32 0.0, %v750
      %v752 = vpop.f32.mrf.mxu0
      %v753 = vpop.f32.mrf.mxu0
      %v754 = vadd.f32 0.0, %v753
      %v755 = vpop.f32.mrf.mxu0
      %756 = vdwg.mxu0
      %v757 = vpack.c.bf16 %v506, %v503
      %v758 = vpack.c.bf16 %v514, %v511
      %v759 = vpack.c.bf16 %v522, %v519
      %v760 = vpack.c.bf16 %v530, %v527
      %v761 = vpack.c.bf16 %v538, %v535
      %v762 = vpack.c.bf16 %v546, %v543
      %v763 = vpack.c.bf16 %v554, %v551
      %v764 = vpack.c.bf16 %v562, %v559
      %v765 = vpack.c.bf16 %v570, %v567
      %v766 = vpack.c.bf16 %v578, %v575
      %v767 = vpack.c.bf16 %v586, %v583
      %v768 = vpack.c.bf16 %v594, %v591
      %v769 = vpack.c.bf16 %v602, %v599
      %v770 = vpack.c.bf16 %v610, %v607
      %v771 = vpack.c.bf16 %v618, %v615
      %v772 = vpack.c.bf16 %v626, %v623
      %v773 = vpack.c.bf16 %v634, %v631
      %v774 = vpack.c.bf16 %v642, %v639
      %v775 = vpack.c.bf16 %v650, %v647
      %v776 = vpack.c.bf16 %v658, %v655
      %v777 = vpack.c.bf16 %v666, %v663
      %v778 = vpack.c.bf16 %v674, %v671
      %v779 = vpack.c.bf16 %v682, %v679
      %v780 = vpack.c.bf16 %v690, %v687
      %v781 = vpack.c.bf16 %v698, %v695
      %v782 = vpack.c.bf16 %v706, %v703
      %v783 = vpack.c.bf16 %v714, %v711
      %v784 = vpack.c.bf16 %v722, %v719
      %v785 = vpack.c.bf16 %v730, %v727
      %v786 = vpack.c.bf16 %v738, %v735
      %v787 = vpack.c.bf16 %v746, %v743
      %v788 = vpack.c.bf16 %v754, %v751
      %v821 = vunpack.c.l.b16 %v757
      %v822 = vunpack.c.h.b16 %v757
      %v823 = vunpack.c.l.b16 %v758
      %v824 = vunpack.c.h.b16 %v758
      %v825 = vunpack.c.l.b16 %v759
      %v826 = vunpack.c.h.b16 %v759
      %v827 = vunpack.c.l.b16 %v760
      %v828 = vunpack.c.h.b16 %v760
      %v829 = vunpack.c.l.b16 %v761
      %v830 = vunpack.c.h.b16 %v761
      %v831 = vunpack.c.l.b16 %v762
      %v832 = vunpack.c.h.b16 %v762
      %v833 = vunpack.c.l.b16 %v763
      %v834 = vunpack.c.h.b16 %v763
      %v835 = vunpack.c.l.b16 %v764
      %v836 = vunpack.c.h.b16 %v764
      %v837 = vunpack.c.l.b16 %v765
      %v838 = vunpack.c.h.b16 %v765
      %v839 = vunpack.c.l.b16 %v766
      %v840 = vunpack.c.h.b16 %v766
      %v841 = vunpack.c.l.b16 %v767
      %v842 = vunpack.c.h.b16 %v767
      %v843 = vunpack.c.l.b16 %v768
      %v844 = vunpack.c.h.b16 %v768
      %v845 = vunpack.c.l.b16 %v769
      %v846 = vunpack.c.h.b16 %v769
      %v847 = vunpack.c.l.b16 %v770
      %v848 = vunpack.c.h.b16 %v770
      %v849 = vunpack.c.l.b16 %v771
      %v850 = vunpack.c.h.b16 %v771
      %v851 = vunpack.c.l.b16 %v772
      %v852 = vunpack.c.h.b16 %v772
      %v853 = vunpack.c.l.b16 %v773
      %v854 = vunpack.c.h.b16 %v773
      %v855 = vunpack.c.l.b16 %v774
      %v856 = vunpack.c.h.b16 %v774
      %v857 = vunpack.c.l.b16 %v775
      %v858 = vunpack.c.h.b16 %v775
      %v859 = vunpack.c.l.b16 %v776
      %v860 = vunpack.c.h.b16 %v776
      %v861 = vunpack.c.l.b16 %v777
      %v862 = vunpack.c.h.b16 %v777
      %v863 = vunpack.c.l.b16 %v778
      %v864 = vunpack.c.h.b16 %v778
      %v865 = vunpack.c.l.b16 %v779
      %v866 = vunpack.c.h.b16 %v779
      %v867 = vunpack.c.l.b16 %v780
      %v868 = vunpack.c.h.b16 %v780
      %v869 = vunpack.c.l.b16 %v781
      %v870 = vunpack.c.h.b16 %v781
      %v871 = vunpack.c.l.b16 %v782
      %v872 = vunpack.c.h.b16 %v782
      %v873 = vunpack.c.l.b16 %v783
      %v874 = vunpack.c.h.b16 %v783
      %v875 = vunpack.c.l.b16 %v784
      %v876 = vunpack.c.h.b16 %v784
      %v877 = vunpack.c.l.b16 %v785
      %v878 = vunpack.c.h.b16 %v785
      %v879 = vunpack.c.l.b16 %v786
      %v880 = vunpack.c.h.b16 %v786
      %v881 = vunpack.c.l.b16 %v787
      %v882 = vunpack.c.h.b16 %v787
      %v883 = vunpack.c.l.b16 %v788
      %v884 = vunpack.c.h.b16 %v788
      %v885 = vpack.c.b16 %v821, %v821
      %v886 = vpack.c.b16 %v822, %v822
      %v887 = vpack.c.b16 %v823, %v823
      %v888 = vpack.c.b16 %v824, %v824
      %v889 = vpack.c.b16 %v825, %v825
      %v890 = vpack.c.b16 %v826, %v826
      %v891 = vpack.c.b16 %v827, %v827
      %v892 = vpack.c.b16 %v828, %v828
      %v893 = vpack.c.b16 %v829, %v829
      %v894 = vpack.c.b16 %v830, %v830
      %v895 = vpack.c.b16 %v831, %v831
      %v896 = vpack.c.b16 %v832, %v832
      %v897 = vpack.c.b16 %v833, %v833
      %v898 = vpack.c.b16 %v834, %v834
      %v899 = vpack.c.b16 %v835, %v835
      %v900 = vpack.c.b16 %v836, %v836
      %v901 = vpack.c.b16 %v837, %v837
      %v902 = vpack.c.b16 %v838, %v838
      %v903 = vpack.c.b16 %v839, %v839
      %v904 = vpack.c.b16 %v840, %v840
      %v905 = vpack.c.b16 %v841, %v841
      %v906 = vpack.c.b16 %v842, %v842
      %v907 = vpack.c.b16 %v843, %v843
      %v908 = vpack.c.b16 %v844, %v844
      %v909 = vpack.c.b16 %v845, %v845
      %v910 = vpack.c.b16 %v846, %v846
      %v911 = vpack.c.b16 %v847, %v847
      %v912 = vpack.c.b16 %v848, %v848
      %v913 = vpack.c.b16 %v849, %v849
      %v914 = vpack.c.b16 %v850, %v850
      %v915 = vpack.c.b16 %v851, %v851
      %v916 = vpack.c.b16 %v852, %v852
      %v917 = vpack.c.b16 %v853, %v853
      %v918 = vpack.c.b16 %v854, %v854
      %v919 = vpack.c.b16 %v855, %v855
      %v920 = vpack.c.b16 %v856, %v856
      %v921 = vpack.c.b16 %v857, %v857
      %v922 = vpack.c.b16 %v858, %v858
      %v923 = vpack.c.b16 %v859, %v859
      %v924 = vpack.c.b16 %v860, %v860
      %v925 = vpack.c.b16 %v861, %v861
      %v926 = vpack.c.b16 %v862, %v862
      %v927 = vpack.c.b16 %v863, %v863
      %v928 = vpack.c.b16 %v864, %v864
      %v929 = vpack.c.b16 %v865, %v865
      %v930 = vpack.c.b16 %v866, %v866
      %v931 = vpack.c.b16 %v867, %v867
      %v932 = vpack.c.b16 %v868, %v868
      %v933 = vpack.c.b16 %v869, %v869
      %v934 = vpack.c.b16 %v870, %v870
      %v935 = vpack.c.b16 %v871, %v871
      %v936 = vpack.c.b16 %v872, %v872
      %v937 = vpack.c.b16 %v873, %v873
      %v938 = vpack.c.b16 %v874, %v874
      %v939 = vpack.c.b16 %v875, %v875
      %v940 = vpack.c.b16 %v876, %v876
      %v941 = vpack.c.b16 %v877, %v877
      %v942 = vpack.c.b16 %v878, %v878
      %v943 = vpack.c.b16 %v879, %v879
      %v944 = vpack.c.b16 %v880, %v880
      %v945 = vpack.c.b16 %v881, %v881
      %v946 = vpack.c.b16 %v882, %v882
      %v947 = vpack.c.b16 %v883, %v883
      %v948 = vpack.c.b16 %v884, %v884
      %vm1013 = vcmask 27648
      %1014 = vst.msk [vmem:[%s145] sm:$0xf] %vm1013, %v885
      %1015 = vst.msk [vmem:[%s145 + $0x4] sm:$0xf] %vm1013, %v886
      %1016 = vst.msk [vmem:[%s145 + $0x8] sm:$0xf] %vm1013, %v887
      %1017 = vst.msk [vmem:[%s145 + $0xc] sm:$0xf] %vm1013, %v888
      %1018 = vst.msk [vmem:[%s145 + $0x10] sm:$0xf] %vm1013, %v889
      %1019 = vst.msk [vmem:[%s145 + $0x14] sm:$0xf] %vm1013, %v890
      %1020 = vst.msk [vmem:[%s145 + $0x18] sm:$0xf] %vm1013, %v891
      %1021 = vst.msk [vmem:[%s145 + $0x1c] sm:$0xf] %vm1013, %v892
      %1022 = vst.msk [vmem:[%s145 + $0x20] sm:$0xf] %vm1013, %v893
      %1023 = vst.msk [vmem:[%s145 + $0x24] sm:$0xf] %vm1013, %v894
      %1024 = vst.msk [vmem:[%s145 + $0x28] sm:$0xf] %vm1013, %v895
      %1025 = vst.msk [vmem:[%s145 + $0x2c] sm:$0xf] %vm1013, %v896
      %1026 = vst.msk [vmem:[%s145 + $0x30] sm:$0xf] %vm1013, %v897
      %1027 = vst.msk [vmem:[%s145 + $0x34] sm:$0xf] %vm1013, %v898
      %1028 = vst.msk [vmem:[%s145 + $0x38] sm:$0xf] %vm1013, %v899
      %1029 = vst.msk [vmem:[%s145 + $0x3c] sm:$0xf] %vm1013, %v900
      %1030 = vst.msk [vmem:[%s145 + $0x40] sm:$0xf] %vm1013, %v901
      %1031 = vst.msk [vmem:[%s145 + $0x44] sm:$0xf] %vm1013, %v902
      %1032 = vst.msk [vmem:[%s145 + $0x48] sm:$0xf] %vm1013, %v903
      %1033 = vst.msk [vmem:[%s145 + $0x4c] sm:$0xf] %vm1013, %v904
      %1034 = vst.msk [vmem:[%s145 + $0x50] sm:$0xf] %vm1013, %v905
      %1035 = vst.msk [vmem:[%s145 + $0x54] sm:$0xf] %vm1013, %v906
      %1036 = vst.msk [vmem:[%s145 + $0x58] sm:$0xf] %vm1013, %v907
      %1037 = vst.msk [vmem:[%s145 + $0x5c] sm:$0xf] %vm1013, %v908
      %1038 = vst.msk [vmem:[%s145 + $0x60] sm:$0xf] %vm1013, %v909
      %1039 = vst.msk [vmem:[%s145 + $0x64] sm:$0xf] %vm1013, %v910
      %1040 = vst.msk [vmem:[%s145 + $0x68] sm:$0xf] %vm1013, %v911
      %1041 = vst.msk [vmem:[%s145 + $0x6c] sm:$0xf] %vm1013, %v912
      %1042 = vst.msk [vmem:[%s145 + $0x70] sm:$0xf] %vm1013, %v913
      %1043 = vst.msk [vmem:[%s145 + $0x74] sm:$0xf] %vm1013, %v914
      %1044 = vst.msk [vmem:[%s145 + $0x78] sm:$0xf] %vm1013, %v915
      %1045 = vst.msk [vmem:[%s145 + $0x7c] sm:$0xf] %vm1013, %v916
      %1046 = vst.msk [vmem:[%s145 + $0x80] sm:$0xf] %vm1013, %v917
      %1047 = vst.msk [vmem:[%s145 + $0x84] sm:$0xf] %vm1013, %v918
      %1048 = vst.msk [vmem:[%s145 + $0x88] sm:$0xf] %vm1013, %v919
      %1049 = vst.msk [vmem:[%s145 + $0x8c] sm:$0xf] %vm1013, %v920
      %1050 = vst.msk [vmem:[%s145 + $0x90] sm:$0xf] %vm1013, %v921
      %1051 = vst.msk [vmem:[%s145 + $0x94] sm:$0xf] %vm1013, %v922
      %1052 = vst.msk [vmem:[%s145 + $0x98] sm:$0xf] %vm1013, %v923
      %1053 = vst.msk [vmem:[%s145 + $0x9c] sm:$0xf] %vm1013, %v924
      %1054 = vst.msk [vmem:[%s145 + $0xa0] sm:$0xf] %vm1013, %v925
      %1055 = vst.msk [vmem:[%s145 + $0xa4] sm:$0xf] %vm1013, %v926
      %1056 = vst.msk [vmem:[%s145 + $0xa8] sm:$0xf] %vm1013, %v927
      %1057 = vst.msk [vmem:[%s145 + $0xac] sm:$0xf] %vm1013, %v928
      %1058 = vst.msk [vmem:[%s145 + $0xb0] sm:$0xf] %vm1013, %v929
      %1059 = vst.msk [vmem:[%s145 + $0xb4] sm:$0xf] %vm1013, %v930
      %1060 = vst.msk [vmem:[%s145 + $0xb8] sm:$0xf] %vm1013, %v931
      %1061 = vst.msk [vmem:[%s145 + $0xbc] sm:$0xf] %vm1013, %v932
      %1062 = vst.msk [vmem:[%s145 + $0xc0] sm:$0xf] %vm1013, %v933
      %1063 = vst.msk [vmem:[%s145 + $0xc4] sm:$0xf] %vm1013, %v934
      %1064 = vst.msk [vmem:[%s145 + $0xc8] sm:$0xf] %vm1013, %v935
      %1065 = vst.msk [vmem:[%s145 + $0xcc] sm:$0xf] %vm1013, %v936
      %1066 = vst.msk [vmem:[%s145 + $0xd0] sm:$0xf] %vm1013, %v937
      %1067 = vst.msk [vmem:[%s145 + $0xd4] sm:$0xf] %vm1013, %v938
      %1068 = vst.msk [vmem:[%s145 + $0xd8] sm:$0xf] %vm1013, %v939
      %1069 = vst.msk [vmem:[%s145 + $0xdc] sm:$0xf] %vm1013, %v940
      %1070 = vst.msk [vmem:[%s145 + $0xe0] sm:$0xf] %vm1013, %v941
      %1071 = vst.msk [vmem:[%s145 + $0xe4] sm:$0xf] %vm1013, %v942
      %1072 = vst.msk [vmem:[%s145 + $0xe8] sm:$0xf] %vm1013, %v943
      %1073 = vst.msk [vmem:[%s145 + $0xec] sm:$0xf] %vm1013, %v944
      %1074 = vst.msk [vmem:[%s145 + $0xf0] sm:$0xf] %vm1013, %v945
      %1075 = vst.msk [vmem:[%s145 + $0xf4] sm:$0xf] %vm1013, %v946
      %1076 = vst.msk [vmem:[%s145 + $0xf8] sm:$0xf] %vm1013, %v947
      %1077 = vst.msk [vmem:[%s145 + $0xfc] sm:$0xf] %vm1013, %v948
      %s1078 = smul.u32 64, %s13
      %p1079 = scmp.lt.s32.totalorder %s1078, 383
      %s1080 = scalar_select %p1079, %s1078, 383
      %s1081 = smul.addr %s1080, 4
      %s1082 = scalar_lea.vmem %s2, %s1081
      // Predicated region
      $region29: #{evaluate.3} parent=27 // pred_check
        %p1083 = pneg %p78
      $region30: #{evaluate.3} parent=27 // pred_check_branch
        %1085 = sbr.rel (%p1083) target = $region32
      $region31: #{evaluate.3} parent=27 // pred_region
        %s1086 = smul.u32 64, %s13
      $region32: #{evaluate.3} parent=27 // pred_fallthru
        _
    $region28: #{evaluate.3} parent=5 // pred_fallthru
      _
    %p1087 = scmp.le.s32.totalorder 2, %s8
    // Predicated region
    $region33: #{evaluate.3} parent=5 // pred_check
      %p1088 = pneg %p1087
    $region34: #{evaluate.3} parent=5 // pred_check_branch
      %1090 = sbr.rel (%p1088) target = $region36
    $region35: #{evaluate.3} parent=5 // pred_region
      %s1091 = ssub.s32 %s8, 2
      // Predicated region
      $region37: #{evaluate.3} parent=35 // pred_check
        %p1092 = pneg %p84
      $region38: #{evaluate.3} parent=35 // pred_check_branch
        %1094 = sbr.rel (%p1092) target = $region40
      $region39: #{evaluate.3} parent=35 // pred_region
        %s1095 = smul.u32 64, %s14
        %p1096 = scmp.lt.s32.totalorder %s1095, 383
        %s1097 = scalar_select %p1096, %s1095, 383
        %s1098 = smul.addr %s1097, 4
        %s1099 = scalar_lea.vmem %s2, %s1098
      $region40: #{evaluate.3} parent=35 // pred_fallthru
        _
    $region36: #{evaluate.3} parent=5 // pred_fallthru
      _
  $region6: #{evaluate.3} parent=0 // loop_footer
    %s12 = sadd.s32 1, %s8
  $region7: #{evaluate.3} parent=0 // loop_footer_branch
    %7 = sbr.rel target = $region3
  $region8: #{evaluate.3} parent=0 // loop_exit
    _

// kernel: evaluate.4
$region0: #{evaluate.4}
  #allocation0 [shape = 'u32[]', space=smem, size = 0x4, offset = 0x4, fixed_abs, tag = 'smem constant byte address 0x4 - core index']
  #allocation1 [shape = 'u32[144,128]{1,0:T(1,128)}', space=vmem, size = 0x12000, scoped, tag = 'internal scratch']
  %s0 = inlined_call_operand.vmem [shape: bf16[168,144], index: 0, kind: input, shape index: {}]
  %s1 = inlined_call_operand.vmem [shape: bf16[144,16], index: 1, kind: input, shape index: {}]
  %s2 = inlined_call_operand.vmem [shape: f32[1,16], index: 2, kind: input, shape index: {}]
  %s3 = inlined_call_operand.vmem [shape: bf16[168,16], index: 3, kind: output, shape index: {}]
  %s4 = sld [smem:[#allocation0]]
  $region22: #{evaluate.4} parent=0
    _
  %s6 = ssub.s32 1, %s4
  %s7 = scalar_select 0, %s6, %s4
  // Predicated region
  $region2: #{evaluate.4} parent=0 // pred_check
    _
  $region3: #{evaluate.4} parent=0 // pred_check_branch
    %9 = sbr.rel (0) target = $region5
  $region4: #{evaluate.4} parent=0 // pred_region
    _
  $region5: #{evaluate.4} parent=0 // pred_fallthru
    _
  // Predicated region
  $region6: #{evaluate.4} parent=0 // pred_check
    _
  $region7: #{evaluate.4} parent=0 // pred_check_branch
    %11 = sbr.rel (0) target = $region9
  $region8: #{evaluate.4} parent=0 // pred_region
    _
  $region9: #{evaluate.4} parent=0 // pred_fallthru
    _
  // Predicated region
  $region10: #{evaluate.4} parent=0 // pred_check
    _
  $region11: #{evaluate.4} parent=0 // pred_check_branch
    %13 = sbr.rel (0) target = $region13
  $region12: #{evaluate.4} parent=0 // pred_region
    _
  $region13: #{evaluate.4} parent=0 // pred_fallthru
    _
  %v15 = vld [vmem:[%s0] sm:$0xff]
  %v16 = vld [vmem:[%s0 + $0x8] sm:$0xff]
  %v17 = vld [vmem:[%s0 + $0x10] sm:$0xff]
  %v18 = vld [vmem:[%s0 + $0x18] sm:$0xff]
  %v19 = vld [vmem:[%s0 + $0x20] sm:$0xff]
  %v20 = vld [vmem:[%s0 + $0x28] sm:$0xff]
  %v21 = vld [vmem:[%s0 + $0x30] sm:$0xff]
  %v22 = vld [vmem:[%s0 + $0x38] sm:$0xff]
  %v23 = vld [vmem:[%s0 + $0x40] sm:$0xff]
  %v24 = vld [vmem:[%s0 + $0x48] sm:$0xff]
  %v25 = vld [vmem:[%s0 + $0x50] sm:$0xff]
  %v26 = vld [vmem:[%s0 + $0x58] sm:$0xff]
  %v27 = vld [vmem:[%s0 + $0x60] sm:$0xff]
  %v28 = vld [vmem:[%s0 + $0x68] sm:$0xff]
  %v29 = vld [vmem:[%s0 + $0x70] sm:$0xff]
  %v30 = vld [vmem:[%s0 + $0x78] sm:$0xff]
  %v31 = vld [vmem:[%s0 + $0x80] sm:$0xff]
  %v32 = vld [vmem:[%s0 + $0x88] sm:$0xff]
  %v33 = vld [vmem:[%s0 + $0x90] sm:$0xff]
  %v34 = vld [vmem:[%s0 + $0x98] sm:$0xff]
  %v35 = vld [vmem:[%s0 + $0xa0] sm:$0xff]
  %v36 = vld [vmem:[%s1] sm:$0xf]
  %v37 = vld [vmem:[%s1 + $0x4] sm:$0xf]
  %v38 = vld [vmem:[%s1 + $0x8] sm:$0xf]
  %v39 = vld [vmem:[%s1 + $0xc] sm:$0xf]
  %v40 = vld [vmem:[%s1 + $0x10] sm:$0xf]
  %v41 = vld [vmem:[%s1 + $0x14] sm:$0xf]
  %v42 = vld [vmem:[%s1 + $0x18] sm:$0xf]
  %v43 = vld [vmem:[%s1 + $0x1c] sm:$0xf]
  %v44 = vld [vmem:[%s1 + $0x20] sm:$0xf]
  %v45 = vld [vmem:[%s1 + $0x24] sm:$0xf]
  %v46 = vld [vmem:[%s1 + $0x28] sm:$0xf]
  %v47 = vld [vmem:[%s1 + $0x2c] sm:$0xf]
  %v48 = vld [vmem:[%s1 + $0x30] sm:$0xf]
  %v49 = vld [vmem:[%s1 + $0x34] sm:$0xf]
  %v50 = vld [vmem:[%s1 + $0x38] sm:$0xf]
  %v51 = vld [vmem:[%s1 + $0x3c] sm:$0xf]
  %v52 = vld [vmem:[%s1 + $0x40] sm:$0xf]
  %v53 = vld [vmem:[%s1 + $0x44] sm:$0xf]
  %v54 = vld [vmem:[%s2] sm:$0x1]
  %v56 = vlaneseq
  %v57 = vshrl.u32 %v56, 7
  %v58 = vsub.s32 0, %v57
  %v59 = vrot.slane %v54, %v58
  %v82 = vunpack.c.l.b16 %v15
  %v83 = vunpack.c.h.b16 %v15
  %v84 = vunpack.c.l.b16 %v16
  %v85 = vunpack.c.h.b16 %v16
  %v86 = vunpack.c.l.b16 %v17
  %v87 = vunpack.c.h.b16 %v17
  %v88 = vunpack.c.l.b16 %v18
  %v89 = vunpack.c.h.b16 %v18
  %v90 = vunpack.c.l.b16 %v19
  %v91 = vunpack.c.h.b16 %v19
  %v92 = vunpack.c.l.b16 %v20
  %v93 = vunpack.c.h.b16 %v20
  %v94 = vunpack.c.l.b16 %v21
  %v95 = vunpack.c.h.b16 %v21
  %v96 = vunpack.c.l.b16 %v22
  %v97 = vunpack.c.h.b16 %v22
  %v98 = vunpack.c.l.b16 %v23
  %v99 = vunpack.c.h.b16 %v23
  %v100 = vunpack.c.l.b16 %v24
  %v101 = vunpack.c.h.b16 %v24
  %v102 = vunpack.c.l.b16 %v25
  %v103 = vunpack.c.h.b16 %v25
  %v104 = vunpack.c.l.b16 %v26
  %v105 = vunpack.c.h.b16 %v26
  %v106 = vunpack.c.l.b16 %v27
  %v107 = vunpack.c.h.b16 %v27
  %v108 = vunpack.c.l.b16 %v28
  %v109 = vunpack.c.h.b16 %v28
  %v110 = vunpack.c.l.b16 %v29
  %v111 = vunpack.c.h.b16 %v29
  %v112 = vunpack.c.l.b16 %v30
  %v113 = vunpack.c.h.b16 %v30
  %v114 = vunpack.c.l.b16 %v31
  %v115 = vunpack.c.h.b16 %v31
  %v116 = vunpack.c.l.b16 %v32
  %v117 = vunpack.c.h.b16 %v32
  %v118 = vunpack.c.l.b16 %v33
  %v119 = vunpack.c.h.b16 %v33
  %v120 = vunpack.c.l.b16 %v34
  %v121 = vunpack.c.h.b16 %v34
  %v122 = vunpack.c.l.b16 %v35
  %v123 = vunpack.c.h.b16 %v35
  %v124 = vpack.c.b16 %v84, %v82
  %v125 = vpack.c.b16 %v85, %v83
  %v126 = vpack.c.b16 %v88, %v86
  %v127 = vpack.c.b16 %v89, %v87
  %v128 = vpack.c.b16 %v92, %v90
  %v129 = vpack.c.b16 %v93, %v91
  %v130 = vpack.c.b16 %v96, %v94
  %v131 = vpack.c.b16 %v97, %v95
  %v132 = vpack.c.b16 %v100, %v98
  %v133 = vpack.c.b16 %v101, %v99
  %v134 = vpack.c.b16 %v104, %v102
  %v135 = vpack.c.b16 %v105, %v103
  %v136 = vpack.c.b16 %v108, %v106
  %v137 = vpack.c.b16 %v109, %v107
  %v138 = vpack.c.b16 %v112, %v110
  %v139 = vpack.c.b16 %v113, %v111
  %v140 = vpack.c.b16 %v116, %v114
  %v141 = vpack.c.b16 %v117, %v115
  %v142 = vpack.c.b16 %v120, %v118
  %v143 = vpack.c.b16 %v121, %v119
  %v144 = vpack.c.b16 %v122, %v122
  %v145 = vpack.c.b16 %v123, %v123
  %v175 = vunpack.c.l.b16 %v36
  %v176 = vunpack.c.l.b16 %v37
  %v177 = vunpack.c.l.b16 %v38
  %v178 = vunpack.c.l.b16 %v39
  %v179 = vunpack.c.l.b16 %v40
  %v180 = vunpack.c.l.b16 %v41
  %v181 = vunpack.c.l.b16 %v42
  %v182 = vunpack.c.l.b16 %v43
  %v183 = vunpack.c.l.b16 %v44
  %v184 = vunpack.c.l.b16 %v45
  %v185 = vunpack.c.l.b16 %v46
  %v186 = vunpack.c.l.b16 %v47
  %v187 = vunpack.c.l.b16 %v48
  %v188 = vunpack.c.l.b16 %v49
  %v189 = vunpack.c.l.b16 %v50
  %v190 = vunpack.c.l.b16 %v51
  %v191 = vunpack.c.l.b16 %v52
  %v192 = vunpack.c.l.b16 %v53
  %v193 = vpack.c.b16 %v176, %v175
  %v194 = vpack.c.b16 %v178, %v177
  %v195 = vpack.c.b16 %v180, %v179
  %v196 = vpack.c.b16 %v182, %v181
  %v197 = vpack.c.b16 %v184, %v183
  %v198 = vpack.c.b16 %v186, %v185
  %v199 = vpack.c.b16 %v188, %v187
  %v200 = vpack.c.b16 %v190, %v189
  %v201 = vpack.c.b16 %v192, %v191
  %vm211 = vcmask 130048
  %v213 = vsel %vm211, %v125, 0
  %v216 = vsel %vm211, %v127, 0
  %v219 = vsel %vm211, %v129, 0
  %v222 = vsel %vm211, %v131, 0
  %v225 = vsel %vm211, %v133, 0
  %v228 = vsel %vm211, %v135, 0
  %v231 = vsel %vm211, %v137, 0
  %v234 = vsel %vm211, %v139, 0
  %v237 = vsel %vm211, %v141, 0
  %v240 = vsel %vm211, %v143, 0
  %v243 = vsel %vm211, %v145, 0
  %245 = vmatprep.subr.bf16.mxu0 0
  %246 = vmatpush1.bf16.msra.mxu0 %v200
  %247 = vmatprep.subr.bf16.mxu0 0
  %248 = vmatpush1.bf16.msra.mxu0 %v199
  %249 = vmatprep.subr.bf16.mxu0 0
  %250 = vmatpush1.bf16.msra.mxu0 %v198
  %251 = vmatprep.subr.bf16.mxu0 0
  %252 = vmatpush1.bf16.msra.mxu0 %v197
  %253 = vmatprep.subr.bf16.mxu0 0
  %254 = vmatpush1.bf16.msra.mxu0 %v196
  %255 = vmatprep.subr.bf16.mxu0 0
  %256 = vmatpush1.bf16.msra.mxu0 %v195
  %257 = vmatprep.subr.bf16.mxu0 0
  %258 = vmatpush1.bf16.msra.mxu0 %v194
  %259 = vmatprep.subr.bf16.mxu0 0
  %260 = vmatpush1.bf16.msra.mxu0 %v193
  %261 = vmatprep.subr.bf16.mxu0 0
  %262 = vmatpush2.bf16.msra.mxu0 0
  %263 = vmatprep.subr.bf16.mxu0 0
  %264 = vmatpush2.bf16.msra.mxu0 0
  %265 = vmatprep.subr.bf16.mxu0 0
  %266 = vmatpush2.bf16.msra.mxu0 0
  %267 = vmatprep.subr.bf16.mxu0 0
  %268 = vmatpush2.bf16.msra.mxu0 0
  %269 = vmatprep.subr.bf16.mxu0 0
  %270 = vmatpush2.bf16.msra.mxu0 0
  %271 = vmatprep.subr.bf16.mxu0 0
  %272 = vmatpush2.bf16.msra.mxu0 0
  %273 = vmatprep.subr.bf16.mxu0 0
  %274 = vmatpush2.bf16.msra.mxu0 0
  %275 = vmatprep.subr.bf16.mxu0 0
  %276 = vmatpush2.bf16.msra.mxu0 %v201
  %277 = vmatprep.mubr.bf16.mxu0 %v213
  %278 = vmatmul.mubr.bf16.gmra.mxu0 %v124
  %v279 = vpop.f32.mrf.mxu0
  %v280 = vadd.f32 %v59, %v279
  %v281 = vpop.f32.mrf.mxu0
  %v282 = vpop.f32.mrf.mxu0
  %v283 = vadd.f32 %v59, %v282
  %v284 = vpop.f32.mrf.mxu0
  %285 = vmatprep.mubr.bf16.mxu0 %v216
  %286 = vmatmul.mubr.bf16.gmra.mxu0 %v126
  %v287 = vpop.f32.mrf.mxu0
  %v288 = vadd.f32 %v59, %v287
  %v289 = vpop.f32.mrf.mxu0
  %v290 = vpop.f32.mrf.mxu0
  %v291 = vadd.f32 %v59, %v290
  %v292 = vpop.f32.mrf.mxu0
  %293 = vmatprep.mubr.bf16.mxu0 %v219
  %294 = vmatmul.mubr.bf16.gmra.mxu0 %v128
  %v295 = vpop.f32.mrf.mxu0
  %v296 = vadd.f32 %v59, %v295
  %v297 = vpop.f32.mrf.mxu0
  %v298 = vpop.f32.mrf.mxu0
  %v299 = vadd.f32 %v59, %v298
  %v300 = vpop.f32.mrf.mxu0
  %301 = vmatprep.mubr.bf16.mxu0 %v222
  %302 = vmatmul.mubr.bf16.gmra.mxu0 %v130
  %v303 = vpop.f32.mrf.mxu0
  %v304 = vadd.f32 %v59, %v303
  %v305 = vpop.f32.mrf.mxu0
  %v306 = vpop.f32.mrf.mxu0
  %v307 = vadd.f32 %v59, %v306
  %v308 = vpop.f32.mrf.mxu0
  %309 = vmatprep.mubr.bf16.mxu0 %v225
  %310 = vmatmul.mubr.bf16.gmra.mxu0 %v132
  %v311 = vpop.f32.mrf.mxu0
  %v312 = vadd.f32 %v59, %v311
  %v313 = vpop.f32.mrf.mxu0
  %v314 = vpop.f32.mrf.mxu0
  %v315 = vadd.f32 %v59, %v314
  %v316 = vpop.f32.mrf.mxu0
  %317 = vmatprep.mubr.bf16.mxu0 %v228
  %318 = vmatmul.mubr.bf16.gmra.mxu0 %v134
  %v319 = vpop.f32.mrf.mxu0
  %v320 = vadd.f32 %v59, %v319
  %v321 = vpop.f32.mrf.mxu0
  %v322 = vpop.f32.mrf.mxu0
  %v323 = vadd.f32 %v59, %v322
  %v324 = vpop.f32.mrf.mxu0
  %325 = vmatprep.mubr.bf16.mxu0 %v231
  %326 = vmatmul.mubr.bf16.gmra.mxu0 %v136
  %v327 = vpop.f32.mrf.mxu0
  %v328 = vadd.f32 %v59, %v327
  %v329 = vpop.f32.mrf.mxu0
  %v330 = vpop.f32.mrf.mxu0
  %v331 = vadd.f32 %v59, %v330
  %v332 = vpop.f32.mrf.mxu0
  %333 = vmatprep.mubr.bf16.mxu0 %v234
  %334 = vmatmul.mubr.bf16.gmra.mxu0 %v138
  %v335 = vpop.f32.mrf.mxu0
  %v336 = vadd.f32 %v59, %v335
  %v337 = vpop.f32.mrf.mxu0
  %v338 = vpop.f32.mrf.mxu0
  %v339 = vadd.f32 %v59, %v338
  %v340 = vpop.f32.mrf.mxu0
  %341 = vmatprep.mubr.bf16.mxu0 %v237
  %342 = vmatmul.mubr.bf16.gmra.mxu0 %v140
  %v343 = vpop.f32.mrf.mxu0
  %v344 = vadd.f32 %v59, %v343
  %v345 = vpop.f32.mrf.mxu0
  %v346 = vpop.f32.mrf.mxu0
  %v347 = vadd.f32 %v59, %v346
  %v348 = vpop.f32.mrf.mxu0
  %349 = vmatprep.mubr.bf16.mxu0 %v240
  %350 = vmatmul.mubr.bf16.gmra.mxu0 %v142
  %v351 = vpop.f32.mrf.mxu0
  %v352 = vadd.f32 %v59, %v351
  %v353 = vpop.f32.mrf.mxu0
  %v354 = vpop.f32.mrf.mxu0
  %v355 = vadd.f32 %v59, %v354
  %v356 = vpop.f32.mrf.mxu0
  %357 = vmatprep.mubr.bf16.mxu0 %v243
  %358 = vmatmul.mubr.bf16.gmra.mxu0 %v144
  %v359 = vpop.f32.mrf.mxu0
  %v360 = vadd.f32 %v59, %v359
  %v361 = vpop.f32.mrf.mxu0
  %v362 = vpop.f32.mrf.mxu0
  %v363 = vpop.f32.mrf.mxu0
  %364 = vdwg.mxu0
  %v365 = vpack.c.bf16 %v283, %v280
  %v366 = vpack.c.bf16 %v291, %v288
  %v367 = vpack.c.bf16 %v299, %v296
  %v368 = vpack.c.bf16 %v307, %v304
  %v369 = vpack.c.bf16 %v315, %v312
  %v370 = vpack.c.bf16 %v323, %v320
  %v371 = vpack.c.bf16 %v331, %v328
  %v372 = vpack.c.bf16 %v339, %v336
  %v373 = vpack.c.bf16 %v347, %v344
  %v374 = vpack.c.bf16 %v355, %v352
  %v375 = vpack.c.bf16 %v360, %v360
  %v387 = vunpack.c.l.b16 %v365
  %v388 = vunpack.c.h.b16 %v365
  %v389 = vunpack.c.l.b16 %v366
  %v390 = vunpack.c.h.b16 %v366
  %v391 = vunpack.c.l.b16 %v367
  %v392 = vunpack.c.h.b16 %v367
  %v393 = vunpack.c.l.b16 %v368
  %v394 = vunpack.c.h.b16 %v368
  %v395 = vunpack.c.l.b16 %v369
  %v396 = vunpack.c.h.b16 %v369
  %v397 = vunpack.c.l.b16 %v370
  %v398 = vunpack.c.h.b16 %v370
  %v399 = vunpack.c.l.b16 %v371
  %v400 = vunpack.c.h.b16 %v371
  %v401 = vunpack.c.l.b16 %v372
  %v402 = vunpack.c.h.b16 %v372
  %v403 = vunpack.c.l.b16 %v373
  %v404 = vunpack.c.h.b16 %v373
  %v405 = vunpack.c.l.b16 %v374
  %v406 = vunpack.c.h.b16 %v374
  %v407 = vunpack.c.l.b16 %v375
  %v408 = vpack.c.b16 %v387, %v387
  %v409 = vpack.c.b16 %v388, %v388
  %v410 = vpack.c.b16 %v389, %v389
  %v411 = vpack.c.b16 %v390, %v390
  %v412 = vpack.c.b16 %v391, %v391
  %v413 = vpack.c.b16 %v392, %v392
  %v414 = vpack.c.b16 %v393, %v393
  %v415 = vpack.c.b16 %v394, %v394
  %v416 = vpack.c.b16 %v395, %v395
  %v417 = vpack.c.b16 %v396, %v396
  %v418 = vpack.c.b16 %v397, %v397
  %v419 = vpack.c.b16 %v398, %v398
  %v420 = vpack.c.b16 %v399, %v399
  %v421 = vpack.c.b16 %v400, %v400
  %v422 = vpack.c.b16 %v401, %v401
  %v423 = vpack.c.b16 %v402, %v402
  %v424 = vpack.c.b16 %v403, %v403
  %v425 = vpack.c.b16 %v404, %v404
  %v426 = vpack.c.b16 %v405, %v405
  %v427 = vpack.c.b16 %v406, %v406
  %v428 = vpack.c.b16 %v407, %v407
  %vm450 = vcmask 125952
  %451 = vst.msk [vmem:[%s3] sm:$0xf] %vm450, %v408
  %452 = vst.msk [vmem:[%s3 + $0x4] sm:$0xf] %vm450, %v409
  %453 = vst.msk [vmem:[%s3 + $0x8] sm:$0xf] %vm450, %v410
  %454 = vst.msk [vmem:[%s3 + $0xc] sm:$0xf] %vm450, %v411
  %455 = vst.msk [vmem:[%s3 + $0x10] sm:$0xf] %vm450, %v412
  %456 = vst.msk [vmem:[%s3 + $0x14] sm:$0xf] %vm450, %v413
  %457 = vst.msk [vmem:[%s3 + $0x18] sm:$0xf] %vm450, %v414
  %458 = vst.msk [vmem:[%s3 + $0x1c] sm:$0xf] %vm450, %v415
  %459 = vst.msk [vmem:[%s3 + $0x20] sm:$0xf] %vm450, %v416
  %460 = vst.msk [vmem:[%s3 + $0x24] sm:$0xf] %vm450, %v417
  %461 = vst.msk [vmem:[%s3 + $0x28] sm:$0xf] %vm450, %v418
  %462 = vst.msk [vmem:[%s3 + $0x2c] sm:$0xf] %vm450, %v419
  %463 = vst.msk [vmem:[%s3 + $0x30] sm:$0xf] %vm450, %v420
  %464 = vst.msk [vmem:[%s3 + $0x34] sm:$0xf] %vm450, %v421
  %465 = vst.msk [vmem:[%s3 + $0x38] sm:$0xf] %vm450, %v422
  %466 = vst.msk [vmem:[%s3 + $0x3c] sm:$0xf] %vm450, %v423
  %467 = vst.msk [vmem:[%s3 + $0x40] sm:$0xf] %vm450, %v424
  %468 = vst.msk [vmem:[%s3 + $0x44] sm:$0xf] %vm450, %v425
  %469 = vst.msk [vmem:[%s3 + $0x48] sm:$0xf] %vm450, %v426
  %470 = vst.msk [vmem:[%s3 + $0x4c] sm:$0xf] %vm450, %v427
  %471 = vst.msk [vmem:[%s3 + $0x50] sm:$0xf] %vm450, %v428
  // Predicated region
  $region14: #{evaluate.4} parent=0 // pred_check
    _
  $region15: #{evaluate.4} parent=0 // pred_check_branch
    %473 = sbr.rel (0) target = $region17
  $region16: #{evaluate.4} parent=0 // pred_region
    _
  $region17: #{evaluate.4} parent=0 // pred_fallthru
    _
  // Predicated region
  $region18: #{evaluate.4} parent=0 // pred_check
    _
  $region19: #{evaluate.4} parent=0 // pred_check_branch
    %475 = sbr.rel (0) target = $region21
  $region20: #{evaluate.4} parent=0 // pred_region
    _
  $region21: #{evaluate.4} parent=0 // pred_fallthru
    _

// kernel: evaluate.5
$region0: #{evaluate.5}
  #allocation0 [shape = 'u32[]', space=smem, size = 0x4, offset = 0x4, fixed_abs, tag = 'smem constant byte address 0x4 - core index']
  #allocation1 [shape = 'u32[144,128]{1,0:T(1,128)}', space=vmem, size = 0x12000, scoped, tag = 'internal scratch']
  %s0 = inlined_call_operand.vmem [shape: bf16[8,1296], index: 0, kind: input, shape index: {}]
  %s1 = inlined_call_operand.vmem [shape: f32[8,2], index: 1, kind: input, shape index: {}]
  %s2 = inlined_call_operand.vmem [shape: f32[1,2], index: 2, kind: input, shape index: {}]
  %s3 = inlined_call_operand.vmem [shape: bf16[1296,512], index: 3, kind: input, shape index: {}]
  %s4 = inlined_call_operand.vmem [shape: f32[1,512], index: 4, kind: input, shape index: {}]
  %s5 = inlined_call_operand.vmem [shape: bf16[512,128], index: 5, kind: input, shape index: {}]
  %s6 = inlined_call_operand.vmem [shape: f32[1,128], index: 6, kind: input, shape index: {}]
  %s7 = inlined_call_operand.vmem [shape: bf16[128,128], index: 7, kind: input, shape index: {}]
  %s8 = inlined_call_operand.vmem [shape: f32[1,128], index: 8, kind: input, shape index: {}]
  %s9 = inlined_call_operand.vmem [shape: f32[8,128], index: 9, kind: output, shape index: {}]
  %s10 = sld [smem:[#allocation0]]
  $region46: #{evaluate.5} parent=0
    _
  %s12 = ssub.s32 1, %s10
  %s13 = scalar_select 0, %s12, %s10
  // Predicated region
  $region2: #{evaluate.5} parent=0 // pred_check
    _
  $region3: #{evaluate.5} parent=0 // pred_check_branch
    %15 = sbr.rel (0) target = $region5
  $region4: #{evaluate.5} parent=0 // pred_region
    _
  $region5: #{evaluate.5} parent=0 // pred_fallthru
    _
  // Predicated region
  $region6: #{evaluate.5} parent=0 // pred_check
    _
  $region7: #{evaluate.5} parent=0 // pred_check_branch
    %17 = sbr.rel (0) target = $region9
  $region8: #{evaluate.5} parent=0 // pred_region
    _
  $region9: #{evaluate.5} parent=0 // pred_fallthru
    _
  // Predicated region
  $region10: #{evaluate.5} parent=0 // pred_check
    _
  $region11: #{evaluate.5} parent=0 // pred_check_branch
    %19 = sbr.rel (0) target = $region13
  $region12: #{evaluate.5} parent=0 // pred_region
    _
  $region13: #{evaluate.5} parent=0 // pred_fallthru
    _
  // Predicated region
  $region14: #{evaluate.5} parent=0 // pred_check
    _
  $region15: #{evaluate.5} parent=0 // pred_check_branch
    %21 = sbr.rel (0) target = $region17
  $region16: #{evaluate.5} parent=0 // pred_region
    _
  $region17: #{evaluate.5} parent=0 // pred_fallthru
    _
  // Predicated region
  $region18: #{evaluate.5} parent=0 // pred_check
    _
  $region19: #{evaluate.5} parent=0 // pred_check_branch
    %23 = sbr.rel (0) target = $region21
  $region20: #{evaluate.5} parent=0 // pred_region
    _
  $region21: #{evaluate.5} parent=0 // pred_fallthru
    _
  // Predicated region
  $region22: #{evaluate.5} parent=0 // pred_check
    _
  $region23: #{evaluate.5} parent=0 // pred_check_branch
    %25 = sbr.rel (0) target = $region25
  $region24: #{evaluate.5} parent=0 // pred_region
    _
  $region25: #{evaluate.5} parent=0 // pred_fallthru
    _
  // Predicated region
  $region26: #{evaluate.5} parent=0 // pred_check
    _
  $region27: #{evaluate.5} parent=0 // pred_check_branch
    %27 = sbr.rel (0) target = $region29
  $region28: #{evaluate.5} parent=0 // pred_region
    _
  $region29: #{evaluate.5} parent=0 // pred_fallthru
    _
  // Predicated region
  $region30: #{evaluate.5} parent=0 // pred_check
    _
  $region31: #{evaluate.5} parent=0 // pred_check_branch
    %29 = sbr.rel (0) target = $region33
  $region32: #{evaluate.5} parent=0 // pred_region
    _
  $region33: #{evaluate.5} parent=0 // pred_fallthru
    _
  // Predicated region
  $region34: #{evaluate.5} parent=0 // pred_check
    _
  $region35: #{evaluate.5} parent=0 // pred_check_branch
    %31 = sbr.rel (0) target = $region37
  $region36: #{evaluate.5} parent=0 // pred_region
    _
  $region37: #{evaluate.5} parent=0 // pred_fallthru
    _
  %v33 = vld [vmem:[%s0] sm:$0xff]
  %v34 = vld [vmem:[%s0 + $0x8] sm:$0xff]
  %v35 = vld [vmem:[%s0 + $0x10] sm:$0xff]
  %v36 = vld [vmem:[%s0 + $0x18] sm:$0xff]
  %v37 = vld [vmem:[%s0 + $0x20] sm:$0xff]
  %v38 = vld [vmem:[%s0 + $0x28] sm:$0xf]
  %v39 = vld [vmem:[%s3] sm:$0xff]
  %v40 = vld [vmem:[%s3 + $0x8] sm:$0xff]
  %v41 = vld [vmem:[%s3 + $0x10] sm:$0xff]
  %v42 = vld [vmem:[%s3 + $0x18] sm:$0xff]
  %v43 = vld [vmem:[%s3 + $0x20] sm:$0xff]
  %v44 = vld [vmem:[%s3 + $0x28] sm:$0xff]
  %v45 = vld [vmem:[%s3 + $0x30] sm:$0xff]
  %v46 = vld [vmem:[%s3 + $0x38] sm:$0xff]
  %v47 = vld [vmem:[%s3 + $0x40] sm:$0xff]
  %v48 = vld [vmem:[%s3 + $0x48] sm:$0xff]
  %v49 = vld [vmem:[%s3 + $0x50] sm:$0xff]
  %v50 = vld [vmem:[%s3 + $0x58] sm:$0xff]
  %v51 = vld [vmem:[%s3 + $0x60] sm:$0xff]
  %v52 = vld [vmem:[%s3 + $0x68] sm:$0xff]
  %v53 = vld [vmem:[%s3 + $0x70] sm:$0xff]
  %v54 = vld [vmem:[%s3 + $0x78] sm:$0xff]
  %v55 = vld [vmem:[%s3 + $0x80] sm:$0xff]
  %v56 = vld [vmem:[%s3 + $0x88] sm:$0xff]
  %v57 = vld [vmem:[%s3 + $0x90] sm:$0xff]
  %v58 = vld [vmem:[%s3 + $0x98] sm:$0xff]
  %v59 = vld [vmem:[%s3 + $0xa0] sm:$0xff]
  %v60 = vld [vmem:[%s3 + $0xa8] sm:$0xff]
  %v61 = vld [vmem:[%s3 + $0xb0] sm:$0xff]
  %v62 = vld [vmem:[%s3 + $0xb8] sm:$0xff]
  %v63 = vld [vmem:[%s3 + $0xc0] sm:$0xff]
  %v64 = vld [vmem:[%s3 + $0xc8] sm:$0xff]
  %v65 = vld [vmem:[%s3 + $0xd0] sm:$0xff]
  %v66 = vld [vmem:[%s3 + $0xd8] sm:$0xff]
  %v67 = vld [vmem:[%s3 + $0xe0] sm:$0xff]
  %v68 = vld [vmem:[%s3 + $0xe8] sm:$0xff]
  %v69 = vld [vmem:[%s3 + $0xf0] sm:$0xff]
  %v70 = vld [vmem:[%s3 + $0xf8] sm:$0xff]
  %v71 = vld [vmem:[%s3 + $0x100] sm:$0xff]
  %v72 = vld [vmem:[%s3 + $0x108] sm:$0xff]
  %v73 = vld [vmem:[%s3 + $0x110] sm:$0xff]
  %v74 = vld [vmem:[%s3 + $0x118] sm:$0xff]
  %v75 = vld [vmem:[%s3 + $0x120] sm:$0xff]
  %v76 = vld [vmem:[%s3 + $0x128] sm:$0xff]
  %v77 = vld [vmem:[%s3 + $0x130] sm:$0xff]
  %v78 = vld [vmem:[%s3 + $0x138] sm:$0xff]
  %v79 = vld [vmem:[%s3 + $0x140] sm:$0xff]
  %v80 = vld [vmem:[%s3 + $0x148] sm:$0xff]
  %v81 = vld [vmem:[%s3 + $0x150] sm:$0xff]
  %v82 = vld [vmem:[%s3 + $0x158] sm:$0xff]
  %v83 = vld [vmem:[%s3 + $0x160] sm:$0xff]
  %v84 = vld [vmem:[%s3 + $0x168] sm:$0xff]
  %v85 = vld [vmem:[%s3 + $0x170] sm:$0xff]
  %v86 = vld [vmem:[%s3 + $0x178] sm:$0xff]
  %v87 = vld [vmem:[%s3 + $0x180] sm:$0xff]
  %v88 = vld [vmem:[%s3 + $0x188] sm:$0xff]
  %v89 = vld [vmem:[%s3 + $0x190] sm:$0xff]
  %v90 = vld [vmem:[%s3 + $0x198] sm:$0xff]
  %v91 = vld [vmem:[%s3 + $0x1a0] sm:$0xff]
  %v92 = vld [vmem:[%s3 + $0x1a8] sm:$0xff]
  %v93 = vld [vmem:[%s3 + $0x1b0] sm:$0xff]
  %v94 = vld [vmem:[%s3 + $0x1b8] sm:$0xff]
  %v95 = vld [vmem:[%s3 + $0x1c0] sm:$0xff]
  %v96 = vld [vmem:[%s3 + $0x1c8] sm:$0xff]
  %v97 = vld [vmem:[%s3 + $0x1d0] sm:$0xff]
  %v98 = vld [vmem:[%s3 + $0x1d8] sm:$0xff]
  %v99 = vld [vmem:[%s3 + $0x1e0] sm:$0xff]
  %v100 = vld [vmem:[%s3 + $0x1e8] sm:$0xff]
  %v101 = vld [vmem:[%s3 + $0x1f0] sm:$0xff]
  %v102 = vld [vmem:[%s3 + $0x1f8] sm:$0xff]
  %v103 = vld [vmem:[%s3 + $0x200] sm:$0xff]
  %v104 = vld [vmem:[%s3 + $0x208] sm:$0xff]
  %v105 = vld [vmem:[%s3 + $0x210] sm:$0xff]
  %v106 = vld [vmem:[%s3 + $0x218] sm:$0xff]
  %v107 = vld [vmem:[%s3 + $0x220] sm:$0xff]
  %v108 = vld [vmem:[%s3 + $0x228] sm:$0xff]
  %v109 = vld [vmem:[%s3 + $0x230] sm:$0xff]
  %v110 = vld [vmem:[%s3 + $0x238] sm:$0xff]
  %v111 = vld [vmem:[%s3 + $0x240] sm:$0xff]
  %v112 = vld [vmem:[%s3 + $0x248] sm:$0xff]
  %v113 = vld [vmem:[%s3 + $0x250] sm:$0xff]
  %v114 = vld [vmem:[%s3 + $0x258] sm:$0xff]
  %v115 = vld [vmem:[%s3 + $0x260] sm:$0xff]
  %v116 = vld [vmem:[%s3 + $0x268] sm:$0xff]
  %v117 = vld [vmem:[%s3 + $0x270] sm:$0xff]
  %v118 = vld [vmem:[%s3 + $0x278] sm:$0xff]
  %v119 = vld [vmem:[%s3 + $0x280] sm:$0xff]
  %v120 = vld [vmem:[%s3 + $0x288] sm:$0xff]
  %v121 = vld [vmem:[%s3 + $0x290] sm:$0xff]
  %v122 = vld [vmem:[%s3 + $0x298] sm:$0xff]
  %v123 = vld [vmem:[%s3 + $0x2a0] sm:$0xff]
  %v124 = vld [vmem:[%s3 + $0x2a8] sm:$0xff]
  %v125 = vld [vmem:[%s3 + $0x2b0] sm:$0xff]
  %v126 = vld [vmem:[%s3 + $0x2b8] sm:$0xff]
  %v127 = vld [vmem:[%s3 + $0x2c0] sm:$0xff]
  %v128 = vld [vmem:[%s3 + $0x2c8] sm:$0xff]
  %v129 = vld [vmem:[%s3 + $0x2d0] sm:$0xff]
  %v130 = vld [vmem:[%s3 + $0x2d8] sm:$0xff]
  %v131 = vld [vmem:[%s3 + $0x2e0] sm:$0xff]
  %v132 = vld [vmem:[%s3 + $0x2e8] sm:$0xff]
  %v133 = vld [vmem:[%s3 + $0x2f0] sm:$0xff]
  %v134 = vld [vmem:[%s3 + $0x2f8] sm:$0xff]
  %v135 = vld [vmem:[%s3 + $0x300] sm:$0xff]
  %v136 = vld [vmem:[%s3 + $0x308] sm:$0xff]
  %v137 = vld [vmem:[%s3 + $0x310] sm:$0xff]
  %v138 = vld [vmem:[%s3 + $0x318] sm:$0xff]
  %v139 = vld [vmem:[%s3 + $0x320] sm:$0xff]
  %v140 = vld [vmem:[%s3 + $0x328] sm:$0xff]
  %v141 = vld [vmem:[%s3 + $0x330] sm:$0xff]
  %v142 = vld [vmem:[%s3 + $0x338] sm:$0xff]
  %v143 = vld [vmem:[%s3 + $0x340] sm:$0xff]
  %v144 = vld [vmem:[%s3 + $0x348] sm:$0xff]
  %v145 = vld [vmem:[%s3 + $0x350] sm:$0xff]
  %v146 = vld [vmem:[%s3 + $0x358] sm:$0xff]
  %v147 = vld [vmem:[%s3 + $0x360] sm:$0xff]
  %v148 = vld [vmem:[%s3 + $0x368] sm:$0xff]
  %v149 = vld [vmem:[%s3 + $0x370] sm:$0xff]
  %v150 = vld [vmem:[%s3 + $0x378] sm:$0xff]
  %v151 = vld [vmem:[%s3 + $0x380] sm:$0xff]
  %v152 = vld [vmem:[%s3 + $0x388] sm:$0xff]
  %v153 = vld [vmem:[%s3 + $0x390] sm:$0xff]
  %v154 = vld [vmem:[%s3 + $0x398] sm:$0xff]
  %v155 = vld [vmem:[%s3 + $0x3a0] sm:$0xff]
  %v156 = vld [vmem:[%s3 + $0x3a8] sm:$0xff]
  %v157 = vld [vmem:[%s3 + $0x3b0] sm:$0xff]
  %v158 = vld [vmem:[%s3 + $0x3b8] sm:$0xff]
  %v159 = vld [vmem:[%s3 + $0x3c0] sm:$0xff]
  %v160 = vld [vmem:[%s3 + $0x3c8] sm:$0xff]
  %v161 = vld [vmem:[%s3 + $0x3d0] sm:$0xff]
  %v162 = vld [vmem:[%s3 + $0x3d8] sm:$0xff]
  %v163 = vld [vmem:[%s3 + $0x3e0] sm:$0xff]
  %v164 = vld [vmem:[%s3 + $0x3e8] sm:$0xff]
  %v165 = vld [vmem:[%s3 + $0x3f0] sm:$0xff]
  %v166 = vld [vmem:[%s3 + $0x3f8] sm:$0xff]
  %v167 = vld [vmem:[%s3 + $0x400] sm:$0xff]
  %v168 = vld [vmem:[%s3 + $0x408] sm:$0xff]
  %v169 = vld [vmem:[%s3 + $0x410] sm:$0xff]
  %v170 = vld [vmem:[%s3 + $0x418] sm:$0xff]
  %v171 = vld [vmem:[%s3 + $0x420] sm:$0xff]
  %v172 = vld [vmem:[%s3 + $0x428] sm:$0xff]
  %v173 = vld [vmem:[%s3 + $0x430] sm:$0xff]
  %v174 = vld [vmem:[%s3 + $0x438] sm:$0xff]
  %v175 = vld [vmem:[%s3 + $0x440] sm:$0xff]
  %v176 = vld [vmem:[%s3 + $0x448] sm:$0xff]
  %v177 = vld [vmem:[%s3 + $0x450] sm:$0xff]
  %v178 = vld [vmem:[%s3 + $0x458] sm:$0xff]
  %v179 = vld [vmem:[%s3 + $0x460] sm:$0xff]
  %v180 = vld [vmem:[%s3 + $0x468] sm:$0xff]
  %v181 = vld [vmem:[%s3 + $0x470] sm:$0xff]
  %v182 = vld [vmem:[%s3 + $0x478] sm:$0xff]
  %v183 = vld [vmem:[%s3 + $0x480] sm:$0xff]
  %v184 = vld [vmem:[%s3 + $0x488] sm:$0xff]
  %v185 = vld [vmem:[%s3 + $0x490] sm:$0xff]
  %v186 = vld [vmem:[%s3 + $0x498] sm:$0xff]
  %v187 = vld [vmem:[%s3 + $0x4a0] sm:$0xff]
  %v188 = vld [vmem:[%s3 + $0x4a8] sm:$0xff]
  %v189 = vld [vmem:[%s3 + $0x4b0] sm:$0xff]
  %v190 = vld [vmem:[%s3 + $0x4b8] sm:$0xff]
  %v191 = vld [vmem:[%s3 + $0x4c0] sm:$0xff]
  %v192 = vld [vmem:[%s3 + $0x4c8] sm:$0xff]
  %v193 = vld [vmem:[%s3 + $0x4d0] sm:$0xff]
  %v194 = vld [vmem:[%s3 + $0x4d8] sm:$0xff]
  %v195 = vld [vmem:[%s3 + $0x4e0] sm:$0xff]
  %v196 = vld [vmem:[%s3 + $0x4e8] sm:$0xff]
  %v197 = vld [vmem:[%s3 + $0x4f0] sm:$0xff]
  %v198 = vld [vmem:[%s3 + $0x4f8] sm:$0xff]
  %v199 = vld [vmem:[%s3 + $0x500] sm:$0xff]
  %v200 = vld [vmem:[%s3 + $0x508] sm:$0xff]
  %v201 = vld [vmem:[%s3 + $0x510] sm:$0xff]
  %v202 = vld [vmem:[%s3 + $0x518] sm:$0xff]
  %v203 = vld [vmem:[%s3 + $0x520] sm:$0xff]
  %v204 = vld [vmem:[%s3 + $0x528] sm:$0xff]
  %v205 = vld [vmem:[%s3 + $0x530] sm:$0xff]
  %v206 = vld [vmem:[%s3 + $0x538] sm:$0xff]
  %v207 = vld [vmem:[%s3 + $0x540] sm:$0xff]
  %v208 = vld [vmem:[%s3 + $0x548] sm:$0xff]
  %v209 = vld [vmem:[%s3 + $0x550] sm:$0xff]
  %v210 = vld [vmem:[%s3 + $0x558] sm:$0xff]
  %v211 = vld [vmem:[%s3 + $0x560] sm:$0xff]
  %v212 = vld [vmem:[%s3 + $0x568] sm:$0xff]
  %v213 = vld [vmem:[%s3 + $0x570] sm:$0xff]
  %v214 = vld [vmem:[%s3 + $0x578] sm:$0xff]
  %v215 = vld [vmem:[%s3 + $0x580] sm:$0xff]
  %v216 = vld [vmem:[%s3 + $0x588] sm:$0xff]
  %v217 = vld [vmem:[%s3 + $0x590] sm:$0xff]
  %v218 = vld [vmem:[%s3 + $0x598] sm:$0xff]
  %v219 = vld [vmem:[%s3 + $0x5a0] sm:$0xff]
  %v220 = vld [vmem:[%s3 + $0x5a8] sm:$0xff]
  %v221 = vld [vmem:[%s3 + $0x5b0] sm:$0xff]
  %v222 = vld [vmem:[%s3 + $0x5b8] sm:$0xff]
  %v223 = vld [vmem:[%s3 + $0x5c0] sm:$0xff]
  %v224 = vld [vmem:[%s3 + $0x5c8] sm:$0xff]
  %v225 = vld [vmem:[%s3 + $0x5d0] sm:$0xff]
  %v226 = vld [vmem:[%s3 + $0x5d8] sm:$0xff]
  %v227 = vld [vmem:[%s3 + $0x5e0] sm:$0xff]
  %v228 = vld [vmem:[%s3 + $0x5e8] sm:$0xff]
  %v229 = vld [vmem:[%s3 + $0x5f0] sm:$0xff]
  %v230 = vld [vmem:[%s3 + $0x5f8] sm:$0xff]
  %v231 = vld [vmem:[%s3 + $0x600] sm:$0xff]
  %v232 = vld [vmem:[%s3 + $0x608] sm:$0xff]
  %v233 = vld [vmem:[%s3 + $0x610] sm:$0xff]
  %v234 = vld [vmem:[%s3 + $0x618] sm:$0xff]
  %v235 = vld [vmem:[%s3 + $0x620] sm:$0xff]
  %v236 = vld [vmem:[%s3 + $0x628] sm:$0xff]
  %v237 = vld [vmem:[%s3 + $0x630] sm:$0xff]
  %v238 = vld [vmem:[%s3 + $0x638] sm:$0xff]
  %v239 = vld [vmem:[%s3 + $0x640] sm:$0xff]
  %v240 = vld [vmem:[%s3 + $0x648] sm:$0xff]
  %v241 = vld [vmem:[%s3 + $0x650] sm:$0xff]
  %v242 = vld [vmem:[%s3 + $0x658] sm:$0xff]
  %v243 = vld [vmem:[%s3 + $0x660] sm:$0xff]
  %v244 = vld [vmem:[%s3 + $0x668] sm:$0xff]
  %v245 = vld [vmem:[%s3 + $0x670] sm:$0xff]
  %v246 = vld [vmem:[%s3 + $0x678] sm:$0xff]
  %v247 = vld [vmem:[%s3 + $0x680] sm:$0xff]
  %v248 = vld [vmem:[%s3 + $0x688] sm:$0xff]
  %v249 = vld [vmem:[%s3 + $0x690] sm:$0xff]
  %v250 = vld [vmem:[%s3 + $0x698] sm:$0xff]
  %v251 = vld [vmem:[%s3 + $0x6a0] sm:$0xff]
  %v252 = vld [vmem:[%s3 + $0x6a8] sm:$0xff]
  %v253 = vld [vmem:[%s3 + $0x6b0] sm:$0xff]
  %v254 = vld [vmem:[%s3 + $0x6b8] sm:$0xff]
  %v255 = vld [vmem:[%s3 + $0x6c0] sm:$0xff]
  %v256 = vld [vmem:[%s3 + $0x6c8] sm:$0xff]
  %v257 = vld [vmem:[%s3 + $0x6d0] sm:$0xff]
  %v258 = vld [vmem:[%s3 + $0x6d8] sm:$0xff]
  %v259 = vld [vmem:[%s3 + $0x6e0] sm:$0xff]
  %v260 = vld [vmem:[%s3 + $0x6e8] sm:$0xff]
  %v261 = vld [vmem:[%s3 + $0x6f0] sm:$0xff]
  %v262 = vld [vmem:[%s3 + $0x6f8] sm:$0xff]
  %v263 = vld [vmem:[%s3 + $0x700] sm:$0xff]
  %v264 = vld [vmem:[%s3 + $0x708] sm:$0xff]
  %v265 = vld [vmem:[%s3 + $0x710] sm:$0xff]
  %v266 = vld [vmem:[%s3 + $0x718] sm:$0xff]
  %v267 = vld [vmem:[%s3 + $0x720] sm:$0xff]
  %v268 = vld [vmem:[%s3 + $0x728] sm:$0xff]
  %v269 = vld [vmem:[%s3 + $0x730] sm:$0xff]
  %v270 = vld [vmem:[%s3 + $0x738] sm:$0xff]
  %v271 = vld [vmem:[%s3 + $0x740] sm:$0xff]
  %v272 = vld [vmem:[%s3 + $0x748] sm:$0xff]
  %v273 = vld [vmem:[%s3 + $0x750] sm:$0xff]
  %v274 = vld [vmem:[%s3 + $0x758] sm:$0xff]
  %v275 = vld [vmem:[%s3 + $0x760] sm:$0xff]
  %v276 = vld [vmem:[%s3 + $0x768] sm:$0xff]
  %v277 = vld [vmem:[%s3 + $0x770] sm:$0xff]
  %v278 = vld [vmem:[%s3 + $0x778] sm:$0xff]
  %v279 = vld [vmem:[%s3 + $0x780] sm:$0xff]
  %v280 = vld [vmem:[%s3 + $0x788] sm:$0xff]
  %v281 = vld [vmem:[%s3 + $0x790] sm:$0xff]
  %v282 = vld [vmem:[%s3 + $0x798] sm:$0xff]
  %v283 = vld [vmem:[%s3 + $0x7a0] sm:$0xff]
  %v284 = vld [vmem:[%s3 + $0x7a8] sm:$0xff]
  %v285 = vld [vmem:[%s3 + $0x7b0] sm:$0xff]
  %v286 = vld [vmem:[%s3 + $0x7b8] sm:$0xff]
  %v287 = vld [vmem:[%s3 + $0x7c0] sm:$0xff]
  %v288 = vld [vmem:[%s3 + $0x7c8] sm:$0xff]
  %v289 = vld [vmem:[%s3 + $0x7d0] sm:$0xff]
  %v290 = vld [vmem:[%s3 + $0x7d8] sm:$0xff]
  %v291 = vld [vmem:[%s3 + $0x7e0] sm:$0xff]
  %v292 = vld [vmem:[%s3 + $0x7e8] sm:$0xff]
  %v293 = vld [vmem:[%s3 + $0x7f0] sm:$0xff]
  %v294 = vld [vmem:[%s3 + $0x7f8] sm:$0xff]
  %v295 = vld [vmem:[%s3 + $0x800] sm:$0xff]
  %v296 = vld [vmem:[%s3 + $0x808] sm:$0xff]
  %v297 = vld [vmem:[%s3 + $0x810] sm:$0xff]
  %v298 = vld [vmem:[%s3 + $0x818] sm:$0xff]
  %v299 = vld [vmem:[%s3 + $0x820] sm:$0xff]
  %v300 = vld [vmem:[%s3 + $0x828] sm:$0xff]
  %v301 = vld [vmem:[%s3 + $0x830] sm:$0xff]
  %v302 = vld [vmem:[%s3 + $0x838] sm:$0xff]
  %v303 = vld [vmem:[%s3 + $0x840] sm:$0xff]
  %v304 = vld [vmem:[%s3 + $0x848] sm:$0xff]
  %v305 = vld [vmem:[%s3 + $0x850] sm:$0xff]
  %v306 = vld [vmem:[%s3 + $0x858] sm:$0xff]
  %v307 = vld [vmem:[%s3 + $0x860] sm:$0xff]
  %v308 = vld [vmem:[%s3 + $0x868] sm:$0xff]
  %v309 = vld [vmem:[%s3 + $0x870] sm:$0xff]
  %v310 = vld [vmem:[%s3 + $0x878] sm:$0xff]
  %v311 = vld [vmem:[%s3 + $0x880] sm:$0xff]
  %v312 = vld [vmem:[%s3 + $0x888] sm:$0xff]
  %v313 = vld [vmem:[%s3 + $0x890] sm:$0xff]
  %v314 = vld [vmem:[%s3 + $0x898] sm:$0xff]
  %v315 = vld [vmem:[%s3 + $0x8a0] sm:$0xff]
  %v316 = vld [vmem:[%s3 + $0x8a8] sm:$0xff]
  %v317 = vld [vmem:[%s3 + $0x8b0] sm:$0xff]
  %v318 = vld [vmem:[%s3 + $0x8b8] sm:$0xff]
  %v319 = vld [vmem:[%s3 + $0x8c0] sm:$0xff]
  %v320 = vld [vmem:[%s3 + $0x8c8] sm:$0xff]
  %v321 = vld [vmem:[%s3 + $0x8d0] sm:$0xff]
  %v322 = vld [vmem:[%s3 + $0x8d8] sm:$0xff]
  %v323 = vld [vmem:[%s3 + $0x8e0] sm:$0xff]
  %v324 = vld [vmem:[%s3 + $0x8e8] sm:$0xff]
  %v325 = vld [vmem:[%s3 + $0x8f0] sm:$0xff]
  %v326 = vld [vmem:[%s3 + $0x8f8] sm:$0xff]
  %v327 = vld [vmem:[%s3 + $0x900] sm:$0xff]
  %v328 = vld [vmem:[%s3 + $0x908] sm:$0xff]
  %v329 = vld [vmem:[%s3 + $0x910] sm:$0xff]
  %v330 = vld [vmem:[%s3 + $0x918] sm:$0xff]
  %v331 = vld [vmem:[%s3 + $0x920] sm:$0xff]
  %v332 = vld [vmem:[%s3 + $0x928] sm:$0xff]
  %v333 = vld [vmem:[%s3 + $0x930] sm:$0xff]
  %v334 = vld [vmem:[%s3 + $0x938] sm:$0xff]
  %v335 = vld [vmem:[%s3 + $0x940] sm:$0xff]
  %v336 = vld [vmem:[%s3 + $0x948] sm:$0xff]
  %v337 = vld [vmem:[%s3 + $0x950] sm:$0xff]
  %v338 = vld [vmem:[%s3 + $0x958] sm:$0xff]
  %v339 = vld [vmem:[%s3 + $0x960] sm:$0xff]
  %v340 = vld [vmem:[%s3 + $0x968] sm:$0xff]
  %v341 = vld [vmem:[%s3 + $0x970] sm:$0xff]
  %v342 = vld [vmem:[%s3 + $0x978] sm:$0xff]
  %v343 = vld [vmem:[%s3 + $0x980] sm:$0xff]
  %v344 = vld [vmem:[%s3 + $0x988] sm:$0xff]
  %v345 = vld [vmem:[%s3 + $0x990] sm:$0xff]
  %v346 = vld [vmem:[%s3 + $0x998] sm:$0xff]
  %v347 = vld [vmem:[%s3 + $0x9a0] sm:$0xff]
  %v348 = vld [vmem:[%s3 + $0x9a8] sm:$0xff]
  %v349 = vld [vmem:[%s3 + $0x9b0] sm:$0xff]
  %v350 = vld [vmem:[%s3 + $0x9b8] sm:$0xff]
  %v351 = vld [vmem:[%s3 + $0x9c0] sm:$0xff]
  %v352 = vld [vmem:[%s3 + $0x9c8] sm:$0xff]
  %v353 = vld [vmem:[%s3 + $0x9d0] sm:$0xff]
  %v354 = vld [vmem:[%s3 + $0x9d8] sm:$0xff]
  %v355 = vld [vmem:[%s3 + $0x9e0] sm:$0xff]
  %v356 = vld [vmem:[%s3 + $0x9e8] sm:$0xff]
  %v357 = vld [vmem:[%s3 + $0x9f0] sm:$0xff]
  %v358 = vld [vmem:[%s3 + $0x9f8] sm:$0xff]
  %v359 = vld [vmem:[%s3 + $0xa00] sm:$0xff]
  %v360 = vld [vmem:[%s3 + $0xa08] sm:$0xff]
  %v361 = vld [vmem:[%s3 + $0xa10] sm:$0xff]
  %v362 = vld [vmem:[%s3 + $0xa18] sm:$0xff]
  %v363 = vld [vmem:[%s4] sm:$0xf]
  %v365 = vlaneseq
  %v366 = vshrl.u32 %v365, 7
  %v367 = vsub.s32 0, %v366
  %v368 = vrot.slane %v363, %v367
  %v369 = vlaneseq
  %v370 = vshrl.u32 %v369, 7
  %v371 = vsub.s32 1, %v370
  %v372 = vrot.slane %v363, %v371
  %v373 = vlaneseq
  %v374 = vshrl.u32 %v373, 7
  %v375 = vsub.s32 2, %v374
  %v376 = vrot.slane %v363, %v375
  %v377 = vlaneseq
  %v378 = vshrl.u32 %v377, 7
  %v379 = vsub.s32 3, %v378
  %v380 = vrot.slane %v363, %v379
  %v391 = vunpack.c.l.b16 %v33
  %v392 = vunpack.c.h.b16 %v33
  %v393 = vunpack.c.l.b16 %v34
  %v394 = vunpack.c.h.b16 %v34
  %v395 = vunpack.c.l.b16 %v35
  %v396 = vunpack.c.h.b16 %v35
  %v397 = vunpack.c.l.b16 %v36
  %v398 = vunpack.c.h.b16 %v36
  %v399 = vunpack.c.l.b16 %v37
  %v400 = vunpack.c.h.b16 %v37
  %v401 = vunpack.c.l.b16 %v38
  %v402 = vpack.c.b16 %v391, %v391
  %v403 = vpack.c.b16 %v392, %v392
  %v404 = vpack.c.b16 %v393, %v393
  %v405 = vpack.c.b16 %v394, %v394
  %v406 = vpack.c.b16 %v395, %v395
  %v407 = vpack.c.b16 %v396, %v396
  %v408 = vpack.c.b16 %v397, %v397
  %v409 = vpack.c.b16 %v398, %v398
  %v410 = vpack.c.b16 %v399, %v399
  %v411 = vpack.c.b16 %v400, %v400
  %v412 = vpack.c.b16 %v401, %v401
  %v747 = vunpack.c.l.b16 %v39
  %v748 = vunpack.c.h.b16 %v39
  %v749 = vunpack.c.l.b16 %v40
  %v750 = vunpack.c.h.b16 %v40
  %v751 = vunpack.c.l.b16 %v41
  %v752 = vunpack.c.h.b16 %v41
  %v753 = vunpack.c.l.b16 %v42
  %v754 = vunpack.c.h.b16 %v42
  %v755 = vunpack.c.l.b16 %v43
  %v756 = vunpack.c.h.b16 %v43
  %v757 = vunpack.c.l.b16 %v44
  %v758 = vunpack.c.h.b16 %v44
  %v759 = vunpack.c.l.b16 %v45
  %v760 = vunpack.c.h.b16 %v45
  %v761 = vunpack.c.l.b16 %v46
  %v762 = vunpack.c.h.b16 %v46
  %v763 = vunpack.c.l.b16 %v47
  %v764 = vunpack.c.h.b16 %v47
  %v765 = vunpack.c.l.b16 %v48
  %v766 = vunpack.c.h.b16 %v48
  %v767 = vunpack.c.l.b16 %v49
  %v768 = vunpack.c.h.b16 %v49
  %v769 = vunpack.c.l.b16 %v50
  %v770 = vunpack.c.h.b16 %v50
  %v771 = vunpack.c.l.b16 %v51
  %v772 = vunpack.c.h.b16 %v51
  %v773 = vunpack.c.l.b16 %v52
  %v774 = vunpack.c.h.b16 %v52
  %v775 = vunpack.c.l.b16 %v53
  %v776 = vunpack.c.h.b16 %v53
  %v777 = vunpack.c.l.b16 %v54
  %v778 = vunpack.c.h.b16 %v54
  %v779 = vunpack.c.l.b16 %v55
  %v780 = vunpack.c.h.b16 %v55
  %v781 = vunpack.c.l.b16 %v56
  %v782 = vunpack.c.h.b16 %v56
  %v783 = vunpack.c.l.b16 %v57
  %v784 = vunpack.c.h.b16 %v57
  %v785 = vunpack.c.l.b16 %v58
  %v786 = vunpack.c.h.b16 %v58
  %v787 = vunpack.c.l.b16 %v59
  %v788 = vunpack.c.h.b16 %v59
  %v789 = vunpack.c.l.b16 %v60
  %v790 = vunpack.c.h.b16 %v60
  %v791 = vunpack.c.l.b16 %v61
  %v792 = vunpack.c.h.b16 %v61
  %v793 = vunpack.c.l.b16 %v62
  %v794 = vunpack.c.h.b16 %v62
  %v795 = vunpack.c.l.b16 %v63
  %v796 = vunpack.c.h.b16 %v63
  %v797 = vunpack.c.l.b16 %v64
  %v798 = vunpack.c.h.b16 %v64
  %v799 = vunpack.c.l.b16 %v65
  %v800 = vunpack.c.h.b16 %v65
  %v801 = vunpack.c.l.b16 %v66
  %v802 = vunpack.c.h.b16 %v66
  %v803 = vunpack.c.l.b16 %v67
  %v804 = vunpack.c.h.b16 %v67
  %v805 = vunpack.c.l.b16 %v68
  %v806 = vunpack.c.h.b16 %v68
  %v807 = vunpack.c.l.b16 %v69
  %v808 = vunpack.c.h.b16 %v69
  %v809 = vunpack.c.l.b16 %v70
  %v810 = vunpack.c.h.b16 %v70
  %v811 = vunpack.c.l.b16 %v71
  %v812 = vunpack.c.h.b16 %v71
  %v813 = vunpack.c.l.b16 %v72
  %v814 = vunpack.c.h.b16 %v72
  %v815 = vunpack.c.l.b16 %v73
  %v816 = vunpack.c.h.b16 %v73
  %v817 = vunpack.c.l.b16 %v74
  %v818 = vunpack.c.h.b16 %v74
  %v819 = vunpack.c.l.b16 %v75
  %v820 = vunpack.c.h.b16 %v75
  %v821 = vunpack.c.l.b16 %v76
  %v822 = vunpack.c.h.b16 %v76
  %v823 = vunpack.c.l.b16 %v77
  %v824 = vunpack.c.h.b16 %v77
  %v825 = vunpack.c.l.b16 %v78
  %v826 = vunpack.c.h.b16 %v78
  %v827 = vunpack.c.l.b16 %v79
  %v828 = vunpack.c.h.b16 %v79
  %v829 = vunpack.c.l.b16 %v80
  %v830 = vunpack.c.h.b16 %v80
  %v831 = vunpack.c.l.b16 %v81
  %v832 = vunpack.c.h.b16 %v81
  %v833 = vunpack.c.l.b16 %v82
  %v834 = vunpack.c.h.b16 %v82
  %v835 = vunpack.c.l.b16 %v83
  %v836 = vunpack.c.h.b16 %v83
  %v837 = vunpack.c.l.b16 %v84
  %v838 = vunpack.c.h.b16 %v84
  %v839 = vunpack.c.l.b16 %v85
  %v840 = vunpack.c.h.b16 %v85
  %v841 = vunpack.c.l.b16 %v86
  %v842 = vunpack.c.h.b16 %v86
  %v843 = vunpack.c.l.b16 %v87
  %v844 = vunpack.c.h.b16 %v87
  %v845 = vunpack.c.l.b16 %v88
  %v846 = vunpack.c.h.b16 %v88
  %v847 = vunpack.c.l.b16 %v89
  %v848 = vunpack.c.h.b16 %v89
  %v849 = vunpack.c.l.b16 %v90
  %v850 = vunpack.c.h.b16 %v90
  %v851 = vunpack.c.l.b16 %v91
  %v852 = vunpack.c.h.b16 %v91
  %v853 = vunpack.c.l.b16 %v92
  %v854 = vunpack.c.h.b16 %v92
  %v855 = vunpack.c.l.b16 %v93
  %v856 = vunpack.c.h.b16 %v93
  %v857 = vunpack.c.l.b16 %v94
  %v858 = vunpack.c.h.b16 %v94
  %v859 = vunpack.c.l.b16 %v95
  %v860 = vunpack.c.h.b16 %v95
  %v861 = vunpack.c.l.b16 %v96
  %v862 = vunpack.c.h.b16 %v96
  %v863 = vunpack.c.l.b16 %v97
  %v864 = vunpack.c.h.b16 %v97
  %v865 = vunpack.c.l.b16 %v98
  %v866 = vunpack.c.h.b16 %v98
  %v867 = vunpack.c.l.b16 %v99
  %v868 = vunpack.c.h.b16 %v99
  %v869 = vunpack.c.l.b16 %v100
  %v870 = vunpack.c.h.b16 %v100
  %v871 = vunpack.c.l.b16 %v101
  %v872 = vunpack.c.h.b16 %v101
  %v873 = vunpack.c.l.b16 %v102
  %v874 = vunpack.c.h.b16 %v102
  %v875 = vunpack.c.l.b16 %v103
  %v876 = vunpack.c.h.b16 %v103
  %v877 = vunpack.c.l.b16 %v104
  %v878 = vunpack.c.h.b16 %v104
  %v879 = vunpack.c.l.b16 %v105
  %v880 = vunpack.c.h.b16 %v105
  %v881 = vunpack.c.l.b16 %v106
  %v882 = vunpack.c.h.b16 %v106
  %v883 = vunpack.c.l.b16 %v107
  %v884 = vunpack.c.h.b16 %v107
  %v885 = vunpack.c.l.b16 %v108
  %v886 = vunpack.c.h.b16 %v108
  %v887 = vunpack.c.l.b16 %v109
  %v888 = vunpack.c.h.b16 %v109
  %v889 = vunpack.c.l.b16 %v110
  %v890 = vunpack.c.h.b16 %v110
  %v891 = vunpack.c.l.b16 %v111
  %v892 = vunpack.c.h.b16 %v111
  %v893 = vunpack.c.l.b16 %v112
  %v894 = vunpack.c.h.b16 %v112
  %v895 = vunpack.c.l.b16 %v113
  %v896 = vunpack.c.h.b16 %v113
  %v897 = vunpack.c.l.b16 %v114
  %v898 = vunpack.c.h.b16 %v114
  %v899 = vunpack.c.l.b16 %v115
  %v900 = vunpack.c.h.b16 %v115
  %v901 = vunpack.c.l.b16 %v116
  %v902 = vunpack.c.h.b16 %v116
  %v903 = vunpack.c.l.b16 %v117
  %v904 = vunpack.c.h.b16 %v117
  %v905 = vunpack.c.l.b16 %v118
  %v906 = vunpack.c.h.b16 %v118
  %v907 = vunpack.c.l.b16 %v119
  %v908 = vunpack.c.h.b16 %v119
  %v909 = vunpack.c.l.b16 %v120
  %v910 = vunpack.c.h.b16 %v120
  %v911 = vunpack.c.l.b16 %v121
  %v912 = vunpack.c.h.b16 %v121
  %v913 = vunpack.c.l.b16 %v122
  %v914 = vunpack.c.h.b16 %v122
  %v915 = vunpack.c.l.b16 %v123
  %v916 = vunpack.c.h.b16 %v123
  %v917 = vunpack.c.l.b16 %v124
  %v918 = vunpack.c.h.b16 %v124
  %v919 = vunpack.c.l.b16 %v125
  %v920 = vunpack.c.h.b16 %v125
  %v921 = vunpack.c.l.b16 %v126
  %v922 = vunpack.c.h.b16 %v126
  %v923 = vunpack.c.l.b16 %v127
  %v924 = vunpack.c.h.b16 %v127
  %v925 = vunpack.c.l.b16 %v128
  %v926 = vunpack.c.h.b16 %v128
  %v927 = vunpack.c.l.b16 %v129
  %v928 = vunpack.c.h.b16 %v129
  %v929 = vunpack.c.l.b16 %v130
  %v930 = vunpack.c.h.b16 %v130
  %v931 = vunpack.c.l.b16 %v131
  %v932 = vunpack.c.h.b16 %v131
  %v933 = vunpack.c.l.b16 %v132
  %v934 = vunpack.c.h.b16 %v132
  %v935 = vunpack.c.l.b16 %v133
  %v936 = vunpack.c.h.b16 %v133
  %v937 = vunpack.c.l.b16 %v134
  %v938 = vunpack.c.h.b16 %v134
  %v939 = vunpack.c.l.b16 %v135
  %v940 = vunpack.c.h.b16 %v135
  %v941 = vunpack.c.l.b16 %v136
  %v942 = vunpack.c.h.b16 %v136
  %v943 = vunpack.c.l.b16 %v137
  %v944 = vunpack.c.h.b16 %v137
  %v945 = vunpack.c.l.b16 %v138
  %v946 = vunpack.c.h.b16 %v138
  %v947 = vunpack.c.l.b16 %v139
  %v948 = vunpack.c.h.b16 %v139
  %v949 = vunpack.c.l.b16 %v140
  %v950 = vunpack.c.h.b16 %v140
  %v951 = vunpack.c.l.b16 %v141
  %v952 = vunpack.c.h.b16 %v141
  %v953 = vunpack.c.l.b16 %v142
  %v954 = vunpack.c.h.b16 %v142
  %v955 = vunpack.c.l.b16 %v143
  %v956 = vunpack.c.h.b16 %v143
  %v957 = vunpack.c.l.b16 %v144
  %v958 = vunpack.c.h.b16 %v144
  %v959 = vunpack.c.l.b16 %v145
  %v960 = vunpack.c.h.b16 %v145
  %v961 = vunpack.c.l.b16 %v146
  %v962 = vunpack.c.h.b16 %v146
  %v963 = vunpack.c.l.b16 %v147
  %v964 = vunpack.c.h.b16 %v147
  %v965 = vunpack.c.l.b16 %v148
  %v966 = vunpack.c.h.b16 %v148
  %v967 = vunpack.c.l.b16 %v149
  %v968 = vunpack.c.h.b16 %v149
  %v969 = vunpack.c.l.b16 %v150
  %v970 = vunpack.c.h.b16 %v150
  %v971 = vunpack.c.l.b16 %v151
  %v972 = vunpack.c.h.b16 %v151
  %v973 = vunpack.c.l.b16 %v152
  %v974 = vunpack.c.h.b16 %v152
  %v975 = vunpack.c.l.b16 %v153
  %v976 = vunpack.c.h.b16 %v153
  %v977 = vunpack.c.l.b16 %v154
  %v978 = vunpack.c.h.b16 %v154
  %v979 = vunpack.c.l.b16 %v155
  %v980 = vunpack.c.h.b16 %v155
  %v981 = vunpack.c.l.b16 %v156
  %v982 = vunpack.c.h.b16 %v156
  %v983 = vunpack.c.l.b16 %v157
  %v984 = vunpack.c.h.b16 %v157
  %v985 = vunpack.c.l.b16 %v158
  %v986 = vunpack.c.h.b16 %v158
  %v987 = vunpack.c.l.b16 %v159
  %v988 = vunpack.c.h.b16 %v159
  %v989 = vunpack.c.l.b16 %v160
  %v990 = vunpack.c.h.b16 %v160
  %v991 = vunpack.c.l.b16 %v161
  %v992 = vunpack.c.h.b16 %v161
  %v993 = vunpack.c.l.b16 %v162
  %v994 = vunpack.c.h.b16 %v162
  %v995 = vunpack.c.l.b16 %v163
  %v996 = vunpack.c.h.b16 %v163
  %v997 = vunpack.c.l.b16 %v164
  %v998 = vunpack.c.h.b16 %v164
  %v999 = vunpack.c.l.b16 %v165
  %v1000 = vunpack.c.h.b16 %v165
  %v1001 = vunpack.c.l.b16 %v166
  %v1002 = vunpack.c.h.b16 %v166
  %v1003 = vunpack.c.l.b16 %v167
  %v1004 = vunpack.c.h.b16 %v167
  %v1005 = vunpack.c.l.b16 %v168
  %v1006 = vunpack.c.h.b16 %v168
  %v1007 = vunpack.c.l.b16 %v169
  %v1008 = vunpack.c.h.b16 %v169
  %v1009 = vunpack.c.l.b16 %v170
  %v1010 = vunpack.c.h.b16 %v170
  %v1011 = vunpack.c.l.b16 %v171
  %v1012 = vunpack.c.h.b16 %v171
  %v1013 = vunpack.c.l.b16 %v172
  %v1014 = vunpack.c.h.b16 %v172
  %v1015 = vunpack.c.l.b16 %v173
  %v1016 = vunpack.c.h.b16 %v173
  %v1017 = vunpack.c.l.b16 %v174
  %v1018 = vunpack.c.h.b16 %v174
  %v1019 = vunpack.c.l.b16 %v175
  %v1020 = vunpack.c.h.b16 %v175
  %v1021 = vunpack.c.l.b16 %v176
  %v1022 = vunpack.c.h.b16 %v176
  %v1023 = vunpack.c.l.b16 %v177
  %v1024 = vunpack.c.h.b16 %v177
  %v1025 = vunpack.c.l.b16 %v178
  %v1026 = vunpack.c.h.b16 %v178
  %v1027 = vunpack.c.l.b16 %v179
  %v1028 = vunpack.c.h.b16 %v179
  %v1029 = vunpack.c.l.b16 %v180
  %v1030 = vunpack.c.h.b16 %v180
  %v1031 = vunpack.c.l.b16 %v181
  %v1032 = vunpack.c.h.b16 %v181
  %v1033 = vunpack.c.l.b16 %v182
  %v1034 = vunpack.c.h.b16 %v182
  %v1035 = vunpack.c.l.b16 %v183
  %v1036 = vunpack.c.h.b16 %v183
  %v1037 = vunpack.c.l.b16 %v184
  %v1038 = vunpack.c.h.b16 %v184
  %v1039 = vunpack.c.l.b16 %v185
  %v1040 = vunpack.c.h.b16 %v185
  %v1041 = vunpack.c.l.b16 %v186
  %v1042 = vunpack.c.h.b16 %v186
  %v1043 = vunpack.c.l.b16 %v187
  %v1044 = vunpack.c.h.b16 %v187
  %v1045 = vunpack.c.l.b16 %v188
  %v1046 = vunpack.c.h.b16 %v188
  %v1047 = vunpack.c.l.b16 %v189
  %v1048 = vunpack.c.h.b16 %v189
  %v1049 = vunpack.c.l.b16 %v190
  %v1050 = vunpack.c.h.b16 %v190
  %v1051 = vunpack.c.l.b16 %v191
  %v1052 = vunpack.c.h.b16 %v191
  %v1053 = vunpack.c.l.b16 %v192
  %v1054 = vunpack.c.h.b16 %v192
  %v1055 = vunpack.c.l.b16 %v193
  %v1056 = vunpack.c.h.b16 %v193
  %v1057 = vunpack.c.l.b16 %v194
  %v1058 = vunpack.c.h.b16 %v194
  %v1059 = vunpack.c.l.b16 %v195
  %v1060 = vunpack.c.h.b16 %v195
  %v1061 = vunpack.c.l.b16 %v196
  %v1062 = vunpack.c.h.b16 %v196
  %v1063 = vunpack.c.l.b16 %v197
  %v1064 = vunpack.c.h.b16 %v197
  %v1065 = vunpack.c.l.b16 %v198
  %v1066 = vunpack.c.h.b16 %v198
  %v1067 = vunpack.c.l.b16 %v199
  %v1068 = vunpack.c.h.b16 %v199
  %v1069 = vunpack.c.l.b16 %v200
  %v1070 = vunpack.c.h.b16 %v200
  %v1071 = vunpack.c.l.b16 %v201
  %v1072 = vunpack.c.h.b16 %v201
  %v1073 = vunpack.c.l.b16 %v202
  %v1074 = vunpack.c.h.b16 %v202
  %v1075 = vunpack.c.l.b16 %v203
  %v1076 = vunpack.c.h.b16 %v203
  %v1077 = vunpack.c.l.b16 %v204
  %v1078 = vunpack.c.h.b16 %v204
  %v1079 = vunpack.c.l.b16 %v205
  %v1080 = vunpack.c.h.b16 %v205
  %v1081 = vunpack.c.l.b16 %v206
  %v1082 = vunpack.c.h.b16 %v206
  %v1083 = vunpack.c.l.b16 %v207
  %v1084 = vunpack.c.h.b16 %v207
  %v1085 = vunpack.c.l.b16 %v208
  %v1086 = vunpack.c.h.b16 %v208
  %v1087 = vunpack.c.l.b16 %v209
  %v1088 = vunpack.c.h.b16 %v209
  %v1089 = vunpack.c.l.b16 %v210
  %v1090 = vunpack.c.h.b16 %v210
  %v1091 = vunpack.c.l.b16 %v211
  %v1092 = vunpack.c.h.b16 %v211
  %v1093 = vunpack.c.l.b16 %v212
  %v1094 = vunpack.c.h.b16 %v212
  %v1095 = vunpack.c.l.b16 %v213
  %v1096 = vunpack.c.h.b16 %v213
  %v1097 = vunpack.c.l.b16 %v214
  %v1098 = vunpack.c.h.b16 %v214
  %v1099 = vunpack.c.l.b16 %v215
  %v1100 = vunpack.c.h.b16 %v215
  %v1101 = vunpack.c.l.b16 %v216
  %v1102 = vunpack.c.h.b16 %v216
  %v1103 = vunpack.c.l.b16 %v217
  %v1104 = vunpack.c.h.b16 %v217
  %v1105 = vunpack.c.l.b16 %v218
  %v1106 = vunpack.c.h.b16 %v218
  %v1107 = vunpack.c.l.b16 %v219
  %v1108 = vunpack.c.h.b16 %v219
  %v1109 = vunpack.c.l.b16 %v220
  %v1110 = vunpack.c.h.b16 %v220
  %v1111 = vunpack.c.l.b16 %v221
  %v1112 = vunpack.c.h.b16 %v221
  %v1113 = vunpack.c.l.b16 %v222
  %v1114 = vunpack.c.h.b16 %v222
  %v1115 = vunpack.c.l.b16 %v223
  %v1116 = vunpack.c.h.b16 %v223
  %v1117 = vunpack.c.l.b16 %v224
  %v1118 = vunpack.c.h.b16 %v224
  %v1119 = vunpack.c.l.b16 %v225
  %v1120 = vunpack.c.h.b16 %v225
  %v1121 = vunpack.c.l.b16 %v226
  %v1122 = vunpack.c.h.b16 %v226
  %v1123 = vunpack.c.l.b16 %v227
  %v1124 = vunpack.c.h.b16 %v227
  %v1125 = vunpack.c.l.b16 %v228
  %v1126 = vunpack.c.h.b16 %v228
  %v1127 = vunpack.c.l.b16 %v229
  %v1128 = vunpack.c.h.b16 %v229
  %v1129 = vunpack.c.l.b16 %v230
  %v1130 = vunpack.c.h.b16 %v230
  %v1131 = vunpack.c.l.b16 %v231
  %v1132 = vunpack.c.h.b16 %v231
  %v1133 = vunpack.c.l.b16 %v232
  %v1134 = vunpack.c.h.b16 %v232
  %v1135 = vunpack.c.l.b16 %v233
  %v1136 = vunpack.c.h.b16 %v233
  %v1137 = vunpack.c.l.b16 %v234
  %v1138 = vunpack.c.h.b16 %v234
  %v1139 = vunpack.c.l.b16 %v235
  %v1140 = vunpack.c.h.b16 %v235
  %v1141 = vunpack.c.l.b16 %v236
  %v1142 = vunpack.c.h.b16 %v236
  %v1143 = vunpack.c.l.b16 %v237
  %v1144 = vunpack.c.h.b16 %v237
  %v1145 = vunpack.c.l.b16 %v238
  %v1146 = vunpack.c.h.b16 %v238
  %v1147 = vunpack.c.l.b16 %v239
  %v1148 = vunpack.c.h.b16 %v239
  %v1149 = vunpack.c.l.b16 %v240
  %v1150 = vunpack.c.h.b16 %v240
  %v1151 = vunpack.c.l.b16 %v241
  %v1152 = vunpack.c.h.b16 %v241
  %v1153 = vunpack.c.l.b16 %v242
  %v1154 = vunpack.c.h.b16 %v242
  %v1155 = vunpack.c.l.b16 %v243
  %v1156 = vunpack.c.h.b16 %v243
  %v1157 = vunpack.c.l.b16 %v244
  %v1158 = vunpack.c.h.b16 %v244
  %v1159 = vunpack.c.l.b16 %v245
  %v1160 = vunpack.c.h.b16 %v245
  %v1161 = vunpack.c.l.b16 %v246
  %v1162 = vunpack.c.h.b16 %v246
  %v1163 = vunpack.c.l.b16 %v247
  %v1164 = vunpack.c.h.b16 %v247
  %v1165 = vunpack.c.l.b16 %v248
  %v1166 = vunpack.c.h.b16 %v248
  %v1167 = vunpack.c.l.b16 %v249
  %v1168 = vunpack.c.h.b16 %v249
  %v1169 = vunpack.c.l.b16 %v250
  %v1170 = vunpack.c.h.b16 %v250
  %v1171 = vunpack.c.l.b16 %v251
  %v1172 = vunpack.c.h.b16 %v251
  %v1173 = vunpack.c.l.b16 %v252
  %v1174 = vunpack.c.h.b16 %v252
  %v1175 = vunpack.c.l.b16 %v253
  %v1176 = vunpack.c.h.b16 %v253
  %v1177 = vunpack.c.l.b16 %v254
  %v1178 = vunpack.c.h.b16 %v254
  %v1179 = vunpack.c.l.b16 %v255
  %v1180 = vunpack.c.h.b16 %v255
  %v1181 = vunpack.c.l.b16 %v256
  %v1182 = vunpack.c.h.b16 %v256
  %v1183 = vunpack.c.l.b16 %v257
  %v1184 = vunpack.c.h.b16 %v257
  %v1185 = vunpack.c.l.b16 %v258
  %v1186 = vunpack.c.h.b16 %v258
  %v1187 = vunpack.c.l.b16 %v259
  %v1188 = vunpack.c.h.b16 %v259
  %v1189 = vunpack.c.l.b16 %v260
  %v1190 = vunpack.c.h.b16 %v260
  %v1191 = vunpack.c.l.b16 %v261
  %v1192 = vunpack.c.h.b16 %v261
  %v1193 = vunpack.c.l.b16 %v262
  %v1194 = vunpack.c.h.b16 %v262
  %v1195 = vunpack.c.l.b16 %v263
  %v1196 = vunpack.c.h.b16 %v263
  %v1197 = vunpack.c.l.b16 %v264
  %v1198 = vunpack.c.h.b16 %v264
  %v1199 = vunpack.c.l.b16 %v265
  %v1200 = vunpack.c.h.b16 %v265
  %v1201 = vunpack.c.l.b16 %v266
  %v1202 = vunpack.c.h.b16 %v266
  %v1203 = vunpack.c.l.b16 %v267
  %v1204 = vunpack.c.h.b16 %v267
  %v1205 = vunpack.c.l.b16 %v268
  %v1206 = vunpack.c.h.b16 %v268
  %v1207 = vunpack.c.l.b16 %v269
  %v1208 = vunpack.c.h.b16 %v269
  %v1209 = vunpack.c.l.b16 %v270
  %v1210 = vunpack.c.h.b16 %v270
  %v1211 = vunpack.c.l.b16 %v271
  %v1212 = vunpack.c.h.b16 %v271
  %v1213 = vunpack.c.l.b16 %v272
  %v1214 = vunpack.c.h.b16 %v272
  %v1215 = vunpack.c.l.b16 %v273
  %v1216 = vunpack.c.h.b16 %v273
  %v1217 = vunpack.c.l.b16 %v274
  %v1218 = vunpack.c.h.b16 %v274
  %v1219 = vunpack.c.l.b16 %v275
  %v1220 = vunpack.c.h.b16 %v275
  %v1221 = vunpack.c.l.b16 %v276
  %v1222 = vunpack.c.h.b16 %v276
  %v1223 = vunpack.c.l.b16 %v277
  %v1224 = vunpack.c.h.b16 %v277
  %v1225 = vunpack.c.l.b16 %v278
  %v1226 = vunpack.c.h.b16 %v278
  %v1227 = vunpack.c.l.b16 %v279
  %v1228 = vunpack.c.h.b16 %v279
  %v1229 = vunpack.c.l.b16 %v280
  %v1230 = vunpack.c.h.b16 %v280
  %v1231 = vunpack.c.l.b16 %v281
  %v1232 = vunpack.c.h.b16 %v281
  %v1233 = vunpack.c.l.b16 %v282
  %v1234 = vunpack.c.h.b16 %v282
  %v1235 = vunpack.c.l.b16 %v283
  %v1236 = vunpack.c.h.b16 %v283
  %v1237 = vunpack.c.l.b16 %v284
  %v1238 = vunpack.c.h.b16 %v284
  %v1239 = vunpack.c.l.b16 %v285
  %v1240 = vunpack.c.h.b16 %v285
  %v1241 = vunpack.c.l.b16 %v286
  %v1242 = vunpack.c.h.b16 %v286
  %v1243 = vunpack.c.l.b16 %v287
  %v1244 = vunpack.c.h.b16 %v287
  %v1245 = vunpack.c.l.b16 %v288
  %v1246 = vunpack.c.h.b16 %v288
  %v1247 = vunpack.c.l.b16 %v289
  %v1248 = vunpack.c.h.b16 %v289
  %v1249 = vunpack.c.l.b16 %v290
  %v1250 = vunpack.c.h.b16 %v290
  %v1251 = vunpack.c.l.b16 %v291
  %v1252 = vunpack.c.h.b16 %v291
  %v1253 = vunpack.c.l.b16 %v292
  %v1254 = vunpack.c.h.b16 %v292
  %v1255 = vunpack.c.l.b16 %v293
  %v1256 = vunpack.c.h.b16 %v293
  %v1257 = vunpack.c.l.b16 %v294
  %v1258 = vunpack.c.h.b16 %v294
  %v1259 = vunpack.c.l.b16 %v295
  %v1260 = vunpack.c.h.b16 %v295
  %v1261 = vunpack.c.l.b16 %v296
  %v1262 = vunpack.c.h.b16 %v296
  %v1263 = vunpack.c.l.b16 %v297
  %v1264 = vunpack.c.h.b16 %v297
  %v1265 = vunpack.c.l.b16 %v298
  %v1266 = vunpack.c.h.b16 %v298
  %v1267 = vunpack.c.l.b16 %v299
  %v1268 = vunpack.c.h.b16 %v299
  %v1269 = vunpack.c.l.b16 %v300
  %v1270 = vunpack.c.h.b16 %v300
  %v1271 = vunpack.c.l.b16 %v301
  %v1272 = vunpack.c.h.b16 %v301
  %v1273 = vunpack.c.l.b16 %v302
  %v1274 = vunpack.c.h.b16 %v302
  %v1275 = vunpack.c.l.b16 %v303
  %v1276 = vunpack.c.h.b16 %v303
  %v1277 = vunpack.c.l.b16 %v304
  %v1278 = vunpack.c.h.b16 %v304
  %v1279 = vunpack.c.l.b16 %v305
  %v1280 = vunpack.c.h.b16 %v305
  %v1281 = vunpack.c.l.b16 %v306
  %v1282 = vunpack.c.h.b16 %v306
  %v1283 = vunpack.c.l.b16 %v307
  %v1284 = vunpack.c.h.b16 %v307
  %v1285 = vunpack.c.l.b16 %v308
  %v1286 = vunpack.c.h.b16 %v308
  %v1287 = vunpack.c.l.b16 %v309
  %v1288 = vunpack.c.h.b16 %v309
  %v1289 = vunpack.c.l.b16 %v310
  %v1290 = vunpack.c.h.b16 %v310
  %v1291 = vunpack.c.l.b16 %v311
  %v1292 = vunpack.c.h.b16 %v311
  %v1293 = vunpack.c.l.b16 %v312
  %v1294 = vunpack.c.h.b16 %v312
  %v1295 = vunpack.c.l.b16 %v313
  %v1296 = vunpack.c.h.b16 %v313
  %v1297 = vunpack.c.l.b16 %v314
  %v1298 = vunpack.c.h.b16 %v314
  %v1299 = vunpack.c.l.b16 %v315
  %v1300 = vunpack.c.h.b16 %v315
  %v1301 = vunpack.c.l.b16 %v316
  %v1302 = vunpack.c.h.b16 %v316
  %v1303 = vunpack.c.l.b16 %v317
  %v1304 = vunpack.c.h.b16 %v317
  %v1305 = vunpack.c.l.b16 %v318
  %v1306 = vunpack.c.h.b16 %v318
  %v1307 = vunpack.c.l.b16 %v319
  %v1308 = vunpack.c.h.b16 %v319
  %v1309 = vunpack.c.l.b16 %v320
  %v1310 = vunpack.c.h.b16 %v320
  %v1311 = vunpack.c.l.b16 %v321
  %v1312 = vunpack.c.h.b16 %v321
  %v1313 = vunpack.c.l.b16 %v322
  %v1314 = vunpack.c.h.b16 %v322
  %v1315 = vunpack.c.l.b16 %v323
  %v1316 = vunpack.c.h.b16 %v323
  %v1317 = vunpack.c.l.b16 %v324
  %v1318 = vunpack.c.h.b16 %v324
  %v1319 = vunpack.c.l.b16 %v325
  %v1320 = vunpack.c.h.b16 %v325
  %v1321 = vunpack.c.l.b16 %v326
  %v1322 = vunpack.c.h.b16 %v326
  %v1323 = vunpack.c.l.b16 %v327
  %v1324 = vunpack.c.h.b16 %v327
  %v1325 = vunpack.c.l.b16 %v328
  %v1326 = vunpack.c.h.b16 %v328
  %v1327 = vunpack.c.l.b16 %v329
  %v1328 = vunpack.c.h.b16 %v329
  %v1329 = vunpack.c.l.b16 %v330
  %v1330 = vunpack.c.h.b16 %v330
  %v1331 = vunpack.c.l.b16 %v331
  %v1332 = vunpack.c.h.b16 %v331
  %v1333 = vunpack.c.l.b16 %v332
  %v1334 = vunpack.c.h.b16 %v332
  %v1335 = vunpack.c.l.b16 %v333
  %v1336 = vunpack.c.h.b16 %v333
  %v1337 = vunpack.c.l.b16 %v334
  %v1338 = vunpack.c.h.b16 %v334
  %v1339 = vunpack.c.l.b16 %v335
  %v1340 = vunpack.c.h.b16 %v335
  %v1341 = vunpack.c.l.b16 %v336
  %v1342 = vunpack.c.h.b16 %v336
  %v1343 = vunpack.c.l.b16 %v337
  %v1344 = vunpack.c.h.b16 %v337
  %v1345 = vunpack.c.l.b16 %v338
  %v1346 = vunpack.c.h.b16 %v338
  %v1347 = vunpack.c.l.b16 %v339
  %v1348 = vunpack.c.h.b16 %v339
  %v1349 = vunpack.c.l.b16 %v340
  %v1350 = vunpack.c.h.b16 %v340
  %v1351 = vunpack.c.l.b16 %v341
  %v1352 = vunpack.c.h.b16 %v341
  %v1353 = vunpack.c.l.b16 %v342
  %v1354 = vunpack.c.h.b16 %v342
  %v1355 = vunpack.c.l.b16 %v343
  %v1356 = vunpack.c.h.b16 %v343
  %v1357 = vunpack.c.l.b16 %v344
  %v1358 = vunpack.c.h.b16 %v344
  %v1359 = vunpack.c.l.b16 %v345
  %v1360 = vunpack.c.h.b16 %v345
  %v1361 = vunpack.c.l.b16 %v346
  %v1362 = vunpack.c.h.b16 %v346
  %v1363 = vunpack.c.l.b16 %v347
  %v1364 = vunpack.c.h.b16 %v347
  %v1365 = vunpack.c.l.b16 %v348
  %v1366 = vunpack.c.h.b16 %v348
  %v1367 = vunpack.c.l.b16 %v349
  %v1368 = vunpack.c.h.b16 %v349
  %v1369 = vunpack.c.l.b16 %v350
  %v1370 = vunpack.c.h.b16 %v350
  %v1371 = vunpack.c.l.b16 %v351
  %v1372 = vunpack.c.h.b16 %v351
  %v1373 = vunpack.c.l.b16 %v352
  %v1374 = vunpack.c.h.b16 %v352
  %v1375 = vunpack.c.l.b16 %v353
  %v1376 = vunpack.c.h.b16 %v353
  %v1377 = vunpack.c.l.b16 %v354
  %v1378 = vunpack.c.h.b16 %v354
  %v1379 = vunpack.c.l.b16 %v355
  %v1380 = vunpack.c.h.b16 %v355
  %v1381 = vunpack.c.l.b16 %v356
  %v1382 = vunpack.c.h.b16 %v356
  %v1383 = vunpack.c.l.b16 %v357
  %v1384 = vunpack.c.h.b16 %v357
  %v1385 = vunpack.c.l.b16 %v358
  %v1386 = vunpack.c.h.b16 %v358
  %v1387 = vunpack.c.l.b16 %v359
  %v1388 = vunpack.c.h.b16 %v359
  %v1389 = vunpack.c.l.b16 %v360
  %v1390 = vunpack.c.h.b16 %v360
  %v1391 = vunpack.c.l.b16 %v361
  %v1392 = vunpack.c.h.b16 %v361
  %v1393 = vunpack.c.l.b16 %v362
  %v1394 = vunpack.c.h.b16 %v362
  %v1395 = vpack.c.b16 %v751, %v747
  %v1396 = vpack.c.b16 %v752, %v748
  %v1397 = vpack.c.b16 %v753, %v749
  %v1398 = vpack.c.b16 %v754, %v750
  %v1399 = vpack.c.b16 %v759, %v755
  %v1400 = vpack.c.b16 %v760, %v756
  %v1401 = vpack.c.b16 %v761, %v757
  %v1402 = vpack.c.b16 %v762, %v758
  %v1403 = vpack.c.b16 %v767, %v763
  %v1404 = vpack.c.b16 %v768, %v764
  %v1405 = vpack.c.b16 %v769, %v765
  %v1406 = vpack.c.b16 %v770, %v766
  %v1407 = vpack.c.b16 %v775, %v771
  %v1408 = vpack.c.b16 %v776, %v772
  %v1409 = vpack.c.b16 %v777, %v773
  %v1410 = vpack.c.b16 %v778, %v774
  %v1411 = vpack.c.b16 %v783, %v779
  %v1412 = vpack.c.b16 %v784, %v780
  %v1413 = vpack.c.b16 %v785, %v781
  %v1414 = vpack.c.b16 %v786, %v782
  %v1415 = vpack.c.b16 %v791, %v787
  %v1416 = vpack.c.b16 %v792, %v788
  %v1417 = vpack.c.b16 %v793, %v789
  %v1418 = vpack.c.b16 %v794, %v790
  %v1419 = vpack.c.b16 %v799, %v795
  %v1420 = vpack.c.b16 %v800, %v796
  %v1421 = vpack.c.b16 %v801, %v797
  %v1422 = vpack.c.b16 %v802, %v798
  %v1423 = vpack.c.b16 %v807, %v803
  %v1424 = vpack.c.b16 %v808, %v804
  %v1425 = vpack.c.b16 %v809, %v805
  %v1426 = vpack.c.b16 %v810, %v806
  %v1427 = vpack.c.b16 %v815, %v811
  %v1428 = vpack.c.b16 %v816, %v812
  %v1429 = vpack.c.b16 %v817, %v813
  %v1430 = vpack.c.b16 %v818, %v814
  %v1431 = vpack.c.b16 %v823, %v819
  %v1432 = vpack.c.b16 %v824, %v820
  %v1433 = vpack.c.b16 %v825, %v821
  %v1434 = vpack.c.b16 %v826, %v822
  %v1435 = vpack.c.b16 %v831, %v827
  %v1436 = vpack.c.b16 %v832, %v828
  %v1437 = vpack.c.b16 %v833, %v829
  %v1438 = vpack.c.b16 %v834, %v830
  %v1439 = vpack.c.b16 %v839, %v835
  %v1440 = vpack.c.b16 %v840, %v836
  %v1441 = vpack.c.b16 %v841, %v837
  %v1442 = vpack.c.b16 %v842, %v838
  %v1443 = vpack.c.b16 %v847, %v843
  %v1444 = vpack.c.b16 %v848, %v844
  %v1445 = vpack.c.b16 %v849, %v845
  %v1446 = vpack.c.b16 %v850, %v846
  %v1447 = vpack.c.b16 %v855, %v851
  %v1448 = vpack.c.b16 %v856, %v852
  %v1449 = vpack.c.b16 %v857, %v853
  %v1450 = vpack.c.b16 %v858, %v854
  %v1451 = vpack.c.b16 %v863, %v859
  %v1452 = vpack.c.b16 %v864, %v860
  %v1453 = vpack.c.b16 %v865, %v861
  %v1454 = vpack.c.b16 %v866, %v862
  %v1455 = vpack.c.b16 %v871, %v867
  %v1456 = vpack.c.b16 %v872, %v868
  %v1457 = vpack.c.b16 %v873, %v869
  %v1458 = vpack.c.b16 %v874, %v870
  %v1459 = vpack.c.b16 %v879, %v875
  %v1460 = vpack.c.b16 %v880, %v876
  %v1461 = vpack.c.b16 %v881, %v877
  %v1462 = vpack.c.b16 %v882, %v878
  %v1463 = vpack.c.b16 %v887, %v883
  %v1464 = vpack.c.b16 %v888, %v884
  %v1465 = vpack.c.b16 %v889, %v885
  %v1466 = vpack.c.b16 %v890, %v886
  %v1467 = vpack.c.b16 %v895, %v891
  %v1468 = vpack.c.b16 %v896, %v892
  %v1469 = vpack.c.b16 %v897, %v893
  %v1470 = vpack.c.b16 %v898, %v894
  %v1471 = vpack.c.b16 %v903, %v899
  %v1472 = vpack.c.b16 %v904, %v900
  %v1473 = vpack.c.b16 %v905, %v901
  %v1474 = vpack.c.b16 %v906, %v902
  %v1475 = vpack.c.b16 %v911, %v907
  %v1476 = vpack.c.b16 %v912, %v908
  %v1477 = vpack.c.b16 %v913, %v909
  %v1478 = vpack.c.b16 %v914, %v910
  %v1479 = vpack.c.b16 %v919, %v915
  %v1480 = vpack.c.b16 %v920, %v916
  %v1481 = vpack.c.b16 %v921, %v917
  %v1482 = vpack.c.b16 %v922, %v918
  %v1483 = vpack.c.b16 %v927, %v923
  %v1484 = vpack.c.b16 %v928, %v924
  %v1485 = vpack.c.b16 %v929, %v925
  %v1486 = vpack.c.b16 %v930, %v926
  %v1487 = vpack.c.b16 %v935, %v931
  %v1488 = vpack.c.b16 %v936, %v932
  %v1489 = vpack.c.b16 %v937, %v933
  %v1490 = vpack.c.b16 %v938, %v934
  %v1491 = vpack.c.b16 %v943, %v939
  %v1492 = vpack.c.b16 %v944, %v940
  %v1493 = vpack.c.b16 %v945, %v941
  %v1494 = vpack.c.b16 %v946, %v942
  %v1495 = vpack.c.b16 %v951, %v947
  %v1496 = vpack.c.b16 %v952, %v948
  %v1497 = vpack.c.b16 %v953, %v949
  %v1498 = vpack.c.b16 %v954, %v950
  %v1499 = vpack.c.b16 %v959, %v955
  %v1500 = vpack.c.b16 %v960, %v956
  %v1501 = vpack.c.b16 %v961, %v957
  %v1502 = vpack.c.b16 %v962, %v958
  %v1503 = vpack.c.b16 %v967, %v963
  %v1504 = vpack.c.b16 %v968, %v964
  %v1505 = vpack.c.b16 %v969, %v965
  %v1506 = vpack.c.b16 %v970, %v966
  %v1507 = vpack.c.b16 %v975, %v971
  %v1508 = vpack.c.b16 %v976, %v972
  %v1509 = vpack.c.b16 %v977, %v973
  %v1510 = vpack.c.b16 %v978, %v974
  %v1511 = vpack.c.b16 %v983, %v979
  %v1512 = vpack.c.b16 %v984, %v980
  %v1513 = vpack.c.b16 %v985, %v981
  %v1514 = vpack.c.b16 %v986, %v982
  %v1515 = vpack.c.b16 %v991, %v987
  %v1516 = vpack.c.b16 %v992, %v988
  %v1517 = vpack.c.b16 %v993, %v989
  %v1518 = vpack.c.b16 %v994, %v990
  %v1519 = vpack.c.b16 %v999, %v995
  %v1520 = vpack.c.b16 %v1000, %v996
  %v1521 = vpack.c.b16 %v1001, %v997
  %v1522 = vpack.c.b16 %v1002, %v998
  %v1523 = vpack.c.b16 %v1007, %v1003
  %v1524 = vpack.c.b16 %v1008, %v1004
  %v1525 = vpack.c.b16 %v1009, %v1005
  %v1526 = vpack.c.b16 %v1010, %v1006
  %v1527 = vpack.c.b16 %v1015, %v1011
  %v1528 = vpack.c.b16 %v1016, %v1012
  %v1529 = vpack.c.b16 %v1017, %v1013
  %v1530 = vpack.c.b16 %v1018, %v1014
  %v1531 = vpack.c.b16 %v1023, %v1019
  %v1532 = vpack.c.b16 %v1024, %v1020
  %v1533 = vpack.c.b16 %v1025, %v1021
  %v1534 = vpack.c.b16 %v1026, %v1022
  %v1535 = vpack.c.b16 %v1031, %v1027
  %v1536 = vpack.c.b16 %v1032, %v1028
  %v1537 = vpack.c.b16 %v1033, %v1029
  %v1538 = vpack.c.b16 %v1034, %v1030
  %v1539 = vpack.c.b16 %v1039, %v1035
  %v1540 = vpack.c.b16 %v1040, %v1036
  %v1541 = vpack.c.b16 %v1041, %v1037
  %v1542 = vpack.c.b16 %v1042, %v1038
  %v1543 = vpack.c.b16 %v1047, %v1043
  %v1544 = vpack.c.b16 %v1048, %v1044
  %v1545 = vpack.c.b16 %v1049, %v1045
  %v1546 = vpack.c.b16 %v1050, %v1046
  %v1547 = vpack.c.b16 %v1055, %v1051
  %v1548 = vpack.c.b16 %v1056, %v1052
  %v1549 = vpack.c.b16 %v1057, %v1053
  %v1550 = vpack.c.b16 %v1058, %v1054
  %v1551 = vpack.c.b16 %v1063, %v1059
  %v1552 = vpack.c.b16 %v1064, %v1060
  %v1553 = vpack.c.b16 %v1065, %v1061
  %v1554 = vpack.c.b16 %v1066, %v1062
  %v1555 = vpack.c.b16 %v1071, %v1067
  %v1556 = vpack.c.b16 %v1072, %v1068
  %v1557 = vpack.c.b16 %v1073, %v1069
  %v1558 = vpack.c.b16 %v1074, %v1070
  %v1559 = vpack.c.b16 %v1079, %v1075
  %v1560 = vpack.c.b16 %v1080, %v1076
  %v1561 = vpack.c.b16 %v1081, %v1077
  %v1562 = vpack.c.b16 %v1082, %v1078
  %v1563 = vpack.c.b16 %v1087, %v1083
  %v1564 = vpack.c.b16 %v1088, %v1084
  %v1565 = vpack.c.b16 %v1089, %v1085
  %v1566 = vpack.c.b16 %v1090, %v1086
  %v1567 = vpack.c.b16 %v1095, %v1091
  %v1568 = vpack.c.b16 %v1096, %v1092
  %v1569 = vpack.c.b16 %v1097, %v1093
  %v1570 = vpack.c.b16 %v1098, %v1094
  %v1571 = vpack.c.b16 %v1103, %v1099
  %v1572 = vpack.c.b16 %v1104, %v1100
  %v1573 = vpack.c.b16 %v1105, %v1101
  %v1574 = vpack.c.b16 %v1106, %v1102
  %v1575 = vpack.c.b16 %v1111, %v1107
  %v1576 = vpack.c.b16 %v1112, %v1108
  %v1577 = vpack.c.b16 %v1113, %v1109
  %v1578 = vpack.c.b16 %v1114, %v1110
  %v1579 = vpack.c.b16 %v1119, %v1115
  %v1580 = vpack.c.b16 %v1120, %v1116
  %v1581 = vpack.c.b16 %v1121, %v1117
  %v1582 = vpack.c.b16 %v1122, %v1118
  %v1583 = vpack.c.b16 %v1127, %v1123
  %v1584 = vpack.c.b16 %v1128, %v1124
  %v1585 = vpack.c.b16 %v1129, %v1125
  %v1586 = vpack.c.b16 %v1130, %v1126
  %v1587 = vpack.c.b16 %v1135, %v1131
  %v1588 = vpack.c.b16 %v1136, %v1132
  %v1589 = vpack.c.b16 %v1137, %v1133
  %v1590 = vpack.c.b16 %v1138, %v1134
  %v1591 = vpack.c.b16 %v1143, %v1139
  %v1592 = vpack.c.b16 %v1144, %v1140
  %v1593 = vpack.c.b16 %v1145, %v1141
  %v1594 = vpack.c.b16 %v1146, %v1142
  %v1595 = vpack.c.b16 %v1151, %v1147
  %v1596 = vpack.c.b16 %v1152, %v1148
  %v1597 = vpack.c.b16 %v1153, %v1149
  %v1598 = vpack.c.b16 %v1154, %v1150
  %v1599 = vpack.c.b16 %v1159, %v1155
  %v1600 = vpack.c.b16 %v1160, %v1156
  %v1601 = vpack.c.b16 %v1161, %v1157
  %v1602 = vpack.c.b16 %v1162, %v1158
  %v1603 = vpack.c.b16 %v1167, %v1163
  %v1604 = vpack.c.b16 %v1168, %v1164
  %v1605 = vpack.c.b16 %v1169, %v1165
  %v1606 = vpack.c.b16 %v1170, %v1166
  %v1607 = vpack.c.b16 %v1175, %v1171
  %v1608 = vpack.c.b16 %v1176, %v1172
  %v1609 = vpack.c.b16 %v1177, %v1173
  %v1610 = vpack.c.b16 %v1178, %v1174
  %v1611 = vpack.c.b16 %v1183, %v1179
  %v1612 = vpack.c.b16 %v1184, %v1180
  %v1613 = vpack.c.b16 %v1185, %v1181
  %v1614 = vpack.c.b16 %v1186, %v1182
  %v1615 = vpack.c.b16 %v1191, %v1187
  %v1616 = vpack.c.b16 %v1192, %v1188
  %v1617 = vpack.c.b16 %v1193, %v1189
  %v1618 = vpack.c.b16 %v1194, %v1190
  %v1619 = vpack.c.b16 %v1199, %v1195
  %v1620 = vpack.c.b16 %v1200, %v1196
  %v1621 = vpack.c.b16 %v1201, %v1197
  %v1622 = vpack.c.b16 %v1202, %v1198
  %v1623 = vpack.c.b16 %v1207, %v1203
  %v1624 = vpack.c.b16 %v1208, %v1204
  %v1625 = vpack.c.b16 %v1209, %v1205
  %v1626 = vpack.c.b16 %v1210, %v1206
  %v1627 = vpack.c.b16 %v1215, %v1211
  %v1628 = vpack.c.b16 %v1216, %v1212
  %v1629 = vpack.c.b16 %v1217, %v1213
  %v1630 = vpack.c.b16 %v1218, %v1214
  %v1631 = vpack.c.b16 %v1223, %v1219
  %v1632 = vpack.c.b16 %v1224, %v1220
  %v1633 = vpack.c.b16 %v1225, %v1221
  %v1634 = vpack.c.b16 %v1226, %v1222
  %v1635 = vpack.c.b16 %v1231, %v1227
  %v1636 = vpack.c.b16 %v1232, %v1228
  %v1637 = vpack.c.b16 %v1233, %v1229
  %v1638 = vpack.c.b16 %v1234, %v1230
  %v1639 = vpack.c.b16 %v1239, %v1235
  %v1640 = vpack.c.b16 %v1240, %v1236
  %v1641 = vpack.c.b16 %v1241, %v1237
  %v1642 = vpack.c.b16 %v1242, %v1238
  %v1643 = vpack.c.b16 %v1247, %v1243
  %v1644 = vpack.c.b16 %v1248, %v1244
  %v1645 = vpack.c.b16 %v1249, %v1245
  %v1646 = vpack.c.b16 %v1250, %v1246
  %v1647 = vpack.c.b16 %v1255, %v1251
  %v1648 = vpack.c.b16 %v1256, %v1252
  %v1649 = vpack.c.b16 %v1257, %v1253
  %v1650 = vpack.c.b16 %v1258, %v1254
  %v1651 = vpack.c.b16 %v1263, %v1259
  %v1652 = vpack.c.b16 %v1264, %v1260
  %v1653 = vpack.c.b16 %v1265, %v1261
  %v1654 = vpack.c.b16 %v1266, %v1262
  %v1655 = vpack.c.b16 %v1271, %v1267
  %v1656 = vpack.c.b16 %v1272, %v1268
  %v1657 = vpack.c.b16 %v1273, %v1269
  %v1658 = vpack.c.b16 %v1274, %v1270
  %v1659 = vpack.c.b16 %v1279, %v1275
  %v1660 = vpack.c.b16 %v1280, %v1276
  %v1661 = vpack.c.b16 %v1281, %v1277
  %v1662 = vpack.c.b16 %v1282, %v1278
  %v1663 = vpack.c.b16 %v1287, %v1283
  %v1664 = vpack.c.b16 %v1288, %v1284
  %v1665 = vpack.c.b16 %v1289, %v1285
  %v1666 = vpack.c.b16 %v1290, %v1286
  %v1667 = vpack.c.b16 %v1295, %v1291
  %v1668 = vpack.c.b16 %v1296, %v1292
  %v1669 = vpack.c.b16 %v1297, %v1293
  %v1670 = vpack.c.b16 %v1298, %v1294
  %v1671 = vpack.c.b16 %v1303, %v1299
  %v1672 = vpack.c.b16 %v1304, %v1300
  %v1673 = vpack.c.b16 %v1305, %v1301
  %v1674 = vpack.c.b16 %v1306, %v1302
  %v1675 = vpack.c.b16 %v1311, %v1307
  %v1676 = vpack.c.b16 %v1312, %v1308
  %v1677 = vpack.c.b16 %v1313, %v1309
  %v1678 = vpack.c.b16 %v1314, %v1310
  %v1679 = vpack.c.b16 %v1319, %v1315
  %v1680 = vpack.c.b16 %v1320, %v1316
  %v1681 = vpack.c.b16 %v1321, %v1317
  %v1682 = vpack.c.b16 %v1322, %v1318
  %v1683 = vpack.c.b16 %v1327, %v1323
  %v1684 = vpack.c.b16 %v1328, %v1324
  %v1685 = vpack.c.b16 %v1329, %v1325
  %v1686 = vpack.c.b16 %v1330, %v1326
  %v1687 = vpack.c.b16 %v1335, %v1331
  %v1688 = vpack.c.b16 %v1336, %v1332
  %v1689 = vpack.c.b16 %v1337, %v1333
  %v1690 = vpack.c.b16 %v1338, %v1334
  %v1691 = vpack.c.b16 %v1343, %v1339
  %v1692 = vpack.c.b16 %v1344, %v1340
  %v1693 = vpack.c.b16 %v1345, %v1341
  %v1694 = vpack.c.b16 %v1346, %v1342
  %v1695 = vpack.c.b16 %v1351, %v1347
  %v1696 = vpack.c.b16 %v1352, %v1348
  %v1697 = vpack.c.b16 %v1353, %v1349
  %v1698 = vpack.c.b16 %v1354, %v1350
  %v1699 = vpack.c.b16 %v1359, %v1355
  %v1700 = vpack.c.b16 %v1360, %v1356
  %v1701 = vpack.c.b16 %v1361, %v1357
  %v1702 = vpack.c.b16 %v1362, %v1358
  %v1703 = vpack.c.b16 %v1367, %v1363
  %v1704 = vpack.c.b16 %v1368, %v1364
  %v1705 = vpack.c.b16 %v1369, %v1365
  %v1706 = vpack.c.b16 %v1370, %v1366
  %v1707 = vpack.c.b16 %v1375, %v1371
  %v1708 = vpack.c.b16 %v1376, %v1372
  %v1709 = vpack.c.b16 %v1377, %v1373
  %v1710 = vpack.c.b16 %v1378, %v1374
  %v1711 = vpack.c.b16 %v1383, %v1379
  %v1712 = vpack.c.b16 %v1384, %v1380
  %v1713 = vpack.c.b16 %v1385, %v1381
  %v1714 = vpack.c.b16 %v1386, %v1382
  %v1715 = vpack.c.b16 %v1391, %v1387
  %v1716 = vpack.c.b16 %v1392, %v1388
  %v1717 = vpack.c.b16 %v1393, %v1389
  %v1718 = vpack.c.b16 %v1394, %v1390
  %vm2043 = vcmask 130048
  %v2045 = vsel %vm2043, %v412, 0
  %2047 = vmatprep.subr.bf16.mxu0 %v1424
  %2048 = vmatpush1.bf16.msra.mxu0 %v1423
  %2049 = vmatprep.subr.bf16.mxu0 %v1420
  %2050 = vmatpush1.bf16.msra.mxu0 %v1419
  %2051 = vmatprep.subr.bf16.mxu0 %v1416
  %2052 = vmatpush1.bf16.msra.mxu0 %v1415
  %2053 = vmatprep.subr.bf16.mxu0 %v1412
  %2054 = vmatpush1.bf16.msra.mxu0 %v1411
  %2055 = vmatprep.subr.bf16.mxu0 %v1408
  %2056 = vmatpush1.bf16.msra.mxu0 %v1407
  %2057 = vmatprep.subr.bf16.mxu0 %v1404
  %2058 = vmatpush1.bf16.msra.mxu0 %v1403
  %2059 = vmatprep.subr.bf16.mxu0 %v1400
  %2060 = vmatpush1.bf16.msra.mxu0 %v1399
  %2061 = vmatprep.subr.bf16.mxu0 %v1396
  %2062 = vmatpush1.bf16.msra.mxu0 %v1395
  %2063 = vmatprep.subr.bf16.mxu0 %v1456
  %2064 = vmatpush2.bf16.msra.mxu0 %v1455
  %2065 = vmatprep.subr.bf16.mxu0 %v1452
  %2066 = vmatpush2.bf16.msra.mxu0 %v1451
  %2067 = vmatprep.subr.bf16.mxu0 %v1448
  %2068 = vmatpush2.bf16.msra.mxu0 %v1447
  %2069 = vmatprep.subr.bf16.mxu0 %v1444
  %2070 = vmatpush2.bf16.msra.mxu0 %v1443
  %2071 = vmatprep.subr.bf16.mxu0 %v1440
  %2072 = vmatpush2.bf16.msra.mxu0 %v1439
  %2073 = vmatprep.subr.bf16.mxu0 %v1436
  %2074 = vmatpush2.bf16.msra.mxu0 %v1435
  %2075 = vmatprep.subr.bf16.mxu0 %v1432
  %2076 = vmatpush2.bf16.msra.mxu0 %v1431
  %2077 = vmatprep.subr.bf16.mxu0 %v1428
  %2078 = vmatpush2.bf16.msra.mxu0 %v1427
  %2079 = vmatprep.mubr.bf16.mxu0 %v403
  %2080 = vmatmul.mubr.bf16.gmra.mxu0 %v402
  %v2081 = vpop.f32.mrf.mxu0
  %v2082 = vadd.f32 %v368, %v2081
  %v2083 = vpop.f32.mrf.mxu0
  %v2084 = vadd.f32 %v372, %v2083
  %v2085 = vpop.f32.mrf.mxu0
  %v2086 = vpop.f32.mrf.mxu0
  %2087 = vdwg.mxu0
  %2088 = vmatprep.subr.bf16.mxu0 %v1488
  %2089 = vmatpush1.bf16.msra.mxu0 %v1487
  %2090 = vmatprep.subr.bf16.mxu0 %v1484
  %2091 = vmatpush1.bf16.msra.mxu0 %v1483
  %2092 = vmatprep.subr.bf16.mxu0 %v1480
  %2093 = vmatpush1.bf16.msra.mxu0 %v1479
  %2094 = vmatprep.subr.bf16.mxu0 %v1476
  %2095 = vmatpush1.bf16.msra.mxu0 %v1475
  %2096 = vmatprep.subr.bf16.mxu0 %v1472
  %2097 = vmatpush1.bf16.msra.mxu0 %v1471
  %2098 = vmatprep.subr.bf16.mxu0 %v1468
  %2099 = vmatpush1.bf16.msra.mxu0 %v1467
  %2100 = vmatprep.subr.bf16.mxu0 %v1464
  %2101 = vmatpush1.bf16.msra.mxu0 %v1463
  %2102 = vmatprep.subr.bf16.mxu0 %v1460
  %2103 = vmatpush1.bf16.msra.mxu0 %v1459
  %2104 = vmatprep.subr.bf16.mxu0 %v1520
  %2105 = vmatpush2.bf16.msra.mxu0 %v1519
  %2106 = vmatprep.subr.bf16.mxu0 %v1516
  %2107 = vmatpush2.bf16.msra.mxu0 %v1515
  %2108 = vmatprep.subr.bf16.mxu0 %v1512
  %2109 = vmatpush2.bf16.msra.mxu0 %v1511
  %2110 = vmatprep.subr.bf16.mxu0 %v1508
  %2111 = vmatpush2.bf16.msra.mxu0 %v1507
  %2112 = vmatprep.subr.bf16.mxu0 %v1504
  %2113 = vmatpush2.bf16.msra.mxu0 %v1503
  %2114 = vmatprep.subr.bf16.mxu0 %v1500
  %2115 = vmatpush2.bf16.msra.mxu0 %v1499
  %2116 = vmatprep.subr.bf16.mxu0 %v1496
  %2117 = vmatpush2.bf16.msra.mxu0 %v1495
  %2118 = vmatprep.subr.bf16.mxu0 %v1492
  %2119 = vmatpush2.bf16.msra.mxu0 %v1491
  %2120 = vmatprep.mubr.bf16.mxu0 %v405
  %2121 = vmatmul.mubr.bf16.gmra.mxu0 %v404
  %v2122 = vpop.f32.mrf.mxu0
  %v2123 = vadd.f32 %v2082, %v2122
  %v2124 = vpop.f32.mrf.mxu0
  %v2125 = vadd.f32 %v2084, %v2124
  %v2126 = vpop.f32.mrf.mxu0
  %v2127 = vpop.f32.mrf.mxu0
  %2128 = vdwg.mxu0
  %2129 = vmatprep.subr.bf16.mxu0 %v1552
  %2130 = vmatpush1.bf16.msra.mxu0 %v1551
  %2131 = vmatprep.subr.bf16.mxu0 %v1548
  %2132 = vmatpush1.bf16.msra.mxu0 %v1547
  %2133 = vmatprep.subr.bf16.mxu0 %v1544
  %2134 = vmatpush1.bf16.msra.mxu0 %v1543
  %2135 = vmatprep.subr.bf16.mxu0 %v1540
  %2136 = vmatpush1.bf16.msra.mxu0 %v1539
  %2137 = vmatprep.subr.bf16.mxu0 %v1536
  %2138 = vmatpush1.bf16.msra.mxu0 %v1535
  %2139 = vmatprep.subr.bf16.mxu0 %v1532
  %2140 = vmatpush1.bf16.msra.mxu0 %v1531
  %2141 = vmatprep.subr.bf16.mxu0 %v1528
  %2142 = vmatpush1.bf16.msra.mxu0 %v1527
  %2143 = vmatprep.subr.bf16.mxu0 %v1524
  %2144 = vmatpush1.bf16.msra.mxu0 %v1523
  %2145 = vmatprep.subr.bf16.mxu0 %v1584
  %2146 = vmatpush2.bf16.msra.mxu0 %v1583
  %2147 = vmatprep.subr.bf16.mxu0 %v1580
  %2148 = vmatpush2.bf16.msra.mxu0 %v1579
  %2149 = vmatprep.subr.bf16.mxu0 %v1576
  %2150 = vmatpush2.bf16.msra.mxu0 %v1575
  %2151 = vmatprep.subr.bf16.mxu0 %v1572
  %2152 = vmatpush2.bf16.msra.mxu0 %v1571
  %2153 = vmatprep.subr.bf16.mxu0 %v1568
  %2154 = vmatpush2.bf16.msra.mxu0 %v1567
  %2155 = vmatprep.subr.bf16.mxu0 %v1564
  %2156 = vmatpush2.bf16.msra.mxu0 %v1563
  %2157 = vmatprep.subr.bf16.mxu0 %v1560
  %2158 = vmatpush2.bf16.msra.mxu0 %v1559
  %2159 = vmatprep.subr.bf16.mxu0 %v1556
  %2160 = vmatpush2.bf16.msra.mxu0 %v1555
  %2161 = vmatprep.mubr.bf16.mxu0 %v407
  %2162 = vmatmul.mubr.bf16.gmra.mxu0 %v406
  %v2163 = vpop.f32.mrf.mxu0
  %v2164 = vadd.f32 %v2123, %v2163
  %v2165 = vpop.f32.mrf.mxu0
  %v2166 = vadd.f32 %v2125, %v2165
  %v2167 = vpop.f32.mrf.mxu0
  %v2168 = vpop.f32.mrf.mxu0
  %2169 = vdwg.mxu0
  %2170 = vmatprep.subr.bf16.mxu0 %v1616
  %2171 = vmatpush1.bf16.msra.mxu0 %v1615
  %2172 = vmatprep.subr.bf16.mxu0 %v1612
  %2173 = vmatpush1.bf16.msra.mxu0 %v1611
  %2174 = vmatprep.subr.bf16.mxu0 %v1608
  %2175 = vmatpush1.bf16.msra.mxu0 %v1607
  %2176 = vmatprep.subr.bf16.mxu0 %v1604
  %2177 = vmatpush1.bf16.msra.mxu0 %v1603
  %2178 = vmatprep.subr.bf16.mxu0 %v1600
  %2179 = vmatpush1.bf16.msra.mxu0 %v1599
  %2180 = vmatprep.subr.bf16.mxu0 %v1596
  %2181 = vmatpush1.bf16.msra.mxu0 %v1595
  %2182 = vmatprep.subr.bf16.mxu0 %v1592
  %2183 = vmatpush1.bf16.msra.mxu0 %v1591
  %2184 = vmatprep.subr.bf16.mxu0 %v1588
  %2185 = vmatpush1.bf16.msra.mxu0 %v1587
  %2186 = vmatprep.subr.bf16.mxu0 %v1648
  %2187 = vmatpush2.bf16.msra.mxu0 %v1647
  %2188 = vmatprep.subr.bf16.mxu0 %v1644
  %2189 = vmatpush2.bf16.msra.mxu0 %v1643
  %2190 = vmatprep.subr.bf16.mxu0 %v1640
  %2191 = vmatpush2.bf16.msra.mxu0 %v1639
  %2192 = vmatprep.subr.bf16.mxu0 %v1636
  %2193 = vmatpush2.bf16.msra.mxu0 %v1635
  %2194 = vmatprep.subr.bf16.mxu0 %v1632
  %2195 = vmatpush2.bf16.msra.mxu0 %v1631
  %2196 = vmatprep.subr.bf16.mxu0 %v1628
  %2197 = vmatpush2.bf16.msra.mxu0 %v1627
  %2198 = vmatprep.subr.bf16.mxu0 %v1624
  %2199 = vmatpush2.bf16.msra.mxu0 %v1623
  %2200 = vmatprep.subr.bf16.mxu0 %v1620
  %2201 = vmatpush2.bf16.msra.mxu0 %v1619
  %2202 = vmatprep.mubr.bf16.mxu0 %v409
  %2203 = vmatmul.mubr.bf16.gmra.mxu0 %v408
  %v2204 = vpop.f32.mrf.mxu0
  %v2205 = vadd.f32 %v2164, %v2204
  %v2206 = vpop.f32.mrf.mxu0
  %v2207 = vadd.f32 %v2166, %v2206
  %v2208 = vpop.f32.mrf.mxu0
  %v2209 = vpop.f32.mrf.mxu0
  %2210 = vdwg.mxu0
  %2211 = vmatprep.subr.bf16.mxu0 %v1680
  %2212 = vmatpush1.bf16.msra.mxu0 %v1679
  %2213 = vmatprep.subr.bf16.mxu0 %v1676
  %2214 = vmatpush1.bf16.msra.mxu0 %v1675
  %2215 = vmatprep.subr.bf16.mxu0 %v1672
  %2216 = vmatpush1.bf16.msra.mxu0 %v1671
  %2217 = vmatprep.subr.bf16.mxu0 %v1668
  %2218 = vmatpush1.bf16.msra.mxu0 %v1667
  %2219 = vmatprep.subr.bf16.mxu0 %v1664
  %2220 = vmatpush1.bf16.msra.mxu0 %v1663
  %2221 = vmatprep.subr.bf16.mxu0 %v1660
  %2222 = vmatpush1.bf16.msra.mxu0 %v1659
  %2223 = vmatprep.subr.bf16.mxu0 %v1656
  %2224 = vmatpush1.bf16.msra.mxu0 %v1655
  %2225 = vmatprep.subr.bf16.mxu0 %v1652
  %2226 = vmatpush1.bf16.msra.mxu0 %v1651
  %2227 = vmatprep.subr.bf16.mxu0 %v1712
  %2228 = vmatpush2.bf16.msra.mxu0 %v1711
  %2229 = vmatprep.subr.bf16.mxu0 %v1708
  %2230 = vmatpush2.bf16.msra.mxu0 %v1707
  %2231 = vmatprep.subr.bf16.mxu0 %v1704
  %2232 = vmatpush2.bf16.msra.mxu0 %v1703
  %2233 = vmatprep.subr.bf16.mxu0 %v1700
  %2234 = vmatpush2.bf16.msra.mxu0 %v1699
  %2235 = vmatprep.subr.bf16.mxu0 %v1696
  %2236 = vmatpush2.bf16.msra.mxu0 %v1695
  %2237 = vmatprep.subr.bf16.mxu0 %v1692
  %2238 = vmatpush2.bf16.msra.mxu0 %v1691
  %2239 = vmatprep.subr.bf16.mxu0 %v1688
  %2240 = vmatpush2.bf16.msra.mxu0 %v1687
  %2241 = vmatprep.subr.bf16.mxu0 %v1684
  %2242 = vmatpush2.bf16.msra.mxu0 %v1683
  %2243 = vmatprep.mubr.bf16.mxu0 %v411
  %2244 = vmatmul.mubr.bf16.gmra.mxu0 %v410
  %v2245 = vpop.f32.mrf.mxu0
  %v2246 = vadd.f32 %v2205, %v2245
  %v2247 = vpop.f32.mrf.mxu0
  %v2248 = vadd.f32 %v2207, %v2247
  %v2249 = vpop.f32.mrf.mxu0
  %v2250 = vpop.f32.mrf.mxu0
  %2251 = vdwg.mxu0
  %2252 = vmatprep.subr.bf16.mxu0 0
  %2253 = vmatpush1.bf16.msra.mxu0 0
  %2254 = vmatprep.subr.bf16.mxu0 0
  %2255 = vmatpush1.bf16.msra.mxu0 0
  %2256 = vmatprep.subr.bf16.mxu0 0
  %2257 = vmatpush1.bf16.msra.mxu0 0
  %2258 = vmatprep.subr.bf16.mxu0 0
  %2259 = vmatpush1.bf16.msra.mxu0 0
  %2260 = vmatprep.subr.bf16.mxu0 0
  %2261 = vmatpush1.bf16.msra.mxu0 0
  %2262 = vmatprep.subr.bf16.mxu0 0
  %2263 = vmatpush1.bf16.msra.mxu0 0
  %2264 = vmatprep.subr.bf16.mxu0 0
  %2265 = vmatpush1.bf16.msra.mxu0 0
  %2266 = vmatprep.subr.bf16.mxu0 %v1716
  %2267 = vmatpush1.bf16.msra.mxu0 %v1715
  %2268 = vmatprep.subr.bf16.mxu0 0
  %2269 = vmatpush2.bf16.msra.mxu0 0
  %2270 = vmatprep.subr.bf16.mxu0 0
  %2271 = vmatpush2.bf16.msra.mxu0 0
  %2272 = vmatprep.subr.bf16.mxu0 0
  %2273 = vmatpush2.bf16.msra.mxu0 0
  %2274 = vmatprep.subr.bf16.mxu0 0
  %2275 = vmatpush2.bf16.msra.mxu0 0
  %2276 = vmatprep.subr.bf16.mxu0 0
  %2277 = vmatpush2.bf16.msra.mxu0 0
  %2278 = vmatprep.subr.bf16.mxu0 0
  %2279 = vmatpush2.bf16.msra.mxu0 0
  %2280 = vmatprep.subr.bf16.mxu0 0
  %2281 = vmatpush2.bf16.msra.mxu0 0
  %2282 = vmatprep.subr.bf16.mxu0 0
  %2283 = vmatpush2.bf16.msra.mxu0 0
  %2284 = vmatprep.mubr.bf16.mxu0 0
  %2285 = vmatmul.mubr.bf16.gmra.mxu0 %v2045
  %v2286 = vpop.f32.mrf.mxu0
  %v2287 = vadd.f32 %v2246, %v2286
  %v2288 = vpop.f32.mrf.mxu0
  %v2289 = vadd.f32 %v2248, %v2288
  %v2290 = vpop.f32.mrf.mxu0
  %v2291 = vpop.f32.mrf.mxu0
  %2292 = vdwg.mxu0
  %2293 = vmatprep.subr.bf16.mxu0 %v1426
  %2294 = vmatpush1.bf16.msra.mxu0 %v1425
  %2295 = vmatprep.subr.bf16.mxu0 %v1422
  %2296 = vmatpush1.bf16.msra.mxu0 %v1421
  %2297 = vmatprep.subr.bf16.mxu0 %v1418
  %2298 = vmatpush1.bf16.msra.mxu0 %v1417
  %2299 = vmatprep.subr.bf16.mxu0 %v1414
  %2300 = vmatpush1.bf16.msra.mxu0 %v1413
  %2301 = vmatprep.subr.bf16.mxu0 %v1410
  %2302 = vmatpush1.bf16.msra.mxu0 %v1409
  %2303 = vmatprep.subr.bf16.mxu0 %v1406
  %2304 = vmatpush1.bf16.msra.mxu0 %v1405
  %2305 = vmatprep.subr.bf16.mxu0 %v1402
  %2306 = vmatpush1.bf16.msra.mxu0 %v1401
  %2307 = vmatprep.subr.bf16.mxu0 %v1398
  %2308 = vmatpush1.bf16.msra.mxu0 %v1397
  %2309 = vmatprep.subr.bf16.mxu0 %v1458
  %2310 = vmatpush2.bf16.msra.mxu0 %v1457
  %2311 = vmatprep.subr.bf16.mxu0 %v1454
  %2312 = vmatpush2.bf16.msra.mxu0 %v1453
  %2313 = vmatprep.subr.bf16.mxu0 %v1450
  %2314 = vmatpush2.bf16.msra.mxu0 %v1449
  %2315 = vmatprep.subr.bf16.mxu0 %v1446
  %2316 = vmatpush2.bf16.msra.mxu0 %v1445
  %2317 = vmatprep.subr.bf16.mxu0 %v1442
  %2318 = vmatpush2.bf16.msra.mxu0 %v1441
  %2319 = vmatprep.subr.bf16.mxu0 %v1438
  %2320 = vmatpush2.bf16.msra.mxu0 %v1437
  %2321 = vmatprep.subr.bf16.mxu0 %v1434
  %2322 = vmatpush2.bf16.msra.mxu0 %v1433
  %2323 = vmatprep.subr.bf16.mxu0 %v1430
  %2324 = vmatpush2.bf16.msra.mxu0 %v1429
  %2325 = vmatprep.mubr.bf16.mxu0 %v403
  %2326 = vmatmul.mubr.bf16.gmra.mxu0 %v402
  %v2327 = vpop.f32.mrf.mxu0
  %v2328 = vadd.f32 %v376, %v2327
  %v2329 = vpop.f32.mrf.mxu0
  %v2330 = vadd.f32 %v380, %v2329
  %v2331 = vpop.f32.mrf.mxu0
  %v2332 = vpop.f32.mrf.mxu0
  %2333 = vdwg.mxu0
  %2334 = vmatprep.subr.bf16.mxu0 %v1490
  %2335 = vmatpush1.bf16.msra.mxu0 %v1489
  %2336 = vmatprep.subr.bf16.mxu0 %v1486
  %2337 = vmatpush1.bf16.msra.mxu0 %v1485
  %2338 = vmatprep.subr.bf16.mxu0 %v1482
  %2339 = vmatpush1.bf16.msra.mxu0 %v1481
  %2340 = vmatprep.subr.bf16.mxu0 %v1478
  %2341 = vmatpush1.bf16.msra.mxu0 %v1477
  %2342 = vmatprep.subr.bf16.mxu0 %v1474
  %2343 = vmatpush1.bf16.msra.mxu0 %v1473
  %2344 = vmatprep.subr.bf16.mxu0 %v1470
  %2345 = vmatpush1.bf16.msra.mxu0 %v1469
  %2346 = vmatprep.subr.bf16.mxu0 %v1466
  %2347 = vmatpush1.bf16.msra.mxu0 %v1465
  %2348 = vmatprep.subr.bf16.mxu0 %v1462
  %2349 = vmatpush1.bf16.msra.mxu0 %v1461
  %2350 = vmatprep.subr.bf16.mxu0 %v1522
  %2351 = vmatpush2.bf16.msra.mxu0 %v1521
  %2352 = vmatprep.subr.bf16.mxu0 %v1518
  %2353 = vmatpush2.bf16.msra.mxu0 %v1517
  %2354 = vmatprep.subr.bf16.mxu0 %v1514
  %2355 = vmatpush2.bf16.msra.mxu0 %v1513
  %2356 = vmatprep.subr.bf16.mxu0 %v1510
  %2357 = vmatpush2.bf16.msra.mxu0 %v1509
  %2358 = vmatprep.subr.bf16.mxu0 %v1506
  %2359 = vmatpush2.bf16.msra.mxu0 %v1505
  %2360 = vmatprep.subr.bf16.mxu0 %v1502
  %2361 = vmatpush2.bf16.msra.mxu0 %v1501
  %2362 = vmatprep.subr.bf16.mxu0 %v1498
  %2363 = vmatpush2.bf16.msra.mxu0 %v1497
  %2364 = vmatprep.subr.bf16.mxu0 %v1494
  %2365 = vmatpush2.bf16.msra.mxu0 %v1493
  %2366 = vmatprep.mubr.bf16.mxu0 %v405
  %2367 = vmatmul.mubr.bf16.gmra.mxu0 %v404
  %v2368 = vpop.f32.mrf.mxu0
  %v2369 = vadd.f32 %v2328, %v2368
  %v2370 = vpop.f32.mrf.mxu0
  %v2371 = vadd.f32 %v2330, %v2370
  %v2372 = vpop.f32.mrf.mxu0
  %v2373 = vpop.f32.mrf.mxu0
  %2374 = vdwg.mxu0
  %2375 = vmatprep.subr.bf16.mxu0 %v1554
  %2376 = vmatpush1.bf16.msra.mxu0 %v1553
  %2377 = vmatprep.subr.bf16.mxu0 %v1550
  %2378 = vmatpush1.bf16.msra.mxu0 %v1549
  %2379 = vmatprep.subr.bf16.mxu0 %v1546
  %2380 = vmatpush1.bf16.msra.mxu0 %v1545
  %2381 = vmatprep.subr.bf16.mxu0 %v1542
  %2382 = vmatpush1.bf16.msra.mxu0 %v1541
  %2383 = vmatprep.subr.bf16.mxu0 %v1538
  %2384 = vmatpush1.bf16.msra.mxu0 %v1537
  %2385 = vmatprep.subr.bf16.mxu0 %v1534
  %2386 = vmatpush1.bf16.msra.mxu0 %v1533
  %2387 = vmatprep.subr.bf16.mxu0 %v1530
  %2388 = vmatpush1.bf16.msra.mxu0 %v1529
  %2389 = vmatprep.subr.bf16.mxu0 %v1526
  %2390 = vmatpush1.bf16.msra.mxu0 %v1525
  %2391 = vmatprep.subr.bf16.mxu0 %v1586
  %2392 = vmatpush2.bf16.msra.mxu0 %v1585
  %2393 = vmatprep.subr.bf16.mxu0 %v1582
  %2394 = vmatpush2.bf16.msra.mxu0 %v1581
  %2395 = vmatprep.subr.bf16.mxu0 %v1578
  %2396 = vmatpush2.bf16.msra.mxu0 %v1577
  %2397 = vmatprep.subr.bf16.mxu0 %v1574
  %2398 = vmatpush2.bf16.msra.mxu0 %v1573
  %2399 = vmatprep.subr.bf16.mxu0 %v1570
  %2400 = vmatpush2.bf16.msra.mxu0 %v1569
  %2401 = vmatprep.subr.bf16.mxu0 %v1566
  %2402 = vmatpush2.bf16.msra.mxu0 %v1565
  %2403 = vmatprep.subr.bf16.mxu0 %v1562
  %2404 = vmatpush2.bf16.msra.mxu0 %v1561
  %2405 = vmatprep.subr.bf16.mxu0 %v1558
  %2406 = vmatpush2.bf16.msra.mxu0 %v1557
  %2407 = vmatprep.mubr.bf16.mxu0 %v407
  %2408 = vmatmul.mubr.bf16.gmra.mxu0 %v406
  %v2409 = vpop.f32.mrf.mxu0
  %v2410 = vadd.f32 %v2369, %v2409
  %v2411 = vpop.f32.mrf.mxu0
  %v2412 = vadd.f32 %v2371, %v2411
  %v2413 = vpop.f32.mrf.mxu0
  %v2414 = vpop.f32.mrf.mxu0
  %2415 = vdwg.mxu0
  %2416 = vmatprep.subr.bf16.mxu0 %v1618
  %2417 = vmatpush1.bf16.msra.mxu0 %v1617
  %2418 = vmatprep.subr.bf16.mxu0 %v1614
  %2419 = vmatpush1.bf16.msra.mxu0 %v1613
  %2420 = vmatprep.subr.bf16.mxu0 %v1610
  %2421 = vmatpush1.bf16.msra.mxu0 %v1609
  %2422 = vmatprep.subr.bf16.mxu0 %v1606
  %2423 = vmatpush1.bf16.msra.mxu0 %v1605
  %2424 = vmatprep.subr.bf16.mxu0 %v1602
  %2425 = vmatpush1.bf16.msra.mxu0 %v1601
  %2426 = vmatprep.subr.bf16.mxu0 %v1598
  %2427 = vmatpush1.bf16.msra.mxu0 %v1597
  %2428 = vmatprep.subr.bf16.mxu0 %v1594
  %2429 = vmatpush1.bf16.msra.mxu0 %v1593
  %2430 = vmatprep.subr.bf16.mxu0 %v1590
  %2431 = vmatpush1.bf16.msra.mxu0 %v1589
  %2432 = vmatprep.subr.bf16.mxu0 %v1650
  %2433 = vmatpush2.bf16.msra.mxu0 %v1649
  %2434 = vmatprep.subr.bf16.mxu0 %v1646
  %2435 = vmatpush2.bf16.msra.mxu0 %v1645
  %2436 = vmatprep.subr.bf16.mxu0 %v1642
  %2437 = vmatpush2.bf16.msra.mxu0 %v1641
  %2438 = vmatprep.subr.bf16.mxu0 %v1638
  %2439 = vmatpush2.bf16.msra.mxu0 %v1637
  %2440 = vmatprep.subr.bf16.mxu0 %v1634
  %2441 = vmatpush2.bf16.msra.mxu0 %v1633
  %2442 = vmatprep.subr.bf16.mxu0 %v1630
  %2443 = vmatpush2.bf16.msra.mxu0 %v1629
  %2444 = vmatprep.subr.bf16.mxu0 %v1626
  %2445 = vmatpush2.bf16.msra.mxu0 %v1625
  %2446 = vmatprep.subr.bf16.mxu0 %v1622
  %2447 = vmatpush2.bf16.msra.mxu0 %v1621
  %2448 = vmatprep.mubr.bf16.mxu0 %v409
  %2449 = vmatmul.mubr.bf16.gmra.mxu0 %v408
  %v2450 = vpop.f32.mrf.mxu0
  %v2451 = vadd.f32 %v2410, %v2450
  %v2452 = vpop.f32.mrf.mxu0
  %v2453 = vadd.f32 %v2412, %v2452
  %v2454 = vpop.f32.mrf.mxu0
  %v2455 = vpop.f32.mrf.mxu0
  %2456 = vdwg.mxu0
  %2457 = vmatprep.subr.bf16.mxu0 %v1682
  %2458 = vmatpush1.bf16.msra.mxu0 %v1681
  %2459 = vmatprep.subr.bf16.mxu0 %v1678
  %2460 = vmatpush1.bf16.msra.mxu0 %v1677
  %2461 = vmatprep.subr.bf16.mxu0 %v1674
  %2462 = vmatpush1.bf16.msra.mxu0 %v1673
  %2463 = vmatprep.subr.bf16.mxu0 %v1670
  %2464 = vmatpush1.bf16.msra.mxu0 %v1669
  %2465 = vmatprep.subr.bf16.mxu0 %v1666
  %2466 = vmatpush1.bf16.msra.mxu0 %v1665
  %2467 = vmatprep.subr.bf16.mxu0 %v1662
  %2468 = vmatpush1.bf16.msra.mxu0 %v1661
  %2469 = vmatprep.subr.bf16.mxu0 %v1658
  %2470 = vmatpush1.bf16.msra.mxu0 %v1657
  %2471 = vmatprep.subr.bf16.mxu0 %v1654
  %2472 = vmatpush1.bf16.msra.mxu0 %v1653
  %2473 = vmatprep.subr.bf16.mxu0 %v1714
  %2474 = vmatpush2.bf16.msra.mxu0 %v1713
  %2475 = vmatprep.subr.bf16.mxu0 %v1710
  %2476 = vmatpush2.bf16.msra.mxu0 %v1709
  %2477 = vmatprep.subr.bf16.mxu0 %v1706
  %2478 = vmatpush2.bf16.msra.mxu0 %v1705
  %2479 = vmatprep.subr.bf16.mxu0 %v1702
  %2480 = vmatpush2.bf16.msra.mxu0 %v1701
  %2481 = vmatprep.subr.bf16.mxu0 %v1698
  %2482 = vmatpush2.bf16.msra.mxu0 %v1697
  %2483 = vmatprep.subr.bf16.mxu0 %v1694
  %2484 = vmatpush2.bf16.msra.mxu0 %v1693
  %2485 = vmatprep.subr.bf16.mxu0 %v1690
  %2486 = vmatpush2.bf16.msra.mxu0 %v1689
  %2487 = vmatprep.subr.bf16.mxu0 %v1686
  %2488 = vmatpush2.bf16.msra.mxu0 %v1685
  %2489 = vmatprep.mubr.bf16.mxu0 %v411
  %2490 = vmatmul.mubr.bf16.gmra.mxu0 %v410
  %v2491 = vpop.f32.mrf.mxu0
  %v2492 = vadd.f32 %v2451, %v2491
  %v2493 = vpop.f32.mrf.mxu0
  %v2494 = vadd.f32 %v2453, %v2493
  %v2495 = vpop.f32.mrf.mxu0
  %v2496 = vpop.f32.mrf.mxu0
  %2497 = vdwg.mxu0
  %2498 = vmatprep.subr.bf16.mxu0 0
  %2499 = vmatpush1.bf16.msra.mxu0 0
  %2500 = vmatprep.subr.bf16.mxu0 0
  %2501 = vmatpush1.bf16.msra.mxu0 0
  %2502 = vmatprep.subr.bf16.mxu0 0
  %2503 = vmatpush1.bf16.msra.mxu0 0
  %2504 = vmatprep.subr.bf16.mxu0 0
  %2505 = vmatpush1.bf16.msra.mxu0 0
  %2506 = vmatprep.subr.bf16.mxu0 0
  %2507 = vmatpush1.bf16.msra.mxu0 0
  %2508 = vmatprep.subr.bf16.mxu0 0
  %2509 = vmatpush1.bf16.msra.mxu0 0
  %2510 = vmatprep.subr.bf16.mxu0 0
  %2511 = vmatpush1.bf16.msra.mxu0 0
  %2512 = vmatprep.subr.bf16.mxu0 %v1718
  %2513 = vmatpush1.bf16.msra.mxu0 %v1717
  %2514 = vmatprep.subr.bf16.mxu0 0
  %2515 = vmatpush2.bf16.msra.mxu0 0
  %2516 = vmatprep.subr.bf16.mxu0 0
  %2517 = vmatpush2.bf16.msra.mxu0 0
  %2518 = vmatprep.subr.bf16.mxu0 0
  %2519 = vmatpush2.bf16.msra.mxu0 0
  %2520 = vmatprep.subr.bf16.mxu0 0
  %2521 = vmatpush2.bf16.msra.mxu0 0
  %2522 = vmatprep.subr.bf16.mxu0 0
  %2523 = vmatpush2.bf16.msra.mxu0 0
  %2524 = vmatprep.subr.bf16.mxu0 0
  %2525 = vmatpush2.bf16.msra.mxu0 0
  %2526 = vmatprep.subr.bf16.mxu0 0
  %2527 = vmatpush2.bf16.msra.mxu0 0
  %2528 = vmatprep.subr.bf16.mxu0 0
  %2529 = vmatpush2.bf16.msra.mxu0 0
  %2530 = vmatprep.mubr.bf16.mxu0 0
  %2531 = vmatmul.mubr.bf16.gmra.mxu0 %v2045
  %v2532 = vpop.f32.mrf.mxu0
  %v2533 = vadd.f32 %v2492, %v2532
  %v2534 = vpop.f32.mrf.mxu0
  %v2535 = vadd.f32 %v2494, %v2534
  %v2536 = vpop.f32.mrf.mxu0
  %v2537 = vpop.f32.mrf.mxu0
  %2538 = vdwg.mxu0
  %v2539 = vtanh.pop %v2287
  %v2540 = vtanh.pop %v2289
  %v2541 = vtanh.pop %v2533
  %v2542 = vtanh.pop %v2535
  %v2543 = vpack.c.bf16 %v2539, %v2539
  %v2544 = vpack.c.bf16 %v2540, %v2540
  %v2545 = vpack.c.bf16 %v2541, %v2541
  %v2546 = vpack.c.bf16 %v2542, %v2542
  %v2547 = vld [vmem:[%s5] sm:$0xf]
  %v2548 = vld [vmem:[%s5 + $0x4] sm:$0xf]
  %v2549 = vld [vmem:[%s5 + $0x8] sm:$0xf]
  %v2550 = vld [vmem:[%s5 + $0xc] sm:$0xf]
  %v2551 = vld [vmem:[%s5 + $0x10] sm:$0xf]
  %v2552 = vld [vmem:[%s5 + $0x14] sm:$0xf]
  %v2553 = vld [vmem:[%s5 + $0x18] sm:$0xf]
  %v2554 = vld [vmem:[%s5 + $0x1c] sm:$0xf]
  %v2555 = vld [vmem:[%s5 + $0x20] sm:$0xf]
  %v2556 = vld [vmem:[%s5 + $0x24] sm:$0xf]
  %v2557 = vld [vmem:[%s5 + $0x28] sm:$0xf]
  %v2558 = vld [vmem:[%s5 + $0x2c] sm:$0xf]
  %v2559 = vld [vmem:[%s5 + $0x30] sm:$0xf]
  %v2560 = vld [vmem:[%s5 + $0x34] sm:$0xf]
  %v2561 = vld [vmem:[%s5 + $0x38] sm:$0xf]
  %v2562 = vld [vmem:[%s5 + $0x3c] sm:$0xf]
  %v2563 = vld [vmem:[%s5 + $0x40] sm:$0xf]
  %v2564 = vld [vmem:[%s5 + $0x44] sm:$0xf]
  %v2565 = vld [vmem:[%s5 + $0x48] sm:$0xf]
  %v2566 = vld [vmem:[%s5 + $0x4c] sm:$0xf]
  %v2567 = vld [vmem:[%s5 + $0x50] sm:$0xf]
  %v2568 = vld [vmem:[%s5 + $0x54] sm:$0xf]
  %v2569 = vld [vmem:[%s5 + $0x58] sm:$0xf]
  %v2570 = vld [vmem:[%s5 + $0x5c] sm:$0xf]
  %v2571 = vld [vmem:[%s5 + $0x60] sm:$0xf]
  %v2572 = vld [vmem:[%s5 + $0x64] sm:$0xf]
  %v2573 = vld [vmem:[%s5 + $0x68] sm:$0xf]
  %v2574 = vld [vmem:[%s5 + $0x6c] sm:$0xf]
  %v2575 = vld [vmem:[%s5 + $0x70] sm:$0xf]
  %v2576 = vld [vmem:[%s5 + $0x74] sm:$0xf]
  %v2577 = vld [vmem:[%s5 + $0x78] sm:$0xf]
  %v2578 = vld [vmem:[%s5 + $0x7c] sm:$0xf]
  %v2579 = vld [vmem:[%s5 + $0x80] sm:$0xf]
  %v2580 = vld [vmem:[%s5 + $0x84] sm:$0xf]
  %v2581 = vld [vmem:[%s5 + $0x88] sm:$0xf]
  %v2582 = vld [vmem:[%s5 + $0x8c] sm:$0xf]
  %v2583 = vld [vmem:[%s5 + $0x90] sm:$0xf]
  %v2584 = vld [vmem:[%s5 + $0x94] sm:$0xf]
  %v2585 = vld [vmem:[%s5 + $0x98] sm:$0xf]
  %v2586 = vld [vmem:[%s5 + $0x9c] sm:$0xf]
  %v2587 = vld [vmem:[%s5 + $0xa0] sm:$0xf]
  %v2588 = vld [vmem:[%s5 + $0xa4] sm:$0xf]
  %v2589 = vld [vmem:[%s5 + $0xa8] sm:$0xf]
  %v2590 = vld [vmem:[%s5 + $0xac] sm:$0xf]
  %v2591 = vld [vmem:[%s5 + $0xb0] sm:$0xf]
  %v2592 = vld [vmem:[%s5 + $0xb4] sm:$0xf]
  %v2593 = vld [vmem:[%s5 + $0xb8] sm:$0xf]
  %v2594 = vld [vmem:[%s5 + $0xbc] sm:$0xf]
  %v2595 = vld [vmem:[%s5 + $0xc0] sm:$0xf]
  %v2596 = vld [vmem:[%s5 + $0xc4] sm:$0xf]
  %v2597 = vld [vmem:[%s5 + $0xc8] sm:$0xf]
  %v2598 = vld [vmem:[%s5 + $0xcc] sm:$0xf]
  %v2599 = vld [vmem:[%s5 + $0xd0] sm:$0xf]
  %v2600 = vld [vmem:[%s5 + $0xd4] sm:$0xf]
  %v2601 = vld [vmem:[%s5 + $0xd8] sm:$0xf]
  %v2602 = vld [vmem:[%s5 + $0xdc] sm:$0xf]
  %v2603 = vld [vmem:[%s5 + $0xe0] sm:$0xf]
  %v2604 = vld [vmem:[%s5 + $0xe4] sm:$0xf]
  %v2605 = vld [vmem:[%s5 + $0xe8] sm:$0xf]
  %v2606 = vld [vmem:[%s5 + $0xec] sm:$0xf]
  %v2607 = vld [vmem:[%s5 + $0xf0] sm:$0xf]
  %v2608 = vld [vmem:[%s5 + $0xf4] sm:$0xf]
  %v2609 = vld [vmem:[%s5 + $0xf8] sm:$0xf]
  %v2610 = vld [vmem:[%s5 + $0xfc] sm:$0xf]
  %v2611 = vld [vmem:[%s6] sm:$0x1]
  %v2613 = vlaneseq
  %v2614 = vshrl.u32 %v2613, 7
  %v2615 = vsub.s32 0, %v2614
  %v2616 = vrot.slane %v2611, %v2615
  %v2682 = vunpack.c.l.b16 %v2547
  %v2683 = vunpack.c.l.b16 %v2548
  %v2684 = vunpack.c.l.b16 %v2549
  %v2685 = vunpack.c.l.b16 %v2550
  %v2686 = vunpack.c.l.b16 %v2551
  %v2687 = vunpack.c.l.b16 %v2552
  %v2688 = vunpack.c.l.b16 %v2553
  %v2689 = vunpack.c.l.b16 %v2554
  %v2690 = vunpack.c.l.b16 %v2555
  %v2691 = vunpack.c.l.b16 %v2556
  %v2692 = vunpack.c.l.b16 %v2557
  %v2693 = vunpack.c.l.b16 %v2558
  %v2694 = vunpack.c.l.b16 %v2559
  %v2695 = vunpack.c.l.b16 %v2560
  %v2696 = vunpack.c.l.b16 %v2561
  %v2697 = vunpack.c.l.b16 %v2562
  %v2698 = vunpack.c.l.b16 %v2563
  %v2699 = vunpack.c.l.b16 %v2564
  %v2700 = vunpack.c.l.b16 %v2565
  %v2701 = vunpack.c.l.b16 %v2566
  %v2702 = vunpack.c.l.b16 %v2567
  %v2703 = vunpack.c.l.b16 %v2568
  %v2704 = vunpack.c.l.b16 %v2569
  %v2705 = vunpack.c.l.b16 %v2570
  %v2706 = vunpack.c.l.b16 %v2571
  %v2707 = vunpack.c.l.b16 %v2572
  %v2708 = vunpack.c.l.b16 %v2573
  %v2709 = vunpack.c.l.b16 %v2574
  %v2710 = vunpack.c.l.b16 %v2575
  %v2711 = vunpack.c.l.b16 %v2576
  %v2712 = vunpack.c.l.b16 %v2577
  %v2713 = vunpack.c.l.b16 %v2578
  %v2714 = vunpack.c.l.b16 %v2579
  %v2715 = vunpack.c.l.b16 %v2580
  %v2716 = vunpack.c.l.b16 %v2581
  %v2717 = vunpack.c.l.b16 %v2582
  %v2718 = vunpack.c.l.b16 %v2583
  %v2719 = vunpack.c.l.b16 %v2584
  %v2720 = vunpack.c.l.b16 %v2585
  %v2721 = vunpack.c.l.b16 %v2586
  %v2722 = vunpack.c.l.b16 %v2587
  %v2723 = vunpack.c.l.b16 %v2588
  %v2724 = vunpack.c.l.b16 %v2589
  %v2725 = vunpack.c.l.b16 %v2590
  %v2726 = vunpack.c.l.b16 %v2591
  %v2727 = vunpack.c.l.b16 %v2592
  %v2728 = vunpack.c.l.b16 %v2593
  %v2729 = vunpack.c.l.b16 %v2594
  %v2730 = vunpack.c.l.b16 %v2595
  %v2731 = vunpack.c.l.b16 %v2596
  %v2732 = vunpack.c.l.b16 %v2597
  %v2733 = vunpack.c.l.b16 %v2598
  %v2734 = vunpack.c.l.b16 %v2599
  %v2735 = vunpack.c.l.b16 %v2600
  %v2736 = vunpack.c.l.b16 %v2601
  %v2737 = vunpack.c.l.b16 %v2602
  %v2738 = vunpack.c.l.b16 %v2603
  %v2739 = vunpack.c.l.b16 %v2604
  %v2740 = vunpack.c.l.b16 %v2605
  %v2741 = vunpack.c.l.b16 %v2606
  %v2742 = vunpack.c.l.b16 %v2607
  %v2743 = vunpack.c.l.b16 %v2608
  %v2744 = vunpack.c.l.b16 %v2609
  %v2745 = vunpack.c.l.b16 %v2610
  %v2746 = vpack.c.b16 %v2683, %v2682
  %v2747 = vpack.c.b16 %v2685, %v2684
  %v2748 = vpack.c.b16 %v2687, %v2686
  %v2749 = vpack.c.b16 %v2689, %v2688
  %v2750 = vpack.c.b16 %v2691, %v2690
  %v2751 = vpack.c.b16 %v2693, %v2692
  %v2752 = vpack.c.b16 %v2695, %v2694
  %v2753 = vpack.c.b16 %v2697, %v2696
  %v2754 = vpack.c.b16 %v2699, %v2698
  %v2755 = vpack.c.b16 %v2701, %v2700
  %v2756 = vpack.c.b16 %v2703, %v2702
  %v2757 = vpack.c.b16 %v2705, %v2704
  %v2758 = vpack.c.b16 %v2707, %v2706
  %v2759 = vpack.c.b16 %v2709, %v2708
  %v2760 = vpack.c.b16 %v2711, %v2710
  %v2761 = vpack.c.b16 %v2713, %v2712
  %v2762 = vpack.c.b16 %v2715, %v2714
  %v2763 = vpack.c.b16 %v2717, %v2716
  %v2764 = vpack.c.b16 %v2719, %v2718
  %v2765 = vpack.c.b16 %v2721, %v2720
  %v2766 = vpack.c.b16 %v2723, %v2722
  %v2767 = vpack.c.b16 %v2725, %v2724
  %v2768 = vpack.c.b16 %v2727, %v2726
  %v2769 = vpack.c.b16 %v2729, %v2728
  %v2770 = vpack.c.b16 %v2731, %v2730
  %v2771 = vpack.c.b16 %v2733, %v2732
  %v2772 = vpack.c.b16 %v2735, %v2734
  %v2773 = vpack.c.b16 %v2737, %v2736
  %v2774 = vpack.c.b16 %v2739, %v2738
  %v2775 = vpack.c.b16 %v2741, %v2740
  %v2776 = vpack.c.b16 %v2743, %v2742
  %v2777 = vpack.c.b16 %v2745, %v2744
  %2810 = vmatprep.subr.bf16.mxu0 0
  %2811 = vmatpush1.bf16.msra.mxu0 %v2753
  %2812 = vmatprep.subr.bf16.mxu0 0
  %2813 = vmatpush1.bf16.msra.mxu0 %v2752
  %2814 = vmatprep.subr.bf16.mxu0 0
  %2815 = vmatpush1.bf16.msra.mxu0 %v2751
  %2816 = vmatprep.subr.bf16.mxu0 0
  %2817 = vmatpush1.bf16.msra.mxu0 %v2750
  %2818 = vmatprep.subr.bf16.mxu0 0
  %2819 = vmatpush1.bf16.msra.mxu0 %v2749
  %2820 = vmatprep.subr.bf16.mxu0 0
  %2821 = vmatpush1.bf16.msra.mxu0 %v2748
  %2822 = vmatprep.subr.bf16.mxu0 0
  %2823 = vmatpush1.bf16.msra.mxu0 %v2747
  %2824 = vmatprep.subr.bf16.mxu0 0
  %2825 = vmatpush1.bf16.msra.mxu0 %v2746
  %2826 = vmatprep.subr.bf16.mxu0 0
  %2827 = vmatpush2.bf16.msra.mxu0 %v2761
  %2828 = vmatprep.subr.bf16.mxu0 0
  %2829 = vmatpush2.bf16.msra.mxu0 %v2760
  %2830 = vmatprep.subr.bf16.mxu0 0
  %2831 = vmatpush2.bf16.msra.mxu0 %v2759
  %2832 = vmatprep.subr.bf16.mxu0 0
  %2833 = vmatpush2.bf16.msra.mxu0 %v2758
  %2834 = vmatprep.subr.bf16.mxu0 0
  %2835 = vmatpush2.bf16.msra.mxu0 %v2757
  %2836 = vmatprep.subr.bf16.mxu0 0
  %2837 = vmatpush2.bf16.msra.mxu0 %v2756
  %2838 = vmatprep.subr.bf16.mxu0 0
  %2839 = vmatpush2.bf16.msra.mxu0 %v2755
  %2840 = vmatprep.subr.bf16.mxu0 0
  %2841 = vmatpush2.bf16.msra.mxu0 %v2754
  %2842 = vmatprep.mubr.bf16.mxu0 %v2544
  %2843 = vmatmul.mubr.bf16.gmra.mxu0 %v2543
  %v2844 = vpop.f32.mrf.mxu0
  %v2845 = vadd.f32 %v2616, %v2844
  %v2846 = vpop.f32.mrf.mxu0
  %v2847 = vpop.f32.mrf.mxu0
  %v2848 = vpop.f32.mrf.mxu0
  %2849 = vdwg.mxu0
  %2850 = vmatprep.subr.bf16.mxu0 0
  %2851 = vmatpush1.bf16.msra.mxu0 %v2769
  %2852 = vmatprep.subr.bf16.mxu0 0
  %2853 = vmatpush1.bf16.msra.mxu0 %v2768
  %2854 = vmatprep.subr.bf16.mxu0 0
  %2855 = vmatpush1.bf16.msra.mxu0 %v2767
  %2856 = vmatprep.subr.bf16.mxu0 0
  %2857 = vmatpush1.bf16.msra.mxu0 %v2766
  %2858 = vmatprep.subr.bf16.mxu0 0
  %2859 = vmatpush1.bf16.msra.mxu0 %v2765
  %2860 = vmatprep.subr.bf16.mxu0 0
  %2861 = vmatpush1.bf16.msra.mxu0 %v2764
  %2862 = vmatprep.subr.bf16.mxu0 0
  %2863 = vmatpush1.bf16.msra.mxu0 %v2763
  %2864 = vmatprep.subr.bf16.mxu0 0
  %2865 = vmatpush1.bf16.msra.mxu0 %v2762
  %2866 = vmatprep.subr.bf16.mxu0 0
  %2867 = vmatpush2.bf16.msra.mxu0 %v2777
  %2868 = vmatprep.subr.bf16.mxu0 0
  %2869 = vmatpush2.bf16.msra.mxu0 %v2776
  %2870 = vmatprep.subr.bf16.mxu0 0
  %2871 = vmatpush2.bf16.msra.mxu0 %v2775
  %2872 = vmatprep.subr.bf16.mxu0 0
  %2873 = vmatpush2.bf16.msra.mxu0 %v2774
  %2874 = vmatprep.subr.bf16.mxu0 0
  %2875 = vmatpush2.bf16.msra.mxu0 %v2773
  %2876 = vmatprep.subr.bf16.mxu0 0
  %2877 = vmatpush2.bf16.msra.mxu0 %v2772
  %2878 = vmatprep.subr.bf16.mxu0 0
  %2879 = vmatpush2.bf16.msra.mxu0 %v2771
  %2880 = vmatprep.subr.bf16.mxu0 0
  %2881 = vmatpush2.bf16.msra.mxu0 %v2770
  %2882 = vmatprep.mubr.bf16.mxu0 %v2546
  %2883 = vmatmul.mubr.bf16.gmra.mxu0 %v2545
  %v2884 = vpop.f32.mrf.mxu0
  %v2885 = vadd.f32 %v2845, %v2884
  %v2886 = vpop.f32.mrf.mxu0
  %v2887 = vpop.f32.mrf.mxu0
  %v2888 = vpop.f32.mrf.mxu0
  %2889 = vdwg.mxu0
  %v2890 = vtanh.pop %v2885
  %v2891 = vpack.c.bf16 %v2890, %v2890
  %v2892 = vld [vmem:[%s7] sm:$0xf]
  %v2893 = vld [vmem:[%s7 + $0x4] sm:$0xf]
  %v2894 = vld [vmem:[%s7 + $0x8] sm:$0xf]
  %v2895 = vld [vmem:[%s7 + $0xc] sm:$0xf]
  %v2896 = vld [vmem:[%s7 + $0x10] sm:$0xf]
  %v2897 = vld [vmem:[%s7 + $0x14] sm:$0xf]
  %v2898 = vld [vmem:[%s7 + $0x18] sm:$0xf]
  %v2899 = vld [vmem:[%s7 + $0x1c] sm:$0xf]
  %v2900 = vld [vmem:[%s7 + $0x20] sm:$0xf]
  %v2901 = vld [vmem:[%s7 + $0x24] sm:$0xf]
  %v2902 = vld [vmem:[%s7 + $0x28] sm:$0xf]
  %v2903 = vld [vmem:[%s7 + $0x2c] sm:$0xf]
  %v2904 = vld [vmem:[%s7 + $0x30] sm:$0xf]
  %v2905 = vld [vmem:[%s7 + $0x34] sm:$0xf]
  %v2906 = vld [vmem:[%s7 + $0x38] sm:$0xf]
  %v2907 = vld [vmem:[%s7 + $0x3c] sm:$0xf]
  %v2908 = vld [vmem:[%s8] sm:$0x1]
  %v2910 = vlaneseq
  %v2911 = vshrl.u32 %v2910, 7
  %v2912 = vsub.s32 0, %v2911
  %v2913 = vrot.slane %v2908, %v2912
  %v2931 = vunpack.c.l.b16 %v2892
  %v2932 = vunpack.c.l.b16 %v2893
  %v2933 = vunpack.c.l.b16 %v2894
  %v2934 = vunpack.c.l.b16 %v2895
  %v2935 = vunpack.c.l.b16 %v2896
  %v2936 = vunpack.c.l.b16 %v2897
  %v2937 = vunpack.c.l.b16 %v2898
  %v2938 = vunpack.c.l.b16 %v2899
  %v2939 = vunpack.c.l.b16 %v2900
  %v2940 = vunpack.c.l.b16 %v2901
  %v2941 = vunpack.c.l.b16 %v2902
  %v2942 = vunpack.c.l.b16 %v2903
  %v2943 = vunpack.c.l.b16 %v2904
  %v2944 = vunpack.c.l.b16 %v2905
  %v2945 = vunpack.c.l.b16 %v2906
  %v2946 = vunpack.c.l.b16 %v2907
  %v2947 = vpack.c.b16 %v2932, %v2931
  %v2948 = vpack.c.b16 %v2934, %v2933
  %v2949 = vpack.c.b16 %v2936, %v2935
  %v2950 = vpack.c.b16 %v2938, %v2937
  %v2951 = vpack.c.b16 %v2940, %v2939
  %v2952 = vpack.c.b16 %v2942, %v2941
  %v2953 = vpack.c.b16 %v2944, %v2943
  %v2954 = vpack.c.b16 %v2946, %v2945
  %2963 = vmatprep.subr.bf16.mxu0 0
  %2964 = vmatpush1.bf16.msra.mxu0 %v2954
  %2965 = vmatprep.subr.bf16.mxu0 0
  %2966 = vmatpush1.bf16.msra.mxu0 %v2953
  %2967 = vmatprep.subr.bf16.mxu0 0
  %2968 = vmatpush1.bf16.msra.mxu0 %v2952
  %2969 = vmatprep.subr.bf16.mxu0 0
  %2970 = vmatpush1.bf16.msra.mxu0 %v2951
  %2971 = vmatprep.subr.bf16.mxu0 0
  %2972 = vmatpush1.bf16.msra.mxu0 %v2950
  %2973 = vmatprep.subr.bf16.mxu0 0
  %2974 = vmatpush1.bf16.msra.mxu0 %v2949
  %2975 = vmatprep.subr.bf16.mxu0 0
  %2976 = vmatpush1.bf16.msra.mxu0 %v2948
  %2977 = vmatprep.subr.bf16.mxu0 0
  %2978 = vmatpush1.bf16.msra.mxu0 %v2947
  %2979 = vmatprep.subr.bf16.mxu0 0
  %2980 = vmatpush2.bf16.msra.mxu0 0
  %2981 = vmatprep.subr.bf16.mxu0 0
  %2982 = vmatpush2.bf16.msra.mxu0 0
  %2983 = vmatprep.subr.bf16.mxu0 0
  %2984 = vmatpush2.bf16.msra.mxu0 0
  %2985 = vmatprep.subr.bf16.mxu0 0
  %2986 = vmatpush2.bf16.msra.mxu0 0
  %2987 = vmatprep.subr.bf16.mxu0 0
  %2988 = vmatpush2.bf16.msra.mxu0 0
  %2989 = vmatprep.subr.bf16.mxu0 0
  %2990 = vmatpush2.bf16.msra.mxu0 0
  %2991 = vmatprep.subr.bf16.mxu0 0
  %2992 = vmatpush2.bf16.msra.mxu0 0
  %2993 = vmatprep.subr.bf16.mxu0 0
  %2994 = vmatpush2.bf16.msra.mxu0 0
  %2995 = vmatprep.mubr.bf16.mxu0 0
  %2996 = vmatmul.mubr.bf16.gmra.mxu0 %v2891
  %v2997 = vpop.f32.mrf.mxu0
  %v2998 = vadd.f32 %v2913, %v2997
  %v2999 = vpop.f32.mrf.mxu0
  %v3000 = vpop.f32.mrf.mxu0
  %v3001 = vpop.f32.mrf.mxu0
  %3002 = vdwg.mxu0
  %v3003 = vtanh.pop %v2998
  %v3004 = vld [vmem:[%s2] sm:$0x1]
  %v3005 = vld [vmem:[%s1] sm:$0xff]
  %v3006 = vlog2.pop %v3004
  %v3007 = vmul.f32 %v3006, 0.6931472
  %vm3008 = vcmask 8192
  %v3009 = vsel %vm3008, %v3007, 0.0
  %3010 = vadd.xlane.f32.xlu0 %v3009
  %v3011 = vpop.xlane.xlu0 %3010
  %v3012 = vsub.f32 %v3005, %v3003
  %v3013 = vmul.f32 %v3012, %v3012
  %v3015 = vlaneseq
  %v3016 = vshrl.u32 %v3015, 7
  %v3017 = vsub.s32 0, %v3016
  %v3018 = vrot.slane %v3004, %v3017
  %v3020 = vrcp.pop %v3018
  %v3021 = vmul.f32 %v3013, %v3020
  %vm3022 = vcmask 15360
  %v3023 = vsel %vm3022, %v3021, 0.0
  %3024 = vadd.xlane.f32.xlu0 %v3023
  %v3025 = vpop.xlane.xlu0 %3024
  %v3026 = vadd.f32 %v3025, 3.675754
  %v3027 = vlaneseq
  %v3028 = vshrl.u32 %v3027, 7
  %v3029 = vsub.s32 0, %v3028
  %v3030 = vrot.slane %v3011, %v3029
  %v3031 = vadd.f32 %v3026, %v3030
  %v3032 = vmul.f32 %v3031, -0.5
  %v3033 = vmul.f32 %v3011, 0.5
  %v3034 = vadd.f32 %v3033, 2.837877
  %v3035 = vlaneseq
  %v3036 = vand.u32 %v3035, 127
  %vm3037 = vcmp.lt.s32.totalorder %v3036, 2
  %vm3038 = vcmp.eq.s32.totalorder %v3036, 2
  %vm3039 = vcmp.eq.s32.totalorder %v3036, 3
  %vm3040 = vcmp.eq.s32.totalorder %v3036, 4
  %v3041 = vlaneseq
  %v3042 = vshrl.u32 %v3041, 7
  %v3043 = vsub.s32 0, %v3042
  %v3044 = vrot.slane %v3034, %v3043
  %v3045 = vsel %vm3040, %v3044, 0.0
  %v3046 = vsel %vm3039, %v3032, %v3045
  %v3047 = vsel %vm3038, %v2998, %v3046
  %v3048 = vsel %vm3037, %v3003, %v3047
  %3049 = vst [vmem:[%s9] sm:$0xff] %v3048
  // Predicated region
  $region38: #{evaluate.5} parent=0 // pred_check
    _
  $region39: #{evaluate.5} parent=0 // pred_check_branch
    %3051 = sbr.rel (0) target = $region41
  $region40: #{evaluate.5} parent=0 // pred_region
    _
  $region41: #{evaluate.5} parent=0 // pred_fallthru
    _
  // Predicated region
  $region42: #{evaluate.5} parent=0 // pred_check
    _
  $region43: #{evaluate.5} parent=0 // pred_check_branch
    %3053 = sbr.rel (0) target = $region45
  $region44: #{evaluate.5} parent=0 // pred_region
    _
  $region45: #{evaluate.5} parent=0 // pred_fallthru
    _

</llo_original>
